<compile_context>
chip_gen: v5e
topology: v5e:2x2
jax: 0.10.0
libtpu: 0.0.40
codegen_flags: <defaults>
</compile_context>

<pallas_src>
import functools

import numpy as np

import jax
import jax.numpy as jnp
from jax import lax
from jax.experimental import pallas as pl
from jax.experimental.pallas import tpu as pltpu

MATMUL_DTYPE = jnp.bfloat16          # bf16 MXU operands on all generations
LAYER_STRIDES = (1, 2, 1, 2, 1, 2, 1)


def _round_up(x, m):
    return (x + m - 1) // m * m


# ----------------------------------------------------------------------------
# Fully fused kernel: 7 convs + BN(folded) + LeakyReLU + avg-pool + 1x1 head
# ----------------------------------------------------------------------------
def _critic_fused_kernel(*refs, meta):
    # refs = (x_slab, w0, b0, s0, ..., w6, b6, s6, head_w, head_b, out)
    # meta[i] = (cin_pad, cout, lo_wide, tap_offsets)
    x_ref = refs[0]
    hw_ref, hb_ref, o_ref = refs[-3], refs[-2], refs[-1]
    nl = len(meta)

    # padded, spatially-flattened input slab for layer 0 (f32)
    x = x_ref[0]                                           # (Cin0_pad, Lp0)

    for i, (cinp, cout, lo, offsets) in enumerate(meta):
        w_ref, b_ref, s_ref = refs[1 + 3 * i], refs[2 + 3 * i], refs[3 + 3 * i]

        # 9 accumulated tap matmuls straight off lane-offset slices of the slab
        # (BN scale already folded into w; bf16 operands, f32 accumulation).
        acc = jnp.zeros((cout, lo), jnp.float32)
        for t, d in enumerate(offsets):
            xt = x[:, d:d + lo].astype(MATMUL_DTYPE)       # (Cinp, Lo_wide)
            wt = w_ref[:, t * cinp:(t + 1) * cinp]         # (Cout, Cinp)
            acc = acc + jnp.dot(wt, xt, preferred_element_type=jnp.float32)

        y = acc + b_ref[...]                               # bias-only epilogue
        y = jnp.where(y >= 0.0, y, 0.2 * y)                # LeakyReLU(0.2)

        if i == nl - 1:
            # fused classifier head: masked global average pool (junk "wide"
            # columns carry weight 0) -> (Cout, 1)
            x = jnp.sum(y * s_ref[...], axis=1, keepdims=True)
        else:
            # constant 0/1 selection matmul: drops the junk wide columns,
            # subsamples even positions for stride-2 layers, and writes the
            # result directly into the NEXT layer's zero-padded slab layout.
            x = jnp.dot(y, s_ref[...], preferred_element_type=jnp.float32)

    score = jnp.sum(x * hw_ref[...], axis=0, keepdims=True) + hb_ref[...]
    o_ref[0] = score                                       # (1, 1)


# ----------------------------------------------------------------------------
# Host-side constant builders (selection / pooling matrices, weight folding)
# ----------------------------------------------------------------------------
def _selection_matrix(H, W, stride):
    """Maps the wide (H, W+2) conv output to the next layer's padded slab."""
    wp_in = W + 2
    lo = H * wp_in
    ho, wo = (H, W) if stride == 1 else (H // 2, W // 2)
    wp_out = wo + 2
    lp_next = (ho + 3) * wp_out
    S = np.zeros((lo, lp_next), np.float32)
    for yo in range(ho):
        for xo in range(wo):
            src = (stride * yo) * wp_in + (stride * xo)
            dst = (yo + 1) * wp_out + (xo + 1)
            S[src, dst] = 1.0
    return S, ho, wo


def _pool_vector(H, W):
    """Masked global-average-pool over the wide (H, W+2) output, shape (1, Lo)."""
    wp = W + 2
    p = np.zeros((1, H * wp), np.float32)
    for y in range(H):
        for x in range(W):
            p[0, y * wp + x] = 1.0 / (H * W)
    return p


# ----------------------------------------------------------------------------
# Forward pass
# ----------------------------------------------------------------------------
def critic_forward(image_nchw, params, head_w, head_b):
    B, Cin, H, W = image_nchw.shape
    assert H % 8 == 0 and W % 8 == 0, "three stride-2 layers need H, W % 8 == 0"

    cin0_pad = _round_up(Cin, 8)
    lp0 = (H + 3) * (W + 2)
    # padded (top 1 / bottom 2 / left 1 / right 1), channel-padded, flattened slab
    xp = jnp.pad(image_nchw.astype(jnp.float32),
                 ((0, 0), (0, cin0_pad - Cin), (1, 2), (1, 1)))
    x_slab = xp.reshape(B, cin0_pad, lp0)

    meta, flat_args = [], []
    in_specs = [pl.BlockSpec((1, cin0_pad, lp0), lambda b: (b, 0, 0))]

    h, w = H, W
    cinp, cin_real = cin0_pad, Cin
    n_layers = len(params)
    for i, p in enumerate(params):
        stride = LAYER_STRIDES[i]
        cout = p["w"].shape[-1]
        wp = w + 2
        lo = h * wp
        offsets = tuple(ky * wp + kx for ky in range(3) for kx in range(3))

        # fold BN scale into the conv weights (bias-only epilogue in-kernel)
        wf = jnp.transpose(p["w"], (3, 0, 1, 2))                 # (Cout,3,3,Cin)
        wf = wf * p["scale"][:, None, None, None]
        wf = jnp.pad(wf, ((0, 0), (0, 0), (0, 0), (0, cinp - cin_real)))
        wf = wf.reshape(cout, 9 * cinp).astype(MATMUL_DTYPE)
        bias = p["bias"].reshape(cout, 1).astype(jnp.float32)

        if i == n_layers - 1:
            S = jnp.asarray(_pool_vector(h, w))                  # fused avg-pool
            h2, w2 = h, w
        else:
            S_np, h2, w2 = _selection_matrix(h, w, stride)
            S = jnp.asarray(S_np)

        flat_args += [wf, bias, S]
        in_specs += [pl.BlockSpec(wf.shape, lambda b: (0, 0)),
                     pl.BlockSpec(bias.shape, lambda b: (0, 0)),
                     pl.BlockSpec(S.shape, lambda b: (0, 0))]
        meta.append((cinp, cout, lo, offsets))

        cinp = cin_real = cout
        h, w = h2, w2

    hw = head_w.reshape(-1, 1).astype(jnp.float32)
    hb = head_b.reshape(1, 1).astype(jnp.float32)
    flat_args += [hw, hb]
    in_specs += [pl.BlockSpec(hw.shape, lambda b: (0, 0)),
                 pl.BlockSpec(hb.shape, lambda b: (0, 0))]

    kern = functools.partial(_critic_fused_kernel, meta=tuple(meta))
    out = pl.pallas_call(
        kern,
        out_shape=jax.ShapeDtypeStruct((B, 1, 1), jnp.float32),
        grid=(B,),
        in_specs=in_specs,
        out_specs=pl.BlockSpec((1, 1, 1), lambda b: (b, 0, 0)),
        compiler_params=pltpu.CompilerParams(
            dimension_semantics=("parallel",)),   # >=2 parallel steps for v7x
    )(x_slab, *flat_args)
    return out.reshape(B, 1)


# ----------------------------------------------------------------------------
# Parameters (BN folded to per-channel scale/bias) and pure-JAX reference
# ----------------------------------------------------------------------------
def _layer_defs(hidden):
    return [
        (3,          hidden,     False),  # ConvBlock(3, h, use_bn=False)
        (hidden,     2 * hidden, True),   # DownsampleBlock(h, 2h)
        (2 * hidden, 2 * hidden, True),   # ConvBlock(2h, 2h)
        (2 * hidden, 4 * hidden, True),   # DownsampleBlock(2h, 4h)
        (4 * hidden, 4 * hidden, True),   # ConvBlock(4h, 4h)
        (4 * hidden, 8 * hidden, True),   # DownsampleBlock(4h, 8h)
        (8 * hidden, 8 * hidden, True),   # ConvBlock(8h, 8h)
    ]


def init_params(key, hidden=8):
    eps = 1e-5
    params = []
    for i, (ci, co, use_bn) in enumerate(_layer_defs(hidden)):
        kw, kb, kg, kbe, km, kv = jax.random.split(jax.random.fold_in(key, i), 6)
        w = 0.1 * jax.random.normal(kw, (3, 3, ci, co), jnp.float32)   # HWIO
        conv_b = 0.05 * jax.random.normal(kb, (co,), jnp.float32)
        if use_bn:
            gamma = 1.0 + 0.1 * jax.random.normal(kg, (co,), jnp.float32)
            beta = 0.05 * jax.random.normal(kbe, (co,), jnp.float32)
            mean = 0.05 * jax.random.normal(km, (co,), jnp.float32)
            var = 1.0 + 0.1 * jnp.abs(jax.random.normal(kv, (co,), jnp.float32))
            scale = gamma / jnp.sqrt(var + eps)
            bias = (conv_b - mean) * scale + beta
        else:
            scale = jnp.ones((co,), jnp.float32)
            bias = conv_b
        params.append(dict(w=w, scale=scale, bias=bias))

    khw, khb = jax.random.split(jax.random.fold_in(key, 1000), 2)
    head_w = 0.1 * jax.random.normal(khw, (8 * hidden, 1), jnp.float32)
    head_b = 0.05 * jax.random.normal(khb, (1,), jnp.float32)
    return params, head_w, head_b


def critic_reference(image_nchw, params, head_w, head_b):
    """Pure-JAX f32 reference (lax conv) for numerical validation."""
    x = image_nchw
    for p, s in zip(params, LAYER_STRIDES):
        y = lax.conv_general_dilated(
            x, p["w"], window_strides=(s, s), padding=((1, 1), (1, 1)),
            dimension_numbers=("NCHW", "HWIO", "NCHW"))
        y = y * p["scale"][None, :, None, None] + p["bias"][None, :, None, None]
        x = jnp.where(y >= 0.0, y, 0.2 * y)
    pooled = jnp.mean(x, axis=(2, 3))
    return pooled @ head_w + head_b


if __name__ == "__main__":
    key = jax.random.PRNGKey(0)
    hidden = 8                                       # small hidden_channels for demo
    params, head_w, head_b = init_params(jax.random.fold_in(key, 1), hidden=hidden)
    # PyTorch input convention: [B, 3, H, W]
    image = jax.random.normal(jax.random.fold_in(key, 2), (2, 3, 16, 16), jnp.float32)

    fwd = jax.jit(critic_forward)
    score = jax.block_until_ready(fwd(image, params, head_w, head_b))

    ref = critic_reference(image, params, head_w, head_b)
    assert score.shape == (image.shape[0], 1), score.shape
    # tolerance accounts for bf16 conv-matmul operands (f32 accumulation / epilogue)
    assert jnp.allclose(score, ref, rtol=2e-2, atol=2e-2), (score, ref)
    print("KERNEL_OK")
</pallas_src>

<mosaic_0001>
module attributes {stable_mosaic.version = 11 : i64} {
  func.func @_critic_fused_kernel(%arg0: i32, %arg1: memref<1x8x342xf32, #tpu.memory_space<vmem>>, %arg2: memref<8x72xbf16, #tpu.memory_space<vmem>>, %arg3: memref<8x1xf32, #tpu.memory_space<vmem>>, %arg4: memref<288x342xf32, #tpu.memory_space<vmem>>, %arg5: memref<16x72xbf16, #tpu.memory_space<vmem>>, %arg6: memref<16x1xf32, #tpu.memory_space<vmem>>, %arg7: memref<288x110xf32, #tpu.memory_space<vmem>>, %arg8: memref<16x144xbf16, #tpu.memory_space<vmem>>, %arg9: memref<16x1xf32, #tpu.memory_space<vmem>>, %arg10: memref<80x110xf32, #tpu.memory_space<vmem>>, %arg11: memref<32x144xbf16, #tpu.memory_space<vmem>>, %arg12: memref<32x1xf32, #tpu.memory_space<vmem>>, %arg13: memref<80x42xf32, #tpu.memory_space<vmem>>, %arg14: memref<32x288xbf16, #tpu.memory_space<vmem>>, %arg15: memref<32x1xf32, #tpu.memory_space<vmem>>, %arg16: memref<24x42xf32, #tpu.memory_space<vmem>>, %arg17: memref<64x288xbf16, #tpu.memory_space<vmem>>, %arg18: memref<64x1xf32, #tpu.memory_space<vmem>>, %arg19: memref<24x20xf32, #tpu.memory_space<vmem>>, %arg20: memref<64x576xbf16, #tpu.memory_space<vmem>>, %arg21: memref<64x1xf32, #tpu.memory_space<vmem>>, %arg22: memref<1x8xf32, #tpu.memory_space<vmem>>, %arg23: memref<64x1xf32, #tpu.memory_space<vmem>>, %arg24: memref<1x1xf32, #tpu.memory_space<vmem>>, %arg25: memref<1x1x1xf32, #tpu.memory_space<vmem>>) attributes {dimension_semantics = [#tpu.dimension_semantics<parallel>], iteration_bounds = array<i64: 2>, scalar_prefetch = 0 : i64, scratch_operands = 0 : i64, tpu.core_type = #tpu.core_type<tc>, window_params = [{transform_indices = @transform_0, window_bounds = array<i64: 1, 8, 342>}, {pipeline_mode = #tpu.pipeline_mode<synchronous>, transform_indices = @transform_1, window_bounds = array<i64: 8, 72>}, {pipeline_mode = #tpu.pipeline_mode<synchronous>, transform_indices = @transform_2, window_bounds = array<i64: 8, 1>}, {pipeline_mode = #tpu.pipeline_mode<synchronous>, transform_indices = @transform_3, window_bounds = array<i64: 288, 342>}, {pipeline_mode = #tpu.pipeline_mode<synchronous>, transform_indices = @transform_4, window_bounds = array<i64: 16, 72>}, {pipeline_mode = #tpu.pipeline_mode<synchronous>, transform_indices = @transform_5, window_bounds = array<i64: 16, 1>}, {pipeline_mode = #tpu.pipeline_mode<synchronous>, transform_indices = @transform_6, window_bounds = array<i64: 288, 110>}, {pipeline_mode = #tpu.pipeline_mode<synchronous>, transform_indices = @transform_7, window_bounds = array<i64: 16, 144>}, {pipeline_mode = #tpu.pipeline_mode<synchronous>, transform_indices = @transform_8, window_bounds = array<i64: 16, 1>}, {pipeline_mode = #tpu.pipeline_mode<synchronous>, transform_indices = @transform_9, window_bounds = array<i64: 80, 110>}, {pipeline_mode = #tpu.pipeline_mode<synchronous>, transform_indices = @transform_10, window_bounds = array<i64: 32, 144>}, {pipeline_mode = #tpu.pipeline_mode<synchronous>, transform_indices = @transform_11, window_bounds = array<i64: 32, 1>}, {pipeline_mode = #tpu.pipeline_mode<synchronous>, transform_indices = @transform_12, window_bounds = array<i64: 80, 42>}, {pipeline_mode = #tpu.pipeline_mode<synchronous>, transform_indices = @transform_13, window_bounds = array<i64: 32, 288>}, {pipeline_mode = #tpu.pipeline_mode<synchronous>, transform_indices = @transform_14, window_bounds = array<i64: 32, 1>}, {pipeline_mode = #tpu.pipeline_mode<synchronous>, transform_indices = @transform_15, window_bounds = array<i64: 24, 42>}, {pipeline_mode = #tpu.pipeline_mode<synchronous>, transform_indices = @transform_16, window_bounds = array<i64: 64, 288>}, {pipeline_mode = #tpu.pipeline_mode<synchronous>, transform_indices = @transform_17, window_bounds = array<i64: 64, 1>}, {pipeline_mode = #tpu.pipeline_mode<synchronous>, transform_indices = @transform_18, window_bounds = array<i64: 24, 20>}, {pipeline_mode = #tpu.pipeline_mode<synchronous>, transform_indices = @transform_19, window_bounds = array<i64: 64, 576>}, {pipeline_mode = #tpu.pipeline_mode<synchronous>, transform_indices = @transform_20, window_bounds = array<i64: 64, 1>}, {pipeline_mode = #tpu.pipeline_mode<synchronous>, transform_indices = @transform_21, window_bounds = array<i64: 1, 8>}, {pipeline_mode = #tpu.pipeline_mode<synchronous>, transform_indices = @transform_22, window_bounds = array<i64: 64, 1>}, {pipeline_mode = #tpu.pipeline_mode<synchronous>, transform_indices = @transform_23, window_bounds = array<i64: 1, 1>}, {transform_indices = @transform_24, window_bounds = array<i64: 1, 1, 1>}]} {
    %c0 = arith.constant 0 : index
    %c0_0 = arith.constant 0 : index
    %c0_1 = arith.constant 0 : index
    %0 = vector.load %arg1[%c0, %c0_0, %c0_1] : memref<1x8x342xf32, #tpu.memory_space<vmem>>, vector<1x8x342xf32>
    %1 = vector.shape_cast %0 : vector<1x8x342xf32> to vector<8x342xf32>
    %cst = arith.constant 0.000000e+00 : f32
    %2 = vector.broadcast %cst : f32 to vector<8x288xf32>
    %3 = vector.extract_strided_slice %1 {offsets = [0, 0], sizes = [8, 288], strides = [1, 1]} : vector<8x342xf32> to vector<8x288xf32>
    %4 = arith.truncf %3 : vector<8x288xf32> to vector<8x288xbf16>
    %c0_2 = arith.constant 0 : index
    %c0_3 = arith.constant 0 : index
    %5 = vector.load %arg2[%c0_2, %c0_3] : memref<8x72xbf16, #tpu.memory_space<vmem>>, vector<8x8xbf16>
    %cst_4 = arith.constant dense<0.000000e+00> : vector<8x288xf32>
    %6 = tpu.matmul %5, %4, %cst_4 {dimension_numbers = #tpu.dot_dimension_numbers<[1], [0], [0], [1], [0, 0, 1, 1], [], []>} : vector<8x8xbf16>, vector<8x288xbf16>, vector<8x288xf32> -> vector<8x288xf32>
    %7 = arith.addf %2, %6 : vector<8x288xf32>
    %8 = vector.extract_strided_slice %1 {offsets = [0, 1], sizes = [8, 288], strides = [1, 1]} : vector<8x342xf32> to vector<8x288xf32>
    %9 = arith.truncf %8 : vector<8x288xf32> to vector<8x288xbf16>
    %c0_5 = arith.constant 0 : index
    %c8 = arith.constant 8 : index
    %10 = vector.load %arg2[%c0_5, %c8] : memref<8x72xbf16, #tpu.memory_space<vmem>>, vector<8x8xbf16>
    %cst_6 = arith.constant dense<0.000000e+00> : vector<8x288xf32>
    %11 = tpu.matmul %10, %9, %cst_6 {dimension_numbers = #tpu.dot_dimension_numbers<[1], [0], [0], [1], [0, 0, 1, 1], [], []>} : vector<8x8xbf16>, vector<8x288xbf16>, vector<8x288xf32> -> vector<8x288xf32>
    %12 = arith.addf %7, %11 : vector<8x288xf32>
    %13 = vector.extract_strided_slice %1 {offsets = [0, 2], sizes = [8, 288], strides = [1, 1]} : vector<8x342xf32> to vector<8x288xf32>
    %14 = arith.truncf %13 : vector<8x288xf32> to vector<8x288xbf16>
    %c0_7 = arith.constant 0 : index
    %c16 = arith.constant 16 : index
    %15 = vector.load %arg2[%c0_7, %c16] : memref<8x72xbf16, #tpu.memory_space<vmem>>, vector<8x8xbf16>
    %cst_8 = arith.constant dense<0.000000e+00> : vector<8x288xf32>
    %16 = tpu.matmul %15, %14, %cst_8 {dimension_numbers = #tpu.dot_dimension_numbers<[1], [0], [0], [1], [0, 0, 1, 1], [], []>} : vector<8x8xbf16>, vector<8x288xbf16>, vector<8x288xf32> -> vector<8x288xf32>
    %17 = arith.addf %12, %16 : vector<8x288xf32>
    %18 = vector.extract_strided_slice %1 {offsets = [0, 18], sizes = [8, 288], strides = [1, 1]} : vector<8x342xf32> to vector<8x288xf32>
    %19 = arith.truncf %18 : vector<8x288xf32> to vector<8x288xbf16>
    %c0_9 = arith.constant 0 : index
    %c24 = arith.constant 24 : index
    %20 = vector.load %arg2[%c0_9, %c24] : memref<8x72xbf16, #tpu.memory_space<vmem>>, vector<8x8xbf16>
    %cst_10 = arith.constant dense<0.000000e+00> : vector<8x288xf32>
    %21 = tpu.matmul %20, %19, %cst_10 {dimension_numbers = #tpu.dot_dimension_numbers<[1], [0], [0], [1], [0, 0, 1, 1], [], []>} : vector<8x8xbf16>, vector<8x288xbf16>, vector<8x288xf32> -> vector<8x288xf32>
    %22 = arith.addf %17, %21 : vector<8x288xf32>
    %23 = vector.extract_strided_slice %1 {offsets = [0, 19], sizes = [8, 288], strides = [1, 1]} : vector<8x342xf32> to vector<8x288xf32>
    %24 = arith.truncf %23 : vector<8x288xf32> to vector<8x288xbf16>
    %c0_11 = arith.constant 0 : index
    %c32 = arith.constant 32 : index
    %25 = vector.load %arg2[%c0_11, %c32] : memref<8x72xbf16, #tpu.memory_space<vmem>>, vector<8x8xbf16>
    %cst_12 = arith.constant dense<0.000000e+00> : vector<8x288xf32>
    %26 = tpu.matmul %25, %24, %cst_12 {dimension_numbers = #tpu.dot_dimension_numbers<[1], [0], [0], [1], [0, 0, 1, 1], [], []>} : vector<8x8xbf16>, vector<8x288xbf16>, vector<8x288xf32> -> vector<8x288xf32>
    %27 = arith.addf %22, %26 : vector<8x288xf32>
    %28 = vector.extract_strided_slice %1 {offsets = [0, 20], sizes = [8, 288], strides = [1, 1]} : vector<8x342xf32> to vector<8x288xf32>
    %29 = arith.truncf %28 : vector<8x288xf32> to vector<8x288xbf16>
    %c0_13 = arith.constant 0 : index
    %c40 = arith.constant 40 : index
    %30 = vector.load %arg2[%c0_13, %c40] : memref<8x72xbf16, #tpu.memory_space<vmem>>, vector<8x8xbf16>
    %cst_14 = arith.constant dense<0.000000e+00> : vector<8x288xf32>
    %31 = tpu.matmul %30, %29, %cst_14 {dimension_numbers = #tpu.dot_dimension_numbers<[1], [0], [0], [1], [0, 0, 1, 1], [], []>} : vector<8x8xbf16>, vector<8x288xbf16>, vector<8x288xf32> -> vector<8x288xf32>
    %32 = arith.addf %27, %31 : vector<8x288xf32>
    %33 = vector.extract_strided_slice %1 {offsets = [0, 36], sizes = [8, 288], strides = [1, 1]} : vector<8x342xf32> to vector<8x288xf32>
    %34 = arith.truncf %33 : vector<8x288xf32> to vector<8x288xbf16>
    %c0_15 = arith.constant 0 : index
    %c48 = arith.constant 48 : index
    %35 = vector.load %arg2[%c0_15, %c48] : memref<8x72xbf16, #tpu.memory_space<vmem>>, vector<8x8xbf16>
    %cst_16 = arith.constant dense<0.000000e+00> : vector<8x288xf32>
    %36 = tpu.matmul %35, %34, %cst_16 {dimension_numbers = #tpu.dot_dimension_numbers<[1], [0], [0], [1], [0, 0, 1, 1], [], []>} : vector<8x8xbf16>, vector<8x288xbf16>, vector<8x288xf32> -> vector<8x288xf32>
    %37 = arith.addf %32, %36 : vector<8x288xf32>
    %38 = vector.extract_strided_slice %1 {offsets = [0, 37], sizes = [8, 288], strides = [1, 1]} : vector<8x342xf32> to vector<8x288xf32>
    %39 = arith.truncf %38 : vector<8x288xf32> to vector<8x288xbf16>
    %c0_17 = arith.constant 0 : index
    %c56 = arith.constant 56 : index
    %40 = vector.load %arg2[%c0_17, %c56] : memref<8x72xbf16, #tpu.memory_space<vmem>>, vector<8x8xbf16>
    %cst_18 = arith.constant dense<0.000000e+00> : vector<8x288xf32>
    %41 = tpu.matmul %40, %39, %cst_18 {dimension_numbers = #tpu.dot_dimension_numbers<[1], [0], [0], [1], [0, 0, 1, 1], [], []>} : vector<8x8xbf16>, vector<8x288xbf16>, vector<8x288xf32> -> vector<8x288xf32>
    %42 = arith.addf %37, %41 : vector<8x288xf32>
    %43 = vector.extract_strided_slice %1 {offsets = [0, 38], sizes = [8, 288], strides = [1, 1]} : vector<8x342xf32> to vector<8x288xf32>
    %44 = arith.truncf %43 : vector<8x288xf32> to vector<8x288xbf16>
    %c0_19 = arith.constant 0 : index
    %c64 = arith.constant 64 : index
    %45 = vector.load %arg2[%c0_19, %c64] : memref<8x72xbf16, #tpu.memory_space<vmem>>, vector<8x8xbf16>
    %cst_20 = arith.constant dense<0.000000e+00> : vector<8x288xf32>
    %46 = tpu.matmul %45, %44, %cst_20 {dimension_numbers = #tpu.dot_dimension_numbers<[1], [0], [0], [1], [0, 0, 1, 1], [], []>} : vector<8x8xbf16>, vector<8x288xbf16>, vector<8x288xf32> -> vector<8x288xf32>
    %47 = arith.addf %42, %46 : vector<8x288xf32>
    %c0_21 = arith.constant 0 : index
    %c0_22 = arith.constant 0 : index
    %48 = vector.load %arg3[%c0_21, %c0_22] : memref<8x1xf32, #tpu.memory_space<vmem>>, vector<8x1xf32>
    %49 = vector.broadcast %48 : vector<8x1xf32> to vector<8x288xf32>
    %50 = arith.addf %47, %49 : vector<8x288xf32>
    %cst_23 = arith.constant 0.000000e+00 : f32
    %51 = vector.broadcast %cst_23 : f32 to vector<8x288xf32>
    %52 = arith.cmpf oge, %50, %51 : vector<8x288xf32>
    %cst_24 = arith.constant 2.000000e-01 : f32
    %53 = vector.broadcast %cst_24 : f32 to vector<8x288xf32>
    %54 = arith.mulf %53, %50 : vector<8x288xf32>
    %55 = arith.select %52, %50, %54 : vector<8x288xi1>, vector<8x288xf32>
    %c0_25 = arith.constant 0 : index
    %c0_26 = arith.constant 0 : index
    %56 = vector.load %arg4[%c0_25, %c0_26] : memref<288x342xf32, #tpu.memory_space<vmem>>, vector<288x342xf32>
    %cst_27 = arith.constant dense<0.000000e+00> : vector<8x342xf32>
    %57 = tpu.matmul %55, %56, %cst_27 {dimension_numbers = #tpu.dot_dimension_numbers<[1], [0], [0], [1], [0, 0, 1, 1], [], []>} : vector<8x288xf32>, vector<288x342xf32>, vector<8x342xf32> -> vector<8x342xf32>
    %cst_28 = arith.constant 0.000000e+00 : f32
    %58 = vector.broadcast %cst_28 : f32 to vector<16x288xf32>
    %59 = vector.extract_strided_slice %57 {offsets = [0, 0], sizes = [8, 288], strides = [1, 1]} : vector<8x342xf32> to vector<8x288xf32>
    %60 = arith.truncf %59 : vector<8x288xf32> to vector<8x288xbf16>
    %c0_29 = arith.constant 0 : index
    %c0_30 = arith.constant 0 : index
    %61 = vector.load %arg5[%c0_29, %c0_30] : memref<16x72xbf16, #tpu.memory_space<vmem>>, vector<16x8xbf16>
    %cst_31 = arith.constant dense<0.000000e+00> : vector<16x288xf32>
    %62 = tpu.matmul %61, %60, %cst_31 {dimension_numbers = #tpu.dot_dimension_numbers<[1], [0], [0], [1], [0, 0, 1, 1], [], []>} : vector<16x8xbf16>, vector<8x288xbf16>, vector<16x288xf32> -> vector<16x288xf32>
    %63 = arith.addf %58, %62 : vector<16x288xf32>
    %64 = vector.extract_strided_slice %57 {offsets = [0, 1], sizes = [8, 288], strides = [1, 1]} : vector<8x342xf32> to vector<8x288xf32>
    %65 = arith.truncf %64 : vector<8x288xf32> to vector<8x288xbf16>
    %c0_32 = arith.constant 0 : index
    %c8_33 = arith.constant 8 : index
    %66 = vector.load %arg5[%c0_32, %c8_33] : memref<16x72xbf16, #tpu.memory_space<vmem>>, vector<16x8xbf16>
    %cst_34 = arith.constant dense<0.000000e+00> : vector<16x288xf32>
    %67 = tpu.matmul %66, %65, %cst_34 {dimension_numbers = #tpu.dot_dimension_numbers<[1], [0], [0], [1], [0, 0, 1, 1], [], []>} : vector<16x8xbf16>, vector<8x288xbf16>, vector<16x288xf32> -> vector<16x288xf32>
    %68 = arith.addf %63, %67 : vector<16x288xf32>
    %69 = vector.extract_strided_slice %57 {offsets = [0, 2], sizes = [8, 288], strides = [1, 1]} : vector<8x342xf32> to vector<8x288xf32>
    %70 = arith.truncf %69 : vector<8x288xf32> to vector<8x288xbf16>
    %c0_35 = arith.constant 0 : index
    %c16_36 = arith.constant 16 : index
    %71 = vector.load %arg5[%c0_35, %c16_36] : memref<16x72xbf16, #tpu.memory_space<vmem>>, vector<16x8xbf16>
    %cst_37 = arith.constant dense<0.000000e+00> : vector<16x288xf32>
    %72 = tpu.matmul %71, %70, %cst_37 {dimension_numbers = #tpu.dot_dimension_numbers<[1], [0], [0], [1], [0, 0, 1, 1], [], []>} : vector<16x8xbf16>, vector<8x288xbf16>, vector<16x288xf32> -> vector<16x288xf32>
    %73 = arith.addf %68, %72 : vector<16x288xf32>
    %74 = vector.extract_strided_slice %57 {offsets = [0, 18], sizes = [8, 288], strides = [1, 1]} : vector<8x342xf32> to vector<8x288xf32>
    %75 = arith.truncf %74 : vector<8x288xf32> to vector<8x288xbf16>
    %c0_38 = arith.constant 0 : index
    %c24_39 = arith.constant 24 : index
    %76 = vector.load %arg5[%c0_38, %c24_39] : memref<16x72xbf16, #tpu.memory_space<vmem>>, vector<16x8xbf16>
    %cst_40 = arith.constant dense<0.000000e+00> : vector<16x288xf32>
    %77 = tpu.matmul %76, %75, %cst_40 {dimension_numbers = #tpu.dot_dimension_numbers<[1], [0], [0], [1], [0, 0, 1, 1], [], []>} : vector<16x8xbf16>, vector<8x288xbf16>, vector<16x288xf32> -> vector<16x288xf32>
    %78 = arith.addf %73, %77 : vector<16x288xf32>
    %79 = vector.extract_strided_slice %57 {offsets = [0, 19], sizes = [8, 288], strides = [1, 1]} : vector<8x342xf32> to vector<8x288xf32>
    %80 = arith.truncf %79 : vector<8x288xf32> to vector<8x288xbf16>
    %c0_41 = arith.constant 0 : index
    %c32_42 = arith.constant 32 : index
    %81 = vector.load %arg5[%c0_41, %c32_42] : memref<16x72xbf16, #tpu.memory_space<vmem>>, vector<16x8xbf16>
    %cst_43 = arith.constant dense<0.000000e+00> : vector<16x288xf32>
    %82 = tpu.matmul %81, %80, %cst_43 {dimension_numbers = #tpu.dot_dimension_numbers<[1], [0], [0], [1], [0, 0, 1, 1], [], []>} : vector<16x8xbf16>, vector<8x288xbf16>, vector<16x288xf32> -> vector<16x288xf32>
    %83 = arith.addf %78, %82 : vector<16x288xf32>
    %84 = vector.extract_strided_slice %57 {offsets = [0, 20], sizes = [8, 288], strides = [1, 1]} : vector<8x342xf32> to vector<8x288xf32>
    %85 = arith.truncf %84 : vector<8x288xf32> to vector<8x288xbf16>
    %c0_44 = arith.constant 0 : index
    %c40_45 = arith.constant 40 : index
    %86 = vector.load %arg5[%c0_44, %c40_45] : memref<16x72xbf16, #tpu.memory_space<vmem>>, vector<16x8xbf16>
    %cst_46 = arith.constant dense<0.000000e+00> : vector<16x288xf32>
    %87 = tpu.matmul %86, %85, %cst_46 {dimension_numbers = #tpu.dot_dimension_numbers<[1], [0], [0], [1], [0, 0, 1, 1], [], []>} : vector<16x8xbf16>, vector<8x288xbf16>, vector<16x288xf32> -> vector<16x288xf32>
    %88 = arith.addf %83, %87 : vector<16x288xf32>
    %89 = vector.extract_strided_slice %57 {offsets = [0, 36], sizes = [8, 288], strides = [1, 1]} : vector<8x342xf32> to vector<8x288xf32>
    %90 = arith.truncf %89 : vector<8x288xf32> to vector<8x288xbf16>
    %c0_47 = arith.constant 0 : index
    %c48_48 = arith.constant 48 : index
    %91 = vector.load %arg5[%c0_47, %c48_48] : memref<16x72xbf16, #tpu.memory_space<vmem>>, vector<16x8xbf16>
    %cst_49 = arith.constant dense<0.000000e+00> : vector<16x288xf32>
    %92 = tpu.matmul %91, %90, %cst_49 {dimension_numbers = #tpu.dot_dimension_numbers<[1], [0], [0], [1], [0, 0, 1, 1], [], []>} : vector<16x8xbf16>, vector<8x288xbf16>, vector<16x288xf32> -> vector<16x288xf32>
    %93 = arith.addf %88, %92 : vector<16x288xf32>
    %94 = vector.extract_strided_slice %57 {offsets = [0, 37], sizes = [8, 288], strides = [1, 1]} : vector<8x342xf32> to vector<8x288xf32>
    %95 = arith.truncf %94 : vector<8x288xf32> to vector<8x288xbf16>
    %c0_50 = arith.constant 0 : index
    %c56_51 = arith.constant 56 : index
    %96 = vector.load %arg5[%c0_50, %c56_51] : memref<16x72xbf16, #tpu.memory_space<vmem>>, vector<16x8xbf16>
    %cst_52 = arith.constant dense<0.000000e+00> : vector<16x288xf32>
    %97 = tpu.matmul %96, %95, %cst_52 {dimension_numbers = #tpu.dot_dimension_numbers<[1], [0], [0], [1], [0, 0, 1, 1], [], []>} : vector<16x8xbf16>, vector<8x288xbf16>, vector<16x288xf32> -> vector<16x288xf32>
    %98 = arith.addf %93, %97 : vector<16x288xf32>
    %99 = vector.extract_strided_slice %57 {offsets = [0, 38], sizes = [8, 288], strides = [1, 1]} : vector<8x342xf32> to vector<8x288xf32>
    %100 = arith.truncf %99 : vector<8x288xf32> to vector<8x288xbf16>
    %c0_53 = arith.constant 0 : index
    %c64_54 = arith.constant 64 : index
    %101 = vector.load %arg5[%c0_53, %c64_54] : memref<16x72xbf16, #tpu.memory_space<vmem>>, vector<16x8xbf16>
    %cst_55 = arith.constant dense<0.000000e+00> : vector<16x288xf32>
    %102 = tpu.matmul %101, %100, %cst_55 {dimension_numbers = #tpu.dot_dimension_numbers<[1], [0], [0], [1], [0, 0, 1, 1], [], []>} : vector<16x8xbf16>, vector<8x288xbf16>, vector<16x288xf32> -> vector<16x288xf32>
    %103 = arith.addf %98, %102 : vector<16x288xf32>
    %c0_56 = arith.constant 0 : index
    %c0_57 = arith.constant 0 : index
    %104 = vector.load %arg6[%c0_56, %c0_57] : memref<16x1xf32, #tpu.memory_space<vmem>>, vector<16x1xf32>
    %105 = vector.broadcast %104 : vector<16x1xf32> to vector<16x288xf32>
    %106 = arith.addf %103, %105 : vector<16x288xf32>
    %cst_58 = arith.constant 0.000000e+00 : f32
    %107 = vector.broadcast %cst_58 : f32 to vector<16x288xf32>
    %108 = arith.cmpf oge, %106, %107 : vector<16x288xf32>
    %cst_59 = arith.constant 2.000000e-01 : f32
    %109 = vector.broadcast %cst_59 : f32 to vector<16x288xf32>
    %110 = arith.mulf %109, %106 : vector<16x288xf32>
    %111 = arith.select %108, %106, %110 : vector<16x288xi1>, vector<16x288xf32>
    %c0_60 = arith.constant 0 : index
    %c0_61 = arith.constant 0 : index
    %112 = vector.load %arg7[%c0_60, %c0_61] : memref<288x110xf32, #tpu.memory_space<vmem>>, vector<288x110xf32>
    %cst_62 = arith.constant dense<0.000000e+00> : vector<16x110xf32>
    %113 = tpu.matmul %111, %112, %cst_62 {dimension_numbers = #tpu.dot_dimension_numbers<[1], [0], [0], [1], [0, 0, 1, 1], [], []>} : vector<16x288xf32>, vector<288x110xf32>, vector<16x110xf32> -> vector<16x110xf32>
    %cst_63 = arith.constant 0.000000e+00 : f32
    %114 = vector.broadcast %cst_63 : f32 to vector<16x80xf32>
    %115 = vector.extract_strided_slice %113 {offsets = [0, 0], sizes = [16, 80], strides = [1, 1]} : vector<16x110xf32> to vector<16x80xf32>
    %116 = arith.truncf %115 : vector<16x80xf32> to vector<16x80xbf16>
    %c0_64 = arith.constant 0 : index
    %c0_65 = arith.constant 0 : index
    %117 = vector.load %arg8[%c0_64, %c0_65] : memref<16x144xbf16, #tpu.memory_space<vmem>>, vector<16x16xbf16>
    %cst_66 = arith.constant dense<0.000000e+00> : vector<16x80xf32>
    %118 = tpu.matmul %117, %116, %cst_66 {dimension_numbers = #tpu.dot_dimension_numbers<[1], [0], [0], [1], [0, 0, 1, 1], [], []>} : vector<16x16xbf16>, vector<16x80xbf16>, vector<16x80xf32> -> vector<16x80xf32>
    %119 = arith.addf %114, %118 : vector<16x80xf32>
    %120 = vector.extract_strided_slice %113 {offsets = [0, 1], sizes = [16, 80], strides = [1, 1]} : vector<16x110xf32> to vector<16x80xf32>
    %121 = arith.truncf %120 : vector<16x80xf32> to vector<16x80xbf16>
    %c0_67 = arith.constant 0 : index
    %c16_68 = arith.constant 16 : index
    %122 = vector.load %arg8[%c0_67, %c16_68] : memref<16x144xbf16, #tpu.memory_space<vmem>>, vector<16x16xbf16>
    %cst_69 = arith.constant dense<0.000000e+00> : vector<16x80xf32>
    %123 = tpu.matmul %122, %121, %cst_69 {dimension_numbers = #tpu.dot_dimension_numbers<[1], [0], [0], [1], [0, 0, 1, 1], [], []>} : vector<16x16xbf16>, vector<16x80xbf16>, vector<16x80xf32> -> vector<16x80xf32>
    %124 = arith.addf %119, %123 : vector<16x80xf32>
    %125 = vector.extract_strided_slice %113 {offsets = [0, 2], sizes = [16, 80], strides = [1, 1]} : vector<16x110xf32> to vector<16x80xf32>
    %126 = arith.truncf %125 : vector<16x80xf32> to vector<16x80xbf16>
    %c0_70 = arith.constant 0 : index
    %c32_71 = arith.constant 32 : index
    %127 = vector.load %arg8[%c0_70, %c32_71] : memref<16x144xbf16, #tpu.memory_space<vmem>>, vector<16x16xbf16>
    %cst_72 = arith.constant dense<0.000000e+00> : vector<16x80xf32>
    %128 = tpu.matmul %127, %126, %cst_72 {dimension_numbers = #tpu.dot_dimension_numbers<[1], [0], [0], [1], [0, 0, 1, 1], [], []>} : vector<16x16xbf16>, vector<16x80xbf16>, vector<16x80xf32> -> vector<16x80xf32>
    %129 = arith.addf %124, %128 : vector<16x80xf32>
    %130 = vector.extract_strided_slice %113 {offsets = [0, 10], sizes = [16, 80], strides = [1, 1]} : vector<16x110xf32> to vector<16x80xf32>
    %131 = arith.truncf %130 : vector<16x80xf32> to vector<16x80xbf16>
    %c0_73 = arith.constant 0 : index
    %c48_74 = arith.constant 48 : index
    %132 = vector.load %arg8[%c0_73, %c48_74] : memref<16x144xbf16, #tpu.memory_space<vmem>>, vector<16x16xbf16>
    %cst_75 = arith.constant dense<0.000000e+00> : vector<16x80xf32>
    %133 = tpu.matmul %132, %131, %cst_75 {dimension_numbers = #tpu.dot_dimension_numbers<[1], [0], [0], [1], [0, 0, 1, 1], [], []>} : vector<16x16xbf16>, vector<16x80xbf16>, vector<16x80xf32> -> vector<16x80xf32>
    %134 = arith.addf %129, %133 : vector<16x80xf32>
    %135 = vector.extract_strided_slice %113 {offsets = [0, 11], sizes = [16, 80], strides = [1, 1]} : vector<16x110xf32> to vector<16x80xf32>
    %136 = arith.truncf %135 : vector<16x80xf32> to vector<16x80xbf16>
    %c0_76 = arith.constant 0 : index
    %c64_77 = arith.constant 64 : index
    %137 = vector.load %arg8[%c0_76, %c64_77] : memref<16x144xbf16, #tpu.memory_space<vmem>>, vector<16x16xbf16>
    %cst_78 = arith.constant dense<0.000000e+00> : vector<16x80xf32>
    %138 = tpu.matmul %137, %136, %cst_78 {dimension_numbers = #tpu.dot_dimension_numbers<[1], [0], [0], [1], [0, 0, 1, 1], [], []>} : vector<16x16xbf16>, vector<16x80xbf16>, vector<16x80xf32> -> vector<16x80xf32>
    %139 = arith.addf %134, %138 : vector<16x80xf32>
    %140 = vector.extract_strided_slice %113 {offsets = [0, 12], sizes = [16, 80], strides = [1, 1]} : vector<16x110xf32> to vector<16x80xf32>
    %141 = arith.truncf %140 : vector<16x80xf32> to vector<16x80xbf16>
    %c0_79 = arith.constant 0 : index
    %c80 = arith.constant 80 : index
    %142 = vector.load %arg8[%c0_79, %c80] : memref<16x144xbf16, #tpu.memory_space<vmem>>, vector<16x16xbf16>
    %cst_80 = arith.constant dense<0.000000e+00> : vector<16x80xf32>
    %143 = tpu.matmul %142, %141, %cst_80 {dimension_numbers = #tpu.dot_dimension_numbers<[1], [0], [0], [1], [0, 0, 1, 1], [], []>} : vector<16x16xbf16>, vector<16x80xbf16>, vector<16x80xf32> -> vector<16x80xf32>
    %144 = arith.addf %139, %143 : vector<16x80xf32>
    %145 = vector.extract_strided_slice %113 {offsets = [0, 20], sizes = [16, 80], strides = [1, 1]} : vector<16x110xf32> to vector<16x80xf32>
    %146 = arith.truncf %145 : vector<16x80xf32> to vector<16x80xbf16>
    %c0_81 = arith.constant 0 : index
    %c96 = arith.constant 96 : index
    %147 = vector.load %arg8[%c0_81, %c96] : memref<16x144xbf16, #tpu.memory_space<vmem>>, vector<16x16xbf16>
    %cst_82 = arith.constant dense<0.000000e+00> : vector<16x80xf32>
    %148 = tpu.matmul %147, %146, %cst_82 {dimension_numbers = #tpu.dot_dimension_numbers<[1], [0], [0], [1], [0, 0, 1, 1], [], []>} : vector<16x16xbf16>, vector<16x80xbf16>, vector<16x80xf32> -> vector<16x80xf32>
    %149 = arith.addf %144, %148 : vector<16x80xf32>
    %150 = vector.extract_strided_slice %113 {offsets = [0, 21], sizes = [16, 80], strides = [1, 1]} : vector<16x110xf32> to vector<16x80xf32>
    %151 = arith.truncf %150 : vector<16x80xf32> to vector<16x80xbf16>
    %c0_83 = arith.constant 0 : index
    %c112 = arith.constant 112 : index
    %152 = vector.load %arg8[%c0_83, %c112] : memref<16x144xbf16, #tpu.memory_space<vmem>>, vector<16x16xbf16>
    %cst_84 = arith.constant dense<0.000000e+00> : vector<16x80xf32>
    %153 = tpu.matmul %152, %151, %cst_84 {dimension_numbers = #tpu.dot_dimension_numbers<[1], [0], [0], [1], [0, 0, 1, 1], [], []>} : vector<16x16xbf16>, vector<16x80xbf16>, vector<16x80xf32> -> vector<16x80xf32>
    %154 = arith.addf %149, %153 : vector<16x80xf32>
    %155 = vector.extract_strided_slice %113 {offsets = [0, 22], sizes = [16, 80], strides = [1, 1]} : vector<16x110xf32> to vector<16x80xf32>
    %156 = arith.truncf %155 : vector<16x80xf32> to vector<16x80xbf16>
    %c0_85 = arith.constant 0 : index
    %c128 = arith.constant 128 : index
    %157 = vector.load %arg8[%c0_85, %c128] : memref<16x144xbf16, #tpu.memory_space<vmem>>, vector<16x16xbf16>
    %cst_86 = arith.constant dense<0.000000e+00> : vector<16x80xf32>
    %158 = tpu.matmul %157, %156, %cst_86 {dimension_numbers = #tpu.dot_dimension_numbers<[1], [0], [0], [1], [0, 0, 1, 1], [], []>} : vector<16x16xbf16>, vector<16x80xbf16>, vector<16x80xf32> -> vector<16x80xf32>
    %159 = arith.addf %154, %158 : vector<16x80xf32>
    %c0_87 = arith.constant 0 : index
    %c0_88 = arith.constant 0 : index
    %160 = vector.load %arg9[%c0_87, %c0_88] : memref<16x1xf32, #tpu.memory_space<vmem>>, vector<16x1xf32>
    %161 = vector.broadcast %160 : vector<16x1xf32> to vector<16x80xf32>
    %162 = arith.addf %159, %161 : vector<16x80xf32>
    %cst_89 = arith.constant 0.000000e+00 : f32
    %163 = vector.broadcast %cst_89 : f32 to vector<16x80xf32>
    %164 = arith.cmpf oge, %162, %163 : vector<16x80xf32>
    %cst_90 = arith.constant 2.000000e-01 : f32
    %165 = vector.broadcast %cst_90 : f32 to vector<16x80xf32>
    %166 = arith.mulf %165, %162 : vector<16x80xf32>
    %167 = arith.select %164, %162, %166 : vector<16x80xi1>, vector<16x80xf32>
    %c0_91 = arith.constant 0 : index
    %c0_92 = arith.constant 0 : index
    %168 = vector.load %arg10[%c0_91, %c0_92] : memref<80x110xf32, #tpu.memory_space<vmem>>, vector<80x110xf32>
    %cst_93 = arith.constant dense<0.000000e+00> : vector<16x110xf32>
    %169 = tpu.matmul %167, %168, %cst_93 {dimension_numbers = #tpu.dot_dimension_numbers<[1], [0], [0], [1], [0, 0, 1, 1], [], []>} : vector<16x80xf32>, vector<80x110xf32>, vector<16x110xf32> -> vector<16x110xf32>
    %cst_94 = arith.constant 0.000000e+00 : f32
    %170 = vector.broadcast %cst_94 : f32 to vector<32x80xf32>
    %171 = vector.extract_strided_slice %169 {offsets = [0, 0], sizes = [16, 80], strides = [1, 1]} : vector<16x110xf32> to vector<16x80xf32>
    %172 = arith.truncf %171 : vector<16x80xf32> to vector<16x80xbf16>
    %c0_95 = arith.constant 0 : index
    %c0_96 = arith.constant 0 : index
    %173 = vector.load %arg11[%c0_95, %c0_96] : memref<32x144xbf16, #tpu.memory_space<vmem>>, vector<32x16xbf16>
    %cst_97 = arith.constant dense<0.000000e+00> : vector<32x80xf32>
    %174 = tpu.matmul %173, %172, %cst_97 {dimension_numbers = #tpu.dot_dimension_numbers<[1], [0], [0], [1], [0, 0, 1, 1], [], []>} : vector<32x16xbf16>, vector<16x80xbf16>, vector<32x80xf32> -> vector<32x80xf32>
    %175 = arith.addf %170, %174 : vector<32x80xf32>
    %176 = vector.extract_strided_slice %169 {offsets = [0, 1], sizes = [16, 80], strides = [1, 1]} : vector<16x110xf32> to vector<16x80xf32>
    %177 = arith.truncf %176 : vector<16x80xf32> to vector<16x80xbf16>
    %c0_98 = arith.constant 0 : index
    %c16_99 = arith.constant 16 : index
    %178 = vector.load %arg11[%c0_98, %c16_99] : memref<32x144xbf16, #tpu.memory_space<vmem>>, vector<32x16xbf16>
    %cst_100 = arith.constant dense<0.000000e+00> : vector<32x80xf32>
    %179 = tpu.matmul %178, %177, %cst_100 {dimension_numbers = #tpu.dot_dimension_numbers<[1], [0], [0], [1], [0, 0, 1, 1], [], []>} : vector<32x16xbf16>, vector<16x80xbf16>, vector<32x80xf32> -> vector<32x80xf32>
    %180 = arith.addf %175, %179 : vector<32x80xf32>
    %181 = vector.extract_strided_slice %169 {offsets = [0, 2], sizes = [16, 80], strides = [1, 1]} : vector<16x110xf32> to vector<16x80xf32>
    %182 = arith.truncf %181 : vector<16x80xf32> to vector<16x80xbf16>
    %c0_101 = arith.constant 0 : index
    %c32_102 = arith.constant 32 : index
    %183 = vector.load %arg11[%c0_101, %c32_102] : memref<32x144xbf16, #tpu.memory_space<vmem>>, vector<32x16xbf16>
    %cst_103 = arith.constant dense<0.000000e+00> : vector<32x80xf32>
    %184 = tpu.matmul %183, %182, %cst_103 {dimension_numbers = #tpu.dot_dimension_numbers<[1], [0], [0], [1], [0, 0, 1, 1], [], []>} : vector<32x16xbf16>, vector<16x80xbf16>, vector<32x80xf32> -> vector<32x80xf32>
    %185 = arith.addf %180, %184 : vector<32x80xf32>
    %186 = vector.extract_strided_slice %169 {offsets = [0, 10], sizes = [16, 80], strides = [1, 1]} : vector<16x110xf32> to vector<16x80xf32>
    %187 = arith.truncf %186 : vector<16x80xf32> to vector<16x80xbf16>
    %c0_104 = arith.constant 0 : index
    %c48_105 = arith.constant 48 : index
    %188 = vector.load %arg11[%c0_104, %c48_105] : memref<32x144xbf16, #tpu.memory_space<vmem>>, vector<32x16xbf16>
    %cst_106 = arith.constant dense<0.000000e+00> : vector<32x80xf32>
    %189 = tpu.matmul %188, %187, %cst_106 {dimension_numbers = #tpu.dot_dimension_numbers<[1], [0], [0], [1], [0, 0, 1, 1], [], []>} : vector<32x16xbf16>, vector<16x80xbf16>, vector<32x80xf32> -> vector<32x80xf32>
    %190 = arith.addf %185, %189 : vector<32x80xf32>
    %191 = vector.extract_strided_slice %169 {offsets = [0, 11], sizes = [16, 80], strides = [1, 1]} : vector<16x110xf32> to vector<16x80xf32>
    %192 = arith.truncf %191 : vector<16x80xf32> to vector<16x80xbf16>
    %c0_107 = arith.constant 0 : index
    %c64_108 = arith.constant 64 : index
    %193 = vector.load %arg11[%c0_107, %c64_108] : memref<32x144xbf16, #tpu.memory_space<vmem>>, vector<32x16xbf16>
    %cst_109 = arith.constant dense<0.000000e+00> : vector<32x80xf32>
    %194 = tpu.matmul %193, %192, %cst_109 {dimension_numbers = #tpu.dot_dimension_numbers<[1], [0], [0], [1], [0, 0, 1, 1], [], []>} : vector<32x16xbf16>, vector<16x80xbf16>, vector<32x80xf32> -> vector<32x80xf32>
    %195 = arith.addf %190, %194 : vector<32x80xf32>
    %196 = vector.extract_strided_slice %169 {offsets = [0, 12], sizes = [16, 80], strides = [1, 1]} : vector<16x110xf32> to vector<16x80xf32>
    %197 = arith.truncf %196 : vector<16x80xf32> to vector<16x80xbf16>
    %c0_110 = arith.constant 0 : index
    %c80_111 = arith.constant 80 : index
    %198 = vector.load %arg11[%c0_110, %c80_111] : memref<32x144xbf16, #tpu.memory_space<vmem>>, vector<32x16xbf16>
    %cst_112 = arith.constant dense<0.000000e+00> : vector<32x80xf32>
    %199 = tpu.matmul %198, %197, %cst_112 {dimension_numbers = #tpu.dot_dimension_numbers<[1], [0], [0], [1], [0, 0, 1, 1], [], []>} : vector<32x16xbf16>, vector<16x80xbf16>, vector<32x80xf32> -> vector<32x80xf32>
    %200 = arith.addf %195, %199 : vector<32x80xf32>
    %201 = vector.extract_strided_slice %169 {offsets = [0, 20], sizes = [16, 80], strides = [1, 1]} : vector<16x110xf32> to vector<16x80xf32>
    %202 = arith.truncf %201 : vector<16x80xf32> to vector<16x80xbf16>
    %c0_113 = arith.constant 0 : index
    %c96_114 = arith.constant 96 : index
    %203 = vector.load %arg11[%c0_113, %c96_114] : memref<32x144xbf16, #tpu.memory_space<vmem>>, vector<32x16xbf16>
    %cst_115 = arith.constant dense<0.000000e+00> : vector<32x80xf32>
    %204 = tpu.matmul %203, %202, %cst_115 {dimension_numbers = #tpu.dot_dimension_numbers<[1], [0], [0], [1], [0, 0, 1, 1], [], []>} : vector<32x16xbf16>, vector<16x80xbf16>, vector<32x80xf32> -> vector<32x80xf32>
    %205 = arith.addf %200, %204 : vector<32x80xf32>
    %206 = vector.extract_strided_slice %169 {offsets = [0, 21], sizes = [16, 80], strides = [1, 1]} : vector<16x110xf32> to vector<16x80xf32>
    %207 = arith.truncf %206 : vector<16x80xf32> to vector<16x80xbf16>
    %c0_116 = arith.constant 0 : index
    %c112_117 = arith.constant 112 : index
    %208 = vector.load %arg11[%c0_116, %c112_117] : memref<32x144xbf16, #tpu.memory_space<vmem>>, vector<32x16xbf16>
    %cst_118 = arith.constant dense<0.000000e+00> : vector<32x80xf32>
    %209 = tpu.matmul %208, %207, %cst_118 {dimension_numbers = #tpu.dot_dimension_numbers<[1], [0], [0], [1], [0, 0, 1, 1], [], []>} : vector<32x16xbf16>, vector<16x80xbf16>, vector<32x80xf32> -> vector<32x80xf32>
    %210 = arith.addf %205, %209 : vector<32x80xf32>
    %211 = vector.extract_strided_slice %169 {offsets = [0, 22], sizes = [16, 80], strides = [1, 1]} : vector<16x110xf32> to vector<16x80xf32>
    %212 = arith.truncf %211 : vector<16x80xf32> to vector<16x80xbf16>
    %c0_119 = arith.constant 0 : index
    %c128_120 = arith.constant 128 : index
    %213 = vector.load %arg11[%c0_119, %c128_120] : memref<32x144xbf16, #tpu.memory_space<vmem>>, vector<32x16xbf16>
    %cst_121 = arith.constant dense<0.000000e+00> : vector<32x80xf32>
    %214 = tpu.matmul %213, %212, %cst_121 {dimension_numbers = #tpu.dot_dimension_numbers<[1], [0], [0], [1], [0, 0, 1, 1], [], []>} : vector<32x16xbf16>, vector<16x80xbf16>, vector<32x80xf32> -> vector<32x80xf32>
    %215 = arith.addf %210, %214 : vector<32x80xf32>
    %c0_122 = arith.constant 0 : index
    %c0_123 = arith.constant 0 : index
    %216 = vector.load %arg12[%c0_122, %c0_123] : memref<32x1xf32, #tpu.memory_space<vmem>>, vector<32x1xf32>
    %217 = vector.broadcast %216 : vector<32x1xf32> to vector<32x80xf32>
    %218 = arith.addf %215, %217 : vector<32x80xf32>
    %cst_124 = arith.constant 0.000000e+00 : f32
    %219 = vector.broadcast %cst_124 : f32 to vector<32x80xf32>
    %220 = arith.cmpf oge, %218, %219 : vector<32x80xf32>
    %cst_125 = arith.constant 2.000000e-01 : f32
    %221 = vector.broadcast %cst_125 : f32 to vector<32x80xf32>
    %222 = arith.mulf %221, %218 : vector<32x80xf32>
    %223 = arith.select %220, %218, %222 : vector<32x80xi1>, vector<32x80xf32>
    %c0_126 = arith.constant 0 : index
    %c0_127 = arith.constant 0 : index
    %224 = vector.load %arg13[%c0_126, %c0_127] : memref<80x42xf32, #tpu.memory_space<vmem>>, vector<80x42xf32>
    %cst_128 = arith.constant dense<0.000000e+00> : vector<32x42xf32>
    %225 = tpu.matmul %223, %224, %cst_128 {dimension_numbers = #tpu.dot_dimension_numbers<[1], [0], [0], [1], [0, 0, 1, 1], [], []>} : vector<32x80xf32>, vector<80x42xf32>, vector<32x42xf32> -> vector<32x42xf32>
    %cst_129 = arith.constant 0.000000e+00 : f32
    %226 = vector.broadcast %cst_129 : f32 to vector<32x24xf32>
    %227 = vector.extract_strided_slice %225 {offsets = [0, 0], sizes = [32, 24], strides = [1, 1]} : vector<32x42xf32> to vector<32x24xf32>
    %228 = arith.truncf %227 : vector<32x24xf32> to vector<32x24xbf16>
    %c0_130 = arith.constant 0 : index
    %c0_131 = arith.constant 0 : index
    %229 = vector.load %arg14[%c0_130, %c0_131] : memref<32x288xbf16, #tpu.memory_space<vmem>>, vector<32x32xbf16>
    %cst_132 = arith.constant dense<0.000000e+00> : vector<32x24xf32>
    %230 = tpu.matmul %229, %228, %cst_132 {dimension_numbers = #tpu.dot_dimension_numbers<[1], [0], [0], [1], [0, 0, 1, 1], [], []>} : vector<32x32xbf16>, vector<32x24xbf16>, vector<32x24xf32> -> vector<32x24xf32>
    %231 = arith.addf %226, %230 : vector<32x24xf32>
    %232 = vector.extract_strided_slice %225 {offsets = [0, 1], sizes = [32, 24], strides = [1, 1]} : vector<32x42xf32> to vector<32x24xf32>
    %233 = arith.truncf %232 : vector<32x24xf32> to vector<32x24xbf16>
    %c0_133 = arith.constant 0 : index
    %c32_134 = arith.constant 32 : index
    %234 = vector.load %arg14[%c0_133, %c32_134] : memref<32x288xbf16, #tpu.memory_space<vmem>>, vector<32x32xbf16>
    %cst_135 = arith.constant dense<0.000000e+00> : vector<32x24xf32>
    %235 = tpu.matmul %234, %233, %cst_135 {dimension_numbers = #tpu.dot_dimension_numbers<[1], [0], [0], [1], [0, 0, 1, 1], [], []>} : vector<32x32xbf16>, vector<32x24xbf16>, vector<32x24xf32> -> vector<32x24xf32>
    %236 = arith.addf %231, %235 : vector<32x24xf32>
    %237 = vector.extract_strided_slice %225 {offsets = [0, 2], sizes = [32, 24], strides = [1, 1]} : vector<32x42xf32> to vector<32x24xf32>
    %238 = arith.truncf %237 : vector<32x24xf32> to vector<32x24xbf16>
    %c0_136 = arith.constant 0 : index
    %c64_137 = arith.constant 64 : index
    %239 = vector.load %arg14[%c0_136, %c64_137] : memref<32x288xbf16, #tpu.memory_space<vmem>>, vector<32x32xbf16>
    %cst_138 = arith.constant dense<0.000000e+00> : vector<32x24xf32>
    %240 = tpu.matmul %239, %238, %cst_138 {dimension_numbers = #tpu.dot_dimension_numbers<[1], [0], [0], [1], [0, 0, 1, 1], [], []>} : vector<32x32xbf16>, vector<32x24xbf16>, vector<32x24xf32> -> vector<32x24xf32>
    %241 = arith.addf %236, %240 : vector<32x24xf32>
    %242 = vector.extract_strided_slice %225 {offsets = [0, 6], sizes = [32, 24], strides = [1, 1]} : vector<32x42xf32> to vector<32x24xf32>
    %243 = arith.truncf %242 : vector<32x24xf32> to vector<32x24xbf16>
    %c0_139 = arith.constant 0 : index
    %c96_140 = arith.constant 96 : index
    %244 = vector.load %arg14[%c0_139, %c96_140] : memref<32x288xbf16, #tpu.memory_space<vmem>>, vector<32x32xbf16>
    %cst_141 = arith.constant dense<0.000000e+00> : vector<32x24xf32>
    %245 = tpu.matmul %244, %243, %cst_141 {dimension_numbers = #tpu.dot_dimension_numbers<[1], [0], [0], [1], [0, 0, 1, 1], [], []>} : vector<32x32xbf16>, vector<32x24xbf16>, vector<32x24xf32> -> vector<32x24xf32>
    %246 = arith.addf %241, %245 : vector<32x24xf32>
    %247 = vector.extract_strided_slice %225 {offsets = [0, 7], sizes = [32, 24], strides = [1, 1]} : vector<32x42xf32> to vector<32x24xf32>
    %248 = arith.truncf %247 : vector<32x24xf32> to vector<32x24xbf16>
    %c0_142 = arith.constant 0 : index
    %c128_143 = arith.constant 128 : index
    %249 = vector.load %arg14[%c0_142, %c128_143] : memref<32x288xbf16, #tpu.memory_space<vmem>>, vector<32x32xbf16>
    %cst_144 = arith.constant dense<0.000000e+00> : vector<32x24xf32>
    %250 = tpu.matmul %249, %248, %cst_144 {dimension_numbers = #tpu.dot_dimension_numbers<[1], [0], [0], [1], [0, 0, 1, 1], [], []>} : vector<32x32xbf16>, vector<32x24xbf16>, vector<32x24xf32> -> vector<32x24xf32>
    %251 = arith.addf %246, %250 : vector<32x24xf32>
    %252 = vector.extract_strided_slice %225 {offsets = [0, 8], sizes = [32, 24], strides = [1, 1]} : vector<32x42xf32> to vector<32x24xf32>
    %253 = arith.truncf %252 : vector<32x24xf32> to vector<32x24xbf16>
    %c0_145 = arith.constant 0 : index
    %c160 = arith.constant 160 : index
    %254 = vector.load %arg14[%c0_145, %c160] : memref<32x288xbf16, #tpu.memory_space<vmem>>, vector<32x32xbf16>
    %cst_146 = arith.constant dense<0.000000e+00> : vector<32x24xf32>
    %255 = tpu.matmul %254, %253, %cst_146 {dimension_numbers = #tpu.dot_dimension_numbers<[1], [0], [0], [1], [0, 0, 1, 1], [], []>} : vector<32x32xbf16>, vector<32x24xbf16>, vector<32x24xf32> -> vector<32x24xf32>
    %256 = arith.addf %251, %255 : vector<32x24xf32>
    %257 = vector.extract_strided_slice %225 {offsets = [0, 12], sizes = [32, 24], strides = [1, 1]} : vector<32x42xf32> to vector<32x24xf32>
    %258 = arith.truncf %257 : vector<32x24xf32> to vector<32x24xbf16>
    %c0_147 = arith.constant 0 : index
    %c192 = arith.constant 192 : index
    %259 = vector.load %arg14[%c0_147, %c192] : memref<32x288xbf16, #tpu.memory_space<vmem>>, vector<32x32xbf16>
    %cst_148 = arith.constant dense<0.000000e+00> : vector<32x24xf32>
    %260 = tpu.matmul %259, %258, %cst_148 {dimension_numbers = #tpu.dot_dimension_numbers<[1], [0], [0], [1], [0, 0, 1, 1], [], []>} : vector<32x32xbf16>, vector<32x24xbf16>, vector<32x24xf32> -> vector<32x24xf32>
    %261 = arith.addf %256, %260 : vector<32x24xf32>
    %262 = vector.extract_strided_slice %225 {offsets = [0, 13], sizes = [32, 24], strides = [1, 1]} : vector<32x42xf32> to vector<32x24xf32>
    %263 = arith.truncf %262 : vector<32x24xf32> to vector<32x24xbf16>
    %c0_149 = arith.constant 0 : index
    %c224 = arith.constant 224 : index
    %264 = vector.load %arg14[%c0_149, %c224] : memref<32x288xbf16, #tpu.memory_space<vmem>>, vector<32x32xbf16>
    %cst_150 = arith.constant dense<0.000000e+00> : vector<32x24xf32>
    %265 = tpu.matmul %264, %263, %cst_150 {dimension_numbers = #tpu.dot_dimension_numbers<[1], [0], [0], [1], [0, 0, 1, 1], [], []>} : vector<32x32xbf16>, vector<32x24xbf16>, vector<32x24xf32> -> vector<32x24xf32>
    %266 = arith.addf %261, %265 : vector<32x24xf32>
    %267 = vector.extract_strided_slice %225 {offsets = [0, 14], sizes = [32, 24], strides = [1, 1]} : vector<32x42xf32> to vector<32x24xf32>
    %268 = arith.truncf %267 : vector<32x24xf32> to vector<32x24xbf16>
    %c0_151 = arith.constant 0 : index
    %c256 = arith.constant 256 : index
    %269 = vector.load %arg14[%c0_151, %c256] : memref<32x288xbf16, #tpu.memory_space<vmem>>, vector<32x32xbf16>
    %cst_152 = arith.constant dense<0.000000e+00> : vector<32x24xf32>
    %270 = tpu.matmul %269, %268, %cst_152 {dimension_numbers = #tpu.dot_dimension_numbers<[1], [0], [0], [1], [0, 0, 1, 1], [], []>} : vector<32x32xbf16>, vector<32x24xbf16>, vector<32x24xf32> -> vector<32x24xf32>
    %271 = arith.addf %266, %270 : vector<32x24xf32>
    %c0_153 = arith.constant 0 : index
    %c0_154 = arith.constant 0 : index
    %272 = vector.load %arg15[%c0_153, %c0_154] : memref<32x1xf32, #tpu.memory_space<vmem>>, vector<32x1xf32>
    %273 = vector.broadcast %272 : vector<32x1xf32> to vector<32x24xf32>
    %274 = arith.addf %271, %273 : vector<32x24xf32>
    %cst_155 = arith.constant 0.000000e+00 : f32
    %275 = vector.broadcast %cst_155 : f32 to vector<32x24xf32>
    %276 = arith.cmpf oge, %274, %275 : vector<32x24xf32>
    %cst_156 = arith.constant 2.000000e-01 : f32
    %277 = vector.broadcast %cst_156 : f32 to vector<32x24xf32>
    %278 = arith.mulf %277, %274 : vector<32x24xf32>
    %279 = arith.select %276, %274, %278 : vector<32x24xi1>, vector<32x24xf32>
    %c0_157 = arith.constant 0 : index
    %c0_158 = arith.constant 0 : index
    %280 = vector.load %arg16[%c0_157, %c0_158] : memref<24x42xf32, #tpu.memory_space<vmem>>, vector<24x42xf32>
    %cst_159 = arith.constant dense<0.000000e+00> : vector<32x42xf32>
    %281 = tpu.matmul %279, %280, %cst_159 {dimension_numbers = #tpu.dot_dimension_numbers<[1], [0], [0], [1], [0, 0, 1, 1], [], []>} : vector<32x24xf32>, vector<24x42xf32>, vector<32x42xf32> -> vector<32x42xf32>
    %cst_160 = arith.constant 0.000000e+00 : f32
    %282 = vector.broadcast %cst_160 : f32 to vector<64x24xf32>
    %283 = vector.extract_strided_slice %281 {offsets = [0, 0], sizes = [32, 24], strides = [1, 1]} : vector<32x42xf32> to vector<32x24xf32>
    %284 = arith.truncf %283 : vector<32x24xf32> to vector<32x24xbf16>
    %c0_161 = arith.constant 0 : index
    %c0_162 = arith.constant 0 : index
    %285 = vector.load %arg17[%c0_161, %c0_162] : memref<64x288xbf16, #tpu.memory_space<vmem>>, vector<64x32xbf16>
    %cst_163 = arith.constant dense<0.000000e+00> : vector<64x24xf32>
    %286 = tpu.matmul %285, %284, %cst_163 {dimension_numbers = #tpu.dot_dimension_numbers<[1], [0], [0], [1], [0, 0, 1, 1], [], []>} : vector<64x32xbf16>, vector<32x24xbf16>, vector<64x24xf32> -> vector<64x24xf32>
    %287 = arith.addf %282, %286 : vector<64x24xf32>
    %288 = vector.extract_strided_slice %281 {offsets = [0, 1], sizes = [32, 24], strides = [1, 1]} : vector<32x42xf32> to vector<32x24xf32>
    %289 = arith.truncf %288 : vector<32x24xf32> to vector<32x24xbf16>
    %c0_164 = arith.constant 0 : index
    %c32_165 = arith.constant 32 : index
    %290 = vector.load %arg17[%c0_164, %c32_165] : memref<64x288xbf16, #tpu.memory_space<vmem>>, vector<64x32xbf16>
    %cst_166 = arith.constant dense<0.000000e+00> : vector<64x24xf32>
    %291 = tpu.matmul %290, %289, %cst_166 {dimension_numbers = #tpu.dot_dimension_numbers<[1], [0], [0], [1], [0, 0, 1, 1], [], []>} : vector<64x32xbf16>, vector<32x24xbf16>, vector<64x24xf32> -> vector<64x24xf32>
    %292 = arith.addf %287, %291 : vector<64x24xf32>
    %293 = vector.extract_strided_slice %281 {offsets = [0, 2], sizes = [32, 24], strides = [1, 1]} : vector<32x42xf32> to vector<32x24xf32>
    %294 = arith.truncf %293 : vector<32x24xf32> to vector<32x24xbf16>
    %c0_167 = arith.constant 0 : index
    %c64_168 = arith.constant 64 : index
    %295 = vector.load %arg17[%c0_167, %c64_168] : memref<64x288xbf16, #tpu.memory_space<vmem>>, vector<64x32xbf16>
    %cst_169 = arith.constant dense<0.000000e+00> : vector<64x24xf32>
    %296 = tpu.matmul %295, %294, %cst_169 {dimension_numbers = #tpu.dot_dimension_numbers<[1], [0], [0], [1], [0, 0, 1, 1], [], []>} : vector<64x32xbf16>, vector<32x24xbf16>, vector<64x24xf32> -> vector<64x24xf32>
    %297 = arith.addf %292, %296 : vector<64x24xf32>
    %298 = vector.extract_strided_slice %281 {offsets = [0, 6], sizes = [32, 24], strides = [1, 1]} : vector<32x42xf32> to vector<32x24xf32>
    %299 = arith.truncf %298 : vector<32x24xf32> to vector<32x24xbf16>
    %c0_170 = arith.constant 0 : index
    %c96_171 = arith.constant 96 : index
    %300 = vector.load %arg17[%c0_170, %c96_171] : memref<64x288xbf16, #tpu.memory_space<vmem>>, vector<64x32xbf16>
    %cst_172 = arith.constant dense<0.000000e+00> : vector<64x24xf32>
    %301 = tpu.matmul %300, %299, %cst_172 {dimension_numbers = #tpu.dot_dimension_numbers<[1], [0], [0], [1], [0, 0, 1, 1], [], []>} : vector<64x32xbf16>, vector<32x24xbf16>, vector<64x24xf32> -> vector<64x24xf32>
    %302 = arith.addf %297, %301 : vector<64x24xf32>
    %303 = vector.extract_strided_slice %281 {offsets = [0, 7], sizes = [32, 24], strides = [1, 1]} : vector<32x42xf32> to vector<32x24xf32>
    %304 = arith.truncf %303 : vector<32x24xf32> to vector<32x24xbf16>
    %c0_173 = arith.constant 0 : index
    %c128_174 = arith.constant 128 : index
    %305 = vector.load %arg17[%c0_173, %c128_174] : memref<64x288xbf16, #tpu.memory_space<vmem>>, vector<64x32xbf16>
    %cst_175 = arith.constant dense<0.000000e+00> : vector<64x24xf32>
    %306 = tpu.matmul %305, %304, %cst_175 {dimension_numbers = #tpu.dot_dimension_numbers<[1], [0], [0], [1], [0, 0, 1, 1], [], []>} : vector<64x32xbf16>, vector<32x24xbf16>, vector<64x24xf32> -> vector<64x24xf32>
    %307 = arith.addf %302, %306 : vector<64x24xf32>
    %308 = vector.extract_strided_slice %281 {offsets = [0, 8], sizes = [32, 24], strides = [1, 1]} : vector<32x42xf32> to vector<32x24xf32>
    %309 = arith.truncf %308 : vector<32x24xf32> to vector<32x24xbf16>
    %c0_176 = arith.constant 0 : index
    %c160_177 = arith.constant 160 : index
    %310 = vector.load %arg17[%c0_176, %c160_177] : memref<64x288xbf16, #tpu.memory_space<vmem>>, vector<64x32xbf16>
    %cst_178 = arith.constant dense<0.000000e+00> : vector<64x24xf32>
    %311 = tpu.matmul %310, %309, %cst_178 {dimension_numbers = #tpu.dot_dimension_numbers<[1], [0], [0], [1], [0, 0, 1, 1], [], []>} : vector<64x32xbf16>, vector<32x24xbf16>, vector<64x24xf32> -> vector<64x24xf32>
    %312 = arith.addf %307, %311 : vector<64x24xf32>
    %313 = vector.extract_strided_slice %281 {offsets = [0, 12], sizes = [32, 24], strides = [1, 1]} : vector<32x42xf32> to vector<32x24xf32>
    %314 = arith.truncf %313 : vector<32x24xf32> to vector<32x24xbf16>
    %c0_179 = arith.constant 0 : index
    %c192_180 = arith.constant 192 : index
    %315 = vector.load %arg17[%c0_179, %c192_180] : memref<64x288xbf16, #tpu.memory_space<vmem>>, vector<64x32xbf16>
    %cst_181 = arith.constant dense<0.000000e+00> : vector<64x24xf32>
    %316 = tpu.matmul %315, %314, %cst_181 {dimension_numbers = #tpu.dot_dimension_numbers<[1], [0], [0], [1], [0, 0, 1, 1], [], []>} : vector<64x32xbf16>, vector<32x24xbf16>, vector<64x24xf32> -> vector<64x24xf32>
    %317 = arith.addf %312, %316 : vector<64x24xf32>
    %318 = vector.extract_strided_slice %281 {offsets = [0, 13], sizes = [32, 24], strides = [1, 1]} : vector<32x42xf32> to vector<32x24xf32>
    %319 = arith.truncf %318 : vector<32x24xf32> to vector<32x24xbf16>
    %c0_182 = arith.constant 0 : index
    %c224_183 = arith.constant 224 : index
    %320 = vector.load %arg17[%c0_182, %c224_183] : memref<64x288xbf16, #tpu.memory_space<vmem>>, vector<64x32xbf16>
    %cst_184 = arith.constant dense<0.000000e+00> : vector<64x24xf32>
    %321 = tpu.matmul %320, %319, %cst_184 {dimension_numbers = #tpu.dot_dimension_numbers<[1], [0], [0], [1], [0, 0, 1, 1], [], []>} : vector<64x32xbf16>, vector<32x24xbf16>, vector<64x24xf32> -> vector<64x24xf32>
    %322 = arith.addf %317, %321 : vector<64x24xf32>
    %323 = vector.extract_strided_slice %281 {offsets = [0, 14], sizes = [32, 24], strides = [1, 1]} : vector<32x42xf32> to vector<32x24xf32>
    %324 = arith.truncf %323 : vector<32x24xf32> to vector<32x24xbf16>
    %c0_185 = arith.constant 0 : index
    %c256_186 = arith.constant 256 : index
    %325 = vector.load %arg17[%c0_185, %c256_186] : memref<64x288xbf16, #tpu.memory_space<vmem>>, vector<64x32xbf16>
    %cst_187 = arith.constant dense<0.000000e+00> : vector<64x24xf32>
    %326 = tpu.matmul %325, %324, %cst_187 {dimension_numbers = #tpu.dot_dimension_numbers<[1], [0], [0], [1], [0, 0, 1, 1], [], []>} : vector<64x32xbf16>, vector<32x24xbf16>, vector<64x24xf32> -> vector<64x24xf32>
    %327 = arith.addf %322, %326 : vector<64x24xf32>
    %c0_188 = arith.constant 0 : index
    %c0_189 = arith.constant 0 : index
    %328 = vector.load %arg18[%c0_188, %c0_189] : memref<64x1xf32, #tpu.memory_space<vmem>>, vector<64x1xf32>
    %329 = vector.broadcast %328 : vector<64x1xf32> to vector<64x24xf32>
    %330 = arith.addf %327, %329 : vector<64x24xf32>
    %cst_190 = arith.constant 0.000000e+00 : f32
    %331 = vector.broadcast %cst_190 : f32 to vector<64x24xf32>
    %332 = arith.cmpf oge, %330, %331 : vector<64x24xf32>
    %cst_191 = arith.constant 2.000000e-01 : f32
    %333 = vector.broadcast %cst_191 : f32 to vector<64x24xf32>
    %334 = arith.mulf %333, %330 : vector<64x24xf32>
    %335 = arith.select %332, %330, %334 : vector<64x24xi1>, vector<64x24xf32>
    %c0_192 = arith.constant 0 : index
    %c0_193 = arith.constant 0 : index
    %336 = vector.load %arg19[%c0_192, %c0_193] : memref<24x20xf32, #tpu.memory_space<vmem>>, vector<24x20xf32>
    %cst_194 = arith.constant dense<0.000000e+00> : vector<64x20xf32>
    %337 = tpu.matmul %335, %336, %cst_194 {dimension_numbers = #tpu.dot_dimension_numbers<[1], [0], [0], [1], [0, 0, 1, 1], [], []>} : vector<64x24xf32>, vector<24x20xf32>, vector<64x20xf32> -> vector<64x20xf32>
    %cst_195 = arith.constant 0.000000e+00 : f32
    %338 = vector.broadcast %cst_195 : f32 to vector<64x8xf32>
    %339 = vector.extract_strided_slice %337 {offsets = [0, 0], sizes = [64, 8], strides = [1, 1]} : vector<64x20xf32> to vector<64x8xf32>
    %340 = arith.truncf %339 : vector<64x8xf32> to vector<64x8xbf16>
    %c0_196 = arith.constant 0 : index
    %c0_197 = arith.constant 0 : index
    %341 = vector.load %arg20[%c0_196, %c0_197] : memref<64x576xbf16, #tpu.memory_space<vmem>>, vector<64x64xbf16>
    %cst_198 = arith.constant dense<0.000000e+00> : vector<64x8xf32>
    %342 = tpu.matmul %341, %340, %cst_198 {dimension_numbers = #tpu.dot_dimension_numbers<[1], [0], [0], [1], [0, 0, 1, 1], [], []>} : vector<64x64xbf16>, vector<64x8xbf16>, vector<64x8xf32> -> vector<64x8xf32>
    %343 = arith.addf %338, %342 : vector<64x8xf32>
    %344 = vector.extract_strided_slice %337 {offsets = [0, 1], sizes = [64, 8], strides = [1, 1]} : vector<64x20xf32> to vector<64x8xf32>
    %345 = arith.truncf %344 : vector<64x8xf32> to vector<64x8xbf16>
    %c0_199 = arith.constant 0 : index
    %c64_200 = arith.constant 64 : index
    %346 = vector.load %arg20[%c0_199, %c64_200] : memref<64x576xbf16, #tpu.memory_space<vmem>>, vector<64x64xbf16>
    %cst_201 = arith.constant dense<0.000000e+00> : vector<64x8xf32>
    %347 = tpu.matmul %346, %345, %cst_201 {dimension_numbers = #tpu.dot_dimension_numbers<[1], [0], [0], [1], [0, 0, 1, 1], [], []>} : vector<64x64xbf16>, vector<64x8xbf16>, vector<64x8xf32> -> vector<64x8xf32>
    %348 = arith.addf %343, %347 : vector<64x8xf32>
    %349 = vector.extract_strided_slice %337 {offsets = [0, 2], sizes = [64, 8], strides = [1, 1]} : vector<64x20xf32> to vector<64x8xf32>
    %350 = arith.truncf %349 : vector<64x8xf32> to vector<64x8xbf16>
    %c0_202 = arith.constant 0 : index
    %c128_203 = arith.constant 128 : index
    %351 = vector.load %arg20[%c0_202, %c128_203] : memref<64x576xbf16, #tpu.memory_space<vmem>>, vector<64x64xbf16>
    %cst_204 = arith.constant dense<0.000000e+00> : vector<64x8xf32>
    %352 = tpu.matmul %351, %350, %cst_204 {dimension_numbers = #tpu.dot_dimension_numbers<[1], [0], [0], [1], [0, 0, 1, 1], [], []>} : vector<64x64xbf16>, vector<64x8xbf16>, vector<64x8xf32> -> vector<64x8xf32>
    %353 = arith.addf %348, %352 : vector<64x8xf32>
    %354 = vector.extract_strided_slice %337 {offsets = [0, 4], sizes = [64, 8], strides = [1, 1]} : vector<64x20xf32> to vector<64x8xf32>
    %355 = arith.truncf %354 : vector<64x8xf32> to vector<64x8xbf16>
    %c0_205 = arith.constant 0 : index
    %c192_206 = arith.constant 192 : index
    %356 = vector.load %arg20[%c0_205, %c192_206] : memref<64x576xbf16, #tpu.memory_space<vmem>>, vector<64x64xbf16>
    %cst_207 = arith.constant dense<0.000000e+00> : vector<64x8xf32>
    %357 = tpu.matmul %356, %355, %cst_207 {dimension_numbers = #tpu.dot_dimension_numbers<[1], [0], [0], [1], [0, 0, 1, 1], [], []>} : vector<64x64xbf16>, vector<64x8xbf16>, vector<64x8xf32> -> vector<64x8xf32>
    %358 = arith.addf %353, %357 : vector<64x8xf32>
    %359 = vector.extract_strided_slice %337 {offsets = [0, 5], sizes = [64, 8], strides = [1, 1]} : vector<64x20xf32> to vector<64x8xf32>
    %360 = arith.truncf %359 : vector<64x8xf32> to vector<64x8xbf16>
    %c0_208 = arith.constant 0 : index
    %c256_209 = arith.constant 256 : index
    %361 = vector.load %arg20[%c0_208, %c256_209] : memref<64x576xbf16, #tpu.memory_space<vmem>>, vector<64x64xbf16>
    %cst_210 = arith.constant dense<0.000000e+00> : vector<64x8xf32>
    %362 = tpu.matmul %361, %360, %cst_210 {dimension_numbers = #tpu.dot_dimension_numbers<[1], [0], [0], [1], [0, 0, 1, 1], [], []>} : vector<64x64xbf16>, vector<64x8xbf16>, vector<64x8xf32> -> vector<64x8xf32>
    %363 = arith.addf %358, %362 : vector<64x8xf32>
    %364 = vector.extract_strided_slice %337 {offsets = [0, 6], sizes = [64, 8], strides = [1, 1]} : vector<64x20xf32> to vector<64x8xf32>
    %365 = arith.truncf %364 : vector<64x8xf32> to vector<64x8xbf16>
    %c0_211 = arith.constant 0 : index
    %c320 = arith.constant 320 : index
    %366 = vector.load %arg20[%c0_211, %c320] : memref<64x576xbf16, #tpu.memory_space<vmem>>, vector<64x64xbf16>
    %cst_212 = arith.constant dense<0.000000e+00> : vector<64x8xf32>
    %367 = tpu.matmul %366, %365, %cst_212 {dimension_numbers = #tpu.dot_dimension_numbers<[1], [0], [0], [1], [0, 0, 1, 1], [], []>} : vector<64x64xbf16>, vector<64x8xbf16>, vector<64x8xf32> -> vector<64x8xf32>
    %368 = arith.addf %363, %367 : vector<64x8xf32>
    %369 = vector.extract_strided_slice %337 {offsets = [0, 8], sizes = [64, 8], strides = [1, 1]} : vector<64x20xf32> to vector<64x8xf32>
    %370 = arith.truncf %369 : vector<64x8xf32> to vector<64x8xbf16>
    %c0_213 = arith.constant 0 : index
    %c384 = arith.constant 384 : index
    %371 = vector.load %arg20[%c0_213, %c384] : memref<64x576xbf16, #tpu.memory_space<vmem>>, vector<64x64xbf16>
    %cst_214 = arith.constant dense<0.000000e+00> : vector<64x8xf32>
    %372 = tpu.matmul %371, %370, %cst_214 {dimension_numbers = #tpu.dot_dimension_numbers<[1], [0], [0], [1], [0, 0, 1, 1], [], []>} : vector<64x64xbf16>, vector<64x8xbf16>, vector<64x8xf32> -> vector<64x8xf32>
    %373 = arith.addf %368, %372 : vector<64x8xf32>
    %374 = vector.extract_strided_slice %337 {offsets = [0, 9], sizes = [64, 8], strides = [1, 1]} : vector<64x20xf32> to vector<64x8xf32>
    %375 = arith.truncf %374 : vector<64x8xf32> to vector<64x8xbf16>
    %c0_215 = arith.constant 0 : index
    %c448 = arith.constant 448 : index
    %376 = vector.load %arg20[%c0_215, %c448] : memref<64x576xbf16, #tpu.memory_space<vmem>>, vector<64x64xbf16>
    %cst_216 = arith.constant dense<0.000000e+00> : vector<64x8xf32>
    %377 = tpu.matmul %376, %375, %cst_216 {dimension_numbers = #tpu.dot_dimension_numbers<[1], [0], [0], [1], [0, 0, 1, 1], [], []>} : vector<64x64xbf16>, vector<64x8xbf16>, vector<64x8xf32> -> vector<64x8xf32>
    %378 = arith.addf %373, %377 : vector<64x8xf32>
    %379 = vector.extract_strided_slice %337 {offsets = [0, 10], sizes = [64, 8], strides = [1, 1]} : vector<64x20xf32> to vector<64x8xf32>
    %380 = arith.truncf %379 : vector<64x8xf32> to vector<64x8xbf16>
    %c0_217 = arith.constant 0 : index
    %c512 = arith.constant 512 : index
    %381 = vector.load %arg20[%c0_217, %c512] : memref<64x576xbf16, #tpu.memory_space<vmem>>, vector<64x64xbf16>
    %cst_218 = arith.constant dense<0.000000e+00> : vector<64x8xf32>
    %382 = tpu.matmul %381, %380, %cst_218 {dimension_numbers = #tpu.dot_dimension_numbers<[1], [0], [0], [1], [0, 0, 1, 1], [], []>} : vector<64x64xbf16>, vector<64x8xbf16>, vector<64x8xf32> -> vector<64x8xf32>
    %383 = arith.addf %378, %382 : vector<64x8xf32>
    %c0_219 = arith.constant 0 : index
    %c0_220 = arith.constant 0 : index
    %384 = vector.load %arg21[%c0_219, %c0_220] : memref<64x1xf32, #tpu.memory_space<vmem>>, vector<64x1xf32>
    %385 = vector.broadcast %384 : vector<64x1xf32> to vector<64x8xf32>
    %386 = arith.addf %383, %385 : vector<64x8xf32>
    %cst_221 = arith.constant 0.000000e+00 : f32
    %387 = vector.broadcast %cst_221 : f32 to vector<64x8xf32>
    %388 = arith.cmpf oge, %386, %387 : vector<64x8xf32>
    %cst_222 = arith.constant 2.000000e-01 : f32
    %389 = vector.broadcast %cst_222 : f32 to vector<64x8xf32>
    %390 = arith.mulf %389, %386 : vector<64x8xf32>
    %391 = arith.select %388, %386, %390 : vector<64x8xi1>, vector<64x8xf32>
    %c0_223 = arith.constant 0 : index
    %c0_224 = arith.constant 0 : index
    %392 = vector.load %arg22[%c0_223, %c0_224] : memref<1x8xf32, #tpu.memory_space<vmem>>, vector<1x8xf32>
    %393 = vector.broadcast %392 : vector<1x8xf32> to vector<64x8xf32>
    %394 = arith.mulf %391, %393 : vector<64x8xf32>
    %cst_225 = arith.constant dense<0.000000e+00> : vector<64xf32>
    %395 = vector.multi_reduction <add>, %394, %cst_225 [1] : vector<64x8xf32> to vector<64xf32>
    %396 = vector.shape_cast %395 : vector<64xf32> to vector<64x1xf32>
    %c0_226 = arith.constant 0 : index
    %c0_227 = arith.constant 0 : index
    %397 = vector.load %arg23[%c0_226, %c0_227] : memref<64x1xf32, #tpu.memory_space<vmem>>, vector<64x1xf32>
    %398 = arith.mulf %396, %397 : vector<64x1xf32>
    %cst_228 = arith.constant dense<0.000000e+00> : vector<1xf32>
    %399 = vector.multi_reduction <add>, %398, %cst_228 [0] : vector<64x1xf32> to vector<1xf32>
    %400 = vector.shape_cast %399 : vector<1xf32> to vector<1x1xf32>
    %c0_229 = arith.constant 0 : index
    %c0_230 = arith.constant 0 : index
    %401 = vector.load %arg24[%c0_229, %c0_230] : memref<1x1xf32, #tpu.memory_space<vmem>>, vector<1x1xf32>
    %402 = arith.addf %400, %401 : vector<1x1xf32>
    %c0_231 = arith.constant 0 : index
    %c0_232 = arith.constant 0 : index
    %c0_233 = arith.constant 0 : index
    %403 = vector.load %arg25[%c0_231, %c0_232, %c0_233] : memref<1x1x1xf32, #tpu.memory_space<vmem>>, vector<1x1x1xf32>
    %404 = vector.shape_cast %403 : vector<1x1x1xf32> to vector<1x1xf32>
    %405 = vector.shape_cast %402 : vector<1x1xf32> to vector<1x1x1xf32>
    tpu.vector_store %arg25[%c0_231, %c0_232, %c0_233], %405 {strides = array<i32>} : memref<1x1x1xf32, #tpu.memory_space<vmem>>, vector<1x1x1xf32>,
    return
  }
  func.func @transform_0(%arg0: i32) -> (i32, i32, i32) {
    %c0_i32 = arith.constant 0 : i32
    %c0_i32_0 = arith.constant 0 : i32
    %c0_i32_1 = arith.constant 0 : i32
    return %arg0, %c0_i32, %c0_i32_0 : i32, i32, i32
  }
  func.func @transform_1(%arg0: i32) -> (i32, i32) {
    %c0_i32 = arith.constant 0 : i32
    %c0_i32_0 = arith.constant 0 : i32
    %c0_i32_1 = arith.constant 0 : i32
    return %c0_i32, %c0_i32_0 : i32, i32
  }
  func.func @transform_2(%arg0: i32) -> (i32, i32) {
    %c0_i32 = arith.constant 0 : i32
    %c0_i32_0 = arith.constant 0 : i32
    %c0_i32_1 = arith.constant 0 : i32
    return %c0_i32, %c0_i32_0 : i32, i32
  }
  func.func @transform_3(%arg0: i32) -> (i32, i32) {
    %c0_i32 = arith.constant 0 : i32
    %c0_i32_0 = arith.constant 0 : i32
    %c0_i32_1 = arith.constant 0 : i32
    return %c0_i32, %c0_i32_0 : i32, i32
  }
  func.func @transform_4(%arg0: i32) -> (i32, i32) {
    %c0_i32 = arith.constant 0 : i32
    %c0_i32_0 = arith.constant 0 : i32
    %c0_i32_1 = arith.constant 0 : i32
    return %c0_i32, %c0_i32_0 : i32, i32
  }
  func.func @transform_5(%arg0: i32) -> (i32, i32) {
    %c0_i32 = arith.constant 0 : i32
    %c0_i32_0 = arith.constant 0 : i32
    %c0_i32_1 = arith.constant 0 : i32
    return %c0_i32, %c0_i32_0 : i32, i32
  }
  func.func @transform_6(%arg0: i32) -> (i32, i32) {
    %c0_i32 = arith.constant 0 : i32
    %c0_i32_0 = arith.constant 0 : i32
    %c0_i32_1 = arith.constant 0 : i32
    return %c0_i32, %c0_i32_0 : i32, i32
  }
  func.func @transform_7(%arg0: i32) -> (i32, i32) {
    %c0_i32 = arith.constant 0 : i32
    %c0_i32_0 = arith.constant 0 : i32
    %c0_i32_1 = arith.constant 0 : i32
    return %c0_i32, %c0_i32_0 : i32, i32
  }
  func.func @transform_8(%arg0: i32) -> (i32, i32) {
    %c0_i32 = arith.constant 0 : i32
    %c0_i32_0 = arith.constant 0 : i32
    %c0_i32_1 = arith.constant 0 : i32
    return %c0_i32, %c0_i32_0 : i32, i32
  }
  func.func @transform_9(%arg0: i32) -> (i32, i32) {
    %c0_i32 = arith.constant 0 : i32
    %c0_i32_0 = arith.constant 0 : i32
    %c0_i32_1 = arith.constant 0 : i32
    return %c0_i32, %c0_i32_0 : i32, i32
  }
  func.func @transform_10(%arg0: i32) -> (i32, i32) {
    %c0_i32 = arith.constant 0 : i32
    %c0_i32_0 = arith.constant 0 : i32
    %c0_i32_1 = arith.constant 0 : i32
    return %c0_i32, %c0_i32_0 : i32, i32
  }
  func.func @transform_11(%arg0: i32) -> (i32, i32) {
    %c0_i32 = arith.constant 0 : i32
    %c0_i32_0 = arith.constant 0 : i32
    %c0_i32_1 = arith.constant 0 : i32
    return %c0_i32, %c0_i32_0 : i32, i32
  }
  func.func @transform_12(%arg0: i32) -> (i32, i32) {
    %c0_i32 = arith.constant 0 : i32
    %c0_i32_0 = arith.constant 0 : i32
    %c0_i32_1 = arith.constant 0 : i32
    return %c0_i32, %c0_i32_0 : i32, i32
  }
  func.func @transform_13(%arg0: i32) -> (i32, i32) {
    %c0_i32 = arith.constant 0 : i32
    %c0_i32_0 = arith.constant 0 : i32
    %c0_i32_1 = arith.constant 0 : i32
    return %c0_i32, %c0_i32_0 : i32, i32
  }
  func.func @transform_14(%arg0: i32) -> (i32, i32) {
    %c0_i32 = arith.constant 0 : i32
    %c0_i32_0 = arith.constant 0 : i32
    %c0_i32_1 = arith.constant 0 : i32
    return %c0_i32, %c0_i32_0 : i32, i32
  }
  func.func @transform_15(%arg0: i32) -> (i32, i32) {
    %c0_i32 = arith.constant 0 : i32
    %c0_i32_0 = arith.constant 0 : i32
    %c0_i32_1 = arith.constant 0 : i32
    return %c0_i32, %c0_i32_0 : i32, i32
  }
  func.func @transform_16(%arg0: i32) -> (i32, i32) {
    %c0_i32 = arith.constant 0 : i32
    %c0_i32_0 = arith.constant 0 : i32
    %c0_i32_1 = arith.constant 0 : i32
    return %c0_i32, %c0_i32_0 : i32, i32
  }
  func.func @transform_17(%arg0: i32) -> (i32, i32) {
    %c0_i32 = arith.constant 0 : i32
    %c0_i32_0 = arith.constant 0 : i32
    %c0_i32_1 = arith.constant 0 : i32
    return %c0_i32, %c0_i32_0 : i32, i32
  }
  func.func @transform_18(%arg0: i32) -> (i32, i32) {
    %c0_i32 = arith.constant 0 : i32
    %c0_i32_0 = arith.constant 0 : i32
    %c0_i32_1 = arith.constant 0 : i32
    return %c0_i32, %c0_i32_0 : i32, i32
  }
  func.func @transform_19(%arg0: i32) -> (i32, i32) {
    %c0_i32 = arith.constant 0 : i32
    %c0_i32_0 = arith.constant 0 : i32
    %c0_i32_1 = arith.constant 0 : i32
    return %c0_i32, %c0_i32_0 : i32, i32
  }
  func.func @transform_20(%arg0: i32) -> (i32, i32) {
    %c0_i32 = arith.constant 0 : i32
    %c0_i32_0 = arith.constant 0 : i32
    %c0_i32_1 = arith.constant 0 : i32
    return %c0_i32, %c0_i32_0 : i32, i32
  }
  func.func @transform_21(%arg0: i32) -> (i32, i32) {
    %c0_i32 = arith.constant 0 : i32
    %c0_i32_0 = arith.constant 0 : i32
    %c0_i32_1 = arith.constant 0 : i32
    return %c0_i32, %c0_i32_0 : i32, i32
  }
  func.func @transform_22(%arg0: i32) -> (i32, i32) {
    %c0_i32 = arith.constant 0 : i32
    %c0_i32_0 = arith.constant 0 : i32
    %c0_i32_1 = arith.constant 0 : i32
    return %c0_i32, %c0_i32_0 : i32, i32
  }
  func.func @transform_23(%arg0: i32) -> (i32, i32) {
    %c0_i32 = arith.constant 0 : i32
    %c0_i32_0 = arith.constant 0 : i32
    %c0_i32_1 = arith.constant 0 : i32
    return %c0_i32, %c0_i32_0 : i32, i32
  }
  func.func @transform_24(%arg0: i32) -> (i32, i32, i32) {
    %c0_i32 = arith.constant 0 : i32
    %c0_i32_0 = arith.constant 0 : i32
    %c0_i32_1 = arith.constant 0 : i32
    return %arg0, %c0_i32, %c0_i32_0 : i32, i32, i32
  }
}

</mosaic_0001>

<llo_original>
// kernel: critic_forward.1
$region0: #{critic_forward.1}
  #allocation0 [shape = 'u32[]', space=smem, size = 0x4, offset = 0x4, fixed_abs, tag = 'smem constant byte address 0x4 - core index']
  #allocation1 [shape = 'u32[72,128]{1,0:T(1,128)}', space=vmem, size = 0x9000, scoped, tag = 'internal scratch']
  #allocation2 [shape = 'f32[1,1]{1,0:T(1,128)S(1)}', space=vmem, size = 0x200, scoped, tag = 'scoped memory for critic_forward.1']
  %s0 = inlined_call_operand.vmem [shape: f32[2,8,342], index: 0, kind: input, shape index: {}]
  %s1 = inlined_call_operand.vmem [shape: bf16[8,72], index: 1, kind: input, shape index: {}]
  %s2 = inlined_call_operand.vmem [shape: f32[8,1], index: 2, kind: input, shape index: {}]
  %s3 = inlined_call_operand.vmem [shape: f32[288,342], index: 3, kind: input, shape index: {}]
  %s4 = inlined_call_operand.vmem [shape: bf16[16,72], index: 4, kind: input, shape index: {}]
  %s5 = inlined_call_operand.vmem [shape: f32[16,1], index: 5, kind: input, shape index: {}]
  %s6 = inlined_call_operand.vmem [shape: f32[288,110], index: 6, kind: input, shape index: {}]
  %s7 = inlined_call_operand.vmem [shape: bf16[16,144], index: 7, kind: input, shape index: {}]
  %s8 = inlined_call_operand.vmem [shape: f32[16,1], index: 8, kind: input, shape index: {}]
  %s9 = inlined_call_operand.vmem [shape: f32[80,110], index: 9, kind: input, shape index: {}]
  %s10 = inlined_call_operand.vmem [shape: bf16[32,144], index: 10, kind: input, shape index: {}]
  %s11 = inlined_call_operand.vmem [shape: f32[32,1], index: 11, kind: input, shape index: {}]
  %s12 = inlined_call_operand.vmem [shape: f32[80,42], index: 12, kind: input, shape index: {}]
  %s13 = inlined_call_operand.vmem [shape: bf16[32,288], index: 13, kind: input, shape index: {}]
  %s14 = inlined_call_operand.vmem [shape: f32[32,1], index: 14, kind: input, shape index: {}]
  %s15 = inlined_call_operand.vmem [shape: f32[24,42], index: 15, kind: input, shape index: {}]
  %s16 = inlined_call_operand.vmem [shape: bf16[64,288], index: 16, kind: input, shape index: {}]
  %s17 = inlined_call_operand.vmem [shape: f32[64,1], index: 17, kind: input, shape index: {}]
  %s18 = inlined_call_operand.vmem [shape: f32[24,20], index: 18, kind: input, shape index: {}]
  %s19 = inlined_call_operand.vmem [shape: bf16[64,576], index: 19, kind: input, shape index: {}]
  %s20 = inlined_call_operand.vmem [shape: f32[64,1], index: 20, kind: input, shape index: {}]
  %s21 = inlined_call_operand.vmem [shape: f32[1,8], index: 21, kind: input, shape index: {}]
  %s22 = inlined_call_operand.vmem [shape: f32[64,1], index: 22, kind: input, shape index: {}]
  %s23 = inlined_call_operand.<no memory space> [shape: f32[1,1], index: 23, kind: input, shape index: {}]
  %s24 = inlined_call_operand.vmem [shape: f32[2,1,1], index: 24, kind: output, shape index: {}]
  %s25 = sld [smem:[#allocation0]]
  $region129: #{critic_forward.1} parent=0
    _
  %s27 = ssub.s32 1, %s25
  %s28 = scalar_select 0, %s27, %s25
  %v29 = vstv %s23
  %30 = vst [vmem:[#allocation2] sm:$0x1] %v29
  loop: start=0, step=1, limit=4
  $region2: #{critic_forward.1} parent=0 // loop_pre_header
    _
  $region3: #{critic_forward.1} parent=0 // loop_header
    %s32 = sphi 0, %s36
    %p33 = scmp.ge.s32.totalorder %s32, 4
    %s42 = sphi 0, %s44
    %s45 = sphi 0, %s42
    %s46 = sphi 0, %s45
    %s62 = sphi 0, %s46
    %s66 = sphi 0, %s66
    %s68 = sphi 0, %s66
    %s69 = sphi 0, %s68
    %s83 = sphi 0, %s69
    %s87 = sphi 0, %s87
    %s89 = sphi 0, %s87
    %s90 = sphi 0, %s89
    %s104 = sphi 0, %s90
    %s108 = sphi 0, %s108
    %s110 = sphi 0, %s108
    %s111 = sphi 0, %s110
    %s125 = sphi 0, %s111
    %s129 = sphi 0, %s129
    %s131 = sphi 0, %s129
    %s132 = sphi 0, %s131
    %s146 = sphi 0, %s132
    %s150 = sphi 0, %s150
    %s152 = sphi 0, %s150
    %s153 = sphi 0, %s152
    %s167 = sphi 0, %s153
    %s171 = sphi 0, %s171
    %s173 = sphi 0, %s171
    %s174 = sphi 0, %s173
    %s188 = sphi 0, %s174
    %s192 = sphi 0, %s192
    %s194 = sphi 0, %s192
    %s195 = sphi 0, %s194
    %s209 = sphi 0, %s195
    %s213 = sphi 0, %s213
    %s215 = sphi 0, %s213
    %s216 = sphi 0, %s215
    %s230 = sphi 0, %s216
    %s234 = sphi 0, %s234
    %s236 = sphi 0, %s234
    %s237 = sphi 0, %s236
    %s251 = sphi 0, %s237
    %s255 = sphi 0, %s255
    %s257 = sphi 0, %s255
    %s258 = sphi 0, %s257
    %s272 = sphi 0, %s258
    %s276 = sphi 0, %s276
    %s278 = sphi 0, %s276
    %s279 = sphi 0, %s278
    %s293 = sphi 0, %s279
    %s297 = sphi 0, %s297
    %s299 = sphi 0, %s297
    %s300 = sphi 0, %s299
    %s314 = sphi 0, %s300
    %s318 = sphi 0, %s318
    %s320 = sphi 0, %s318
    %s321 = sphi 0, %s320
    %s335 = sphi 0, %s321
    %s339 = sphi 0, %s339
    %s341 = sphi 0, %s339
    %s342 = sphi 0, %s341
    %s356 = sphi 0, %s342
    %s360 = sphi 0, %s360
    %s362 = sphi 0, %s360
    %s363 = sphi 0, %s362
    %s377 = sphi 0, %s363
    %s381 = sphi 0, %s381
    %s383 = sphi 0, %s381
    %s384 = sphi 0, %s383
    %s398 = sphi 0, %s384
    %s402 = sphi 0, %s402
    %s404 = sphi 0, %s402
    %s405 = sphi 0, %s404
    %s419 = sphi 0, %s405
    %s423 = sphi 0, %s423
    %s425 = sphi 0, %s423
    %s426 = sphi 0, %s425
    %s440 = sphi 0, %s426
    %s444 = sphi 0, %s444
    %s446 = sphi 0, %s444
    %s447 = sphi 0, %s446
    %s461 = sphi 0, %s447
    %s465 = sphi 0, %s465
    %s467 = sphi 0, %s465
    %s468 = sphi 0, %s467
    %s482 = sphi 0, %s468
    %s486 = sphi 0, %s486
    %s488 = sphi 0, %s486
    %s489 = sphi 0, %s488
    %s503 = sphi 0, %s489
    %s507 = sphi 0, %s507
    %s509 = sphi 0, %s507
    %s510 = sphi 0, %s509
    %s524 = sphi 0, %s510
    %s528 = sphi 0, %s528
    %s530 = sphi 0, %s528
    %s531 = sphi 0, %s530
    %s545 = sphi 0, %s531
    %s551 = sphi 0, %s553
    %s554 = sphi 0, %s551
    %s555 = sphi 0, %s554
    %s571 = sphi 0, %s555
  $region4: #{critic_forward.1} parent=0 // loop_header_branch
    %35 = sbr.rel (%p33) target = $region8
  $region5: #{critic_forward.1} parent=0 // loop_body
    %s37 = ssub.s32 %s32, 1
    %s38 = ssub.s32 %s32, 2
    %s39 = sadd.s32 %s32, 1
    %s40 = ssub.s32 %s32, %s39
    %p41 = scmp.eq.s32.totalorder %s40, 0
    %s43 = sadd.s32 %s42, 1
    %s44 = scalar_select %p41, %s42, %s43
    %p47 = pneg %p41
    %p48 = scmp.eq.s32.totalorder %s32, 1
    %p49 = por %p47, %p48
    %p50 = scmp.ne.s32.totalorder %s42, %s45
    %p51 = scmp.eq.s32.totalorder %s32, 0
    %p52 = por %p50, %p51
    %p53 = scmp.ne.s32.totalorder %s42, %s45
    %p54 = scmp.eq.s32.totalorder %s37, 1
    %p55 = por %p53, %p54
    %p56 = scmp.ne.s32.totalorder %s45, %s46
    %p57 = scmp.eq.s32.totalorder %s37, 0
    %p58 = por %p56, %p57
    %p59 = scmp.ne.s32.totalorder %s45, %s46
    %p60 = scmp.eq.s32.totalorder %s38, 1
    %p61 = por %p59, %p60
    %p63 = scmp.ne.s32.totalorder %s46, %s62
    %p64 = scmp.eq.s32.totalorder %s38, 0
    %p65 = por %p63, %p64
    %s67 = sadd.s32 %s66, 1
    %p70 = scmp.eq.s32.totalorder %s32, 1
    %p71 = scmp.ne.s32.totalorder %s66, %s68
    %p72 = scmp.eq.s32.totalorder %s32, 0
    %p73 = por %p71, %p72
    %p74 = scmp.ne.s32.totalorder %s66, %s68
    %p75 = scmp.eq.s32.totalorder %s37, 1
    %p76 = por %p74, %p75
    %p77 = scmp.ne.s32.totalorder %s68, %s69
    %p78 = scmp.eq.s32.totalorder %s37, 0
    %p79 = por %p77, %p78
    %p80 = scmp.ne.s32.totalorder %s68, %s69
    %p81 = scmp.eq.s32.totalorder %s38, 1
    %p82 = por %p80, %p81
    %p84 = scmp.ne.s32.totalorder %s69, %s83
    %p85 = scmp.eq.s32.totalorder %s38, 0
    %p86 = por %p84, %p85
    %s88 = sadd.s32 %s87, 1
    %p91 = scmp.eq.s32.totalorder %s32, 1
    %p92 = scmp.ne.s32.totalorder %s87, %s89
    %p93 = scmp.eq.s32.totalorder %s32, 0
    %p94 = por %p92, %p93
    %p95 = scmp.ne.s32.totalorder %s87, %s89
    %p96 = scmp.eq.s32.totalorder %s37, 1
    %p97 = por %p95, %p96
    %p98 = scmp.ne.s32.totalorder %s89, %s90
    %p99 = scmp.eq.s32.totalorder %s37, 0
    %p100 = por %p98, %p99
    %p101 = scmp.ne.s32.totalorder %s89, %s90
    %p102 = scmp.eq.s32.totalorder %s38, 1
    %p103 = por %p101, %p102
    %p105 = scmp.ne.s32.totalorder %s90, %s104
    %p106 = scmp.eq.s32.totalorder %s38, 0
    %p107 = por %p105, %p106
    %s109 = sadd.s32 %s108, 1
    %p112 = scmp.eq.s32.totalorder %s32, 1
    %p113 = scmp.ne.s32.totalorder %s108, %s110
    %p114 = scmp.eq.s32.totalorder %s32, 0
    %p115 = por %p113, %p114
    %p116 = scmp.ne.s32.totalorder %s108, %s110
    %p117 = scmp.eq.s32.totalorder %s37, 1
    %p118 = por %p116, %p117
    %p119 = scmp.ne.s32.totalorder %s110, %s111
    %p120 = scmp.eq.s32.totalorder %s37, 0
    %p121 = por %p119, %p120
    %p122 = scmp.ne.s32.totalorder %s110, %s111
    %p123 = scmp.eq.s32.totalorder %s38, 1
    %p124 = por %p122, %p123
    %p126 = scmp.ne.s32.totalorder %s111, %s125
    %p127 = scmp.eq.s32.totalorder %s38, 0
    %p128 = por %p126, %p127
    %s130 = sadd.s32 %s129, 1
    %p133 = scmp.eq.s32.totalorder %s32, 1
    %p134 = scmp.ne.s32.totalorder %s129, %s131
    %p135 = scmp.eq.s32.totalorder %s32, 0
    %p136 = por %p134, %p135
    %p137 = scmp.ne.s32.totalorder %s129, %s131
    %p138 = scmp.eq.s32.totalorder %s37, 1
    %p139 = por %p137, %p138
    %p140 = scmp.ne.s32.totalorder %s131, %s132
    %p141 = scmp.eq.s32.totalorder %s37, 0
    %p142 = por %p140, %p141
    %p143 = scmp.ne.s32.totalorder %s131, %s132
    %p144 = scmp.eq.s32.totalorder %s38, 1
    %p145 = por %p143, %p144
    %p147 = scmp.ne.s32.totalorder %s132, %s146
    %p148 = scmp.eq.s32.totalorder %s38, 0
    %p149 = por %p147, %p148
    %s151 = sadd.s32 %s150, 1
    %p154 = scmp.eq.s32.totalorder %s32, 1
    %p155 = scmp.ne.s32.totalorder %s150, %s152
    %p156 = scmp.eq.s32.totalorder %s32, 0
    %p157 = por %p155, %p156
    %p158 = scmp.ne.s32.totalorder %s150, %s152
    %p159 = scmp.eq.s32.totalorder %s37, 1
    %p160 = por %p158, %p159
    %p161 = scmp.ne.s32.totalorder %s152, %s153
    %p162 = scmp.eq.s32.totalorder %s37, 0
    %p163 = por %p161, %p162
    %p164 = scmp.ne.s32.totalorder %s152, %s153
    %p165 = scmp.eq.s32.totalorder %s38, 1
    %p166 = por %p164, %p165
    %p168 = scmp.ne.s32.totalorder %s153, %s167
    %p169 = scmp.eq.s32.totalorder %s38, 0
    %p170 = por %p168, %p169
    %s172 = sadd.s32 %s171, 1
    %p175 = scmp.eq.s32.totalorder %s32, 1
    %p176 = scmp.ne.s32.totalorder %s171, %s173
    %p177 = scmp.eq.s32.totalorder %s32, 0
    %p178 = por %p176, %p177
    %p179 = scmp.ne.s32.totalorder %s171, %s173
    %p180 = scmp.eq.s32.totalorder %s37, 1
    %p181 = por %p179, %p180
    %p182 = scmp.ne.s32.totalorder %s173, %s174
    %p183 = scmp.eq.s32.totalorder %s37, 0
    %p184 = por %p182, %p183
    %p185 = scmp.ne.s32.totalorder %s173, %s174
    %p186 = scmp.eq.s32.totalorder %s38, 1
    %p187 = por %p185, %p186
    %p189 = scmp.ne.s32.totalorder %s174, %s188
    %p190 = scmp.eq.s32.totalorder %s38, 0
    %p191 = por %p189, %p190
    %s193 = sadd.s32 %s192, 1
    %p196 = scmp.eq.s32.totalorder %s32, 1
    %p197 = scmp.ne.s32.totalorder %s192, %s194
    %p198 = scmp.eq.s32.totalorder %s32, 0
    %p199 = por %p197, %p198
    %p200 = scmp.ne.s32.totalorder %s192, %s194
    %p201 = scmp.eq.s32.totalorder %s37, 1
    %p202 = por %p200, %p201
    %p203 = scmp.ne.s32.totalorder %s194, %s195
    %p204 = scmp.eq.s32.totalorder %s37, 0
    %p205 = por %p203, %p204
    %p206 = scmp.ne.s32.totalorder %s194, %s195
    %p207 = scmp.eq.s32.totalorder %s38, 1
    %p208 = por %p206, %p207
    %p210 = scmp.ne.s32.totalorder %s195, %s209
    %p211 = scmp.eq.s32.totalorder %s38, 0
    %p212 = por %p210, %p211
    %s214 = sadd.s32 %s213, 1
    %p217 = scmp.eq.s32.totalorder %s32, 1
    %p218 = scmp.ne.s32.totalorder %s213, %s215
    %p219 = scmp.eq.s32.totalorder %s32, 0
    %p220 = por %p218, %p219
    %p221 = scmp.ne.s32.totalorder %s213, %s215
    %p222 = scmp.eq.s32.totalorder %s37, 1
    %p223 = por %p221, %p222
    %p224 = scmp.ne.s32.totalorder %s215, %s216
    %p225 = scmp.eq.s32.totalorder %s37, 0
    %p226 = por %p224, %p225
    %p227 = scmp.ne.s32.totalorder %s215, %s216
    %p228 = scmp.eq.s32.totalorder %s38, 1
    %p229 = por %p227, %p228
    %p231 = scmp.ne.s32.totalorder %s216, %s230
    %p232 = scmp.eq.s32.totalorder %s38, 0
    %p233 = por %p231, %p232
    %s235 = sadd.s32 %s234, 1
    %p238 = scmp.eq.s32.totalorder %s32, 1
    %p239 = scmp.ne.s32.totalorder %s234, %s236
    %p240 = scmp.eq.s32.totalorder %s32, 0
    %p241 = por %p239, %p240
    %p242 = scmp.ne.s32.totalorder %s234, %s236
    %p243 = scmp.eq.s32.totalorder %s37, 1
    %p244 = por %p242, %p243
    %p245 = scmp.ne.s32.totalorder %s236, %s237
    %p246 = scmp.eq.s32.totalorder %s37, 0
    %p247 = por %p245, %p246
    %p248 = scmp.ne.s32.totalorder %s236, %s237
    %p249 = scmp.eq.s32.totalorder %s38, 1
    %p250 = por %p248, %p249
    %p252 = scmp.ne.s32.totalorder %s237, %s251
    %p253 = scmp.eq.s32.totalorder %s38, 0
    %p254 = por %p252, %p253
    %s256 = sadd.s32 %s255, 1
    %p259 = scmp.eq.s32.totalorder %s32, 1
    %p260 = scmp.ne.s32.totalorder %s255, %s257
    %p261 = scmp.eq.s32.totalorder %s32, 0
    %p262 = por %p260, %p261
    %p263 = scmp.ne.s32.totalorder %s255, %s257
    %p264 = scmp.eq.s32.totalorder %s37, 1
    %p265 = por %p263, %p264
    %p266 = scmp.ne.s32.totalorder %s257, %s258
    %p267 = scmp.eq.s32.totalorder %s37, 0
    %p268 = por %p266, %p267
    %p269 = scmp.ne.s32.totalorder %s257, %s258
    %p270 = scmp.eq.s32.totalorder %s38, 1
    %p271 = por %p269, %p270
    %p273 = scmp.ne.s32.totalorder %s258, %s272
    %p274 = scmp.eq.s32.totalorder %s38, 0
    %p275 = por %p273, %p274
    %s277 = sadd.s32 %s276, 1
    %p280 = scmp.eq.s32.totalorder %s32, 1
    %p281 = scmp.ne.s32.totalorder %s276, %s278
    %p282 = scmp.eq.s32.totalorder %s32, 0
    %p283 = por %p281, %p282
    %p284 = scmp.ne.s32.totalorder %s276, %s278
    %p285 = scmp.eq.s32.totalorder %s37, 1
    %p286 = por %p284, %p285
    %p287 = scmp.ne.s32.totalorder %s278, %s279
    %p288 = scmp.eq.s32.totalorder %s37, 0
    %p289 = por %p287, %p288
    %p290 = scmp.ne.s32.totalorder %s278, %s279
    %p291 = scmp.eq.s32.totalorder %s38, 1
    %p292 = por %p290, %p291
    %p294 = scmp.ne.s32.totalorder %s279, %s293
    %p295 = scmp.eq.s32.totalorder %s38, 0
    %p296 = por %p294, %p295
    %s298 = sadd.s32 %s297, 1
    %p301 = scmp.eq.s32.totalorder %s32, 1
    %p302 = scmp.ne.s32.totalorder %s297, %s299
    %p303 = scmp.eq.s32.totalorder %s32, 0
    %p304 = por %p302, %p303
    %p305 = scmp.ne.s32.totalorder %s297, %s299
    %p306 = scmp.eq.s32.totalorder %s37, 1
    %p307 = por %p305, %p306
    %p308 = scmp.ne.s32.totalorder %s299, %s300
    %p309 = scmp.eq.s32.totalorder %s37, 0
    %p310 = por %p308, %p309
    %p311 = scmp.ne.s32.totalorder %s299, %s300
    %p312 = scmp.eq.s32.totalorder %s38, 1
    %p313 = por %p311, %p312
    %p315 = scmp.ne.s32.totalorder %s300, %s314
    %p316 = scmp.eq.s32.totalorder %s38, 0
    %p317 = por %p315, %p316
    %s319 = sadd.s32 %s318, 1
    %p322 = scmp.eq.s32.totalorder %s32, 1
    %p323 = scmp.ne.s32.totalorder %s318, %s320
    %p324 = scmp.eq.s32.totalorder %s32, 0
    %p325 = por %p323, %p324
    %p326 = scmp.ne.s32.totalorder %s318, %s320
    %p327 = scmp.eq.s32.totalorder %s37, 1
    %p328 = por %p326, %p327
    %p329 = scmp.ne.s32.totalorder %s320, %s321
    %p330 = scmp.eq.s32.totalorder %s37, 0
    %p331 = por %p329, %p330
    %p332 = scmp.ne.s32.totalorder %s320, %s321
    %p333 = scmp.eq.s32.totalorder %s38, 1
    %p334 = por %p332, %p333
    %p336 = scmp.ne.s32.totalorder %s321, %s335
    %p337 = scmp.eq.s32.totalorder %s38, 0
    %p338 = por %p336, %p337
    %s340 = sadd.s32 %s339, 1
    %p343 = scmp.eq.s32.totalorder %s32, 1
    %p344 = scmp.ne.s32.totalorder %s339, %s341
    %p345 = scmp.eq.s32.totalorder %s32, 0
    %p346 = por %p344, %p345
    %p347 = scmp.ne.s32.totalorder %s339, %s341
    %p348 = scmp.eq.s32.totalorder %s37, 1
    %p349 = por %p347, %p348
    %p350 = scmp.ne.s32.totalorder %s341, %s342
    %p351 = scmp.eq.s32.totalorder %s37, 0
    %p352 = por %p350, %p351
    %p353 = scmp.ne.s32.totalorder %s341, %s342
    %p354 = scmp.eq.s32.totalorder %s38, 1
    %p355 = por %p353, %p354
    %p357 = scmp.ne.s32.totalorder %s342, %s356
    %p358 = scmp.eq.s32.totalorder %s38, 0
    %p359 = por %p357, %p358
    %s361 = sadd.s32 %s360, 1
    %p364 = scmp.eq.s32.totalorder %s32, 1
    %p365 = scmp.ne.s32.totalorder %s360, %s362
    %p366 = scmp.eq.s32.totalorder %s32, 0
    %p367 = por %p365, %p366
    %p368 = scmp.ne.s32.totalorder %s360, %s362
    %p369 = scmp.eq.s32.totalorder %s37, 1
    %p370 = por %p368, %p369
    %p371 = scmp.ne.s32.totalorder %s362, %s363
    %p372 = scmp.eq.s32.totalorder %s37, 0
    %p373 = por %p371, %p372
    %p374 = scmp.ne.s32.totalorder %s362, %s363
    %p375 = scmp.eq.s32.totalorder %s38, 1
    %p376 = por %p374, %p375
    %p378 = scmp.ne.s32.totalorder %s363, %s377
    %p379 = scmp.eq.s32.totalorder %s38, 0
    %p380 = por %p378, %p379
    %s382 = sadd.s32 %s381, 1
    %p385 = scmp.eq.s32.totalorder %s32, 1
    %p386 = scmp.ne.s32.totalorder %s381, %s383
    %p387 = scmp.eq.s32.totalorder %s32, 0
    %p388 = por %p386, %p387
    %p389 = scmp.ne.s32.totalorder %s381, %s383
    %p390 = scmp.eq.s32.totalorder %s37, 1
    %p391 = por %p389, %p390
    %p392 = scmp.ne.s32.totalorder %s383, %s384
    %p393 = scmp.eq.s32.totalorder %s37, 0
    %p394 = por %p392, %p393
    %p395 = scmp.ne.s32.totalorder %s383, %s384
    %p396 = scmp.eq.s32.totalorder %s38, 1
    %p397 = por %p395, %p396
    %p399 = scmp.ne.s32.totalorder %s384, %s398
    %p400 = scmp.eq.s32.totalorder %s38, 0
    %p401 = por %p399, %p400
    %s403 = sadd.s32 %s402, 1
    %p406 = scmp.eq.s32.totalorder %s32, 1
    %p407 = scmp.ne.s32.totalorder %s402, %s404
    %p408 = scmp.eq.s32.totalorder %s32, 0
    %p409 = por %p407, %p408
    %p410 = scmp.ne.s32.totalorder %s402, %s404
    %p411 = scmp.eq.s32.totalorder %s37, 1
    %p412 = por %p410, %p411
    %p413 = scmp.ne.s32.totalorder %s404, %s405
    %p414 = scmp.eq.s32.totalorder %s37, 0
    %p415 = por %p413, %p414
    %p416 = scmp.ne.s32.totalorder %s404, %s405
    %p417 = scmp.eq.s32.totalorder %s38, 1
    %p418 = por %p416, %p417
    %p420 = scmp.ne.s32.totalorder %s405, %s419
    %p421 = scmp.eq.s32.totalorder %s38, 0
    %p422 = por %p420, %p421
    %s424 = sadd.s32 %s423, 1
    %p427 = scmp.eq.s32.totalorder %s32, 1
    %p428 = scmp.ne.s32.totalorder %s423, %s425
    %p429 = scmp.eq.s32.totalorder %s32, 0
    %p430 = por %p428, %p429
    %p431 = scmp.ne.s32.totalorder %s423, %s425
    %p432 = scmp.eq.s32.totalorder %s37, 1
    %p433 = por %p431, %p432
    %p434 = scmp.ne.s32.totalorder %s425, %s426
    %p435 = scmp.eq.s32.totalorder %s37, 0
    %p436 = por %p434, %p435
    %p437 = scmp.ne.s32.totalorder %s425, %s426
    %p438 = scmp.eq.s32.totalorder %s38, 1
    %p439 = por %p437, %p438
    %p441 = scmp.ne.s32.totalorder %s426, %s440
    %p442 = scmp.eq.s32.totalorder %s38, 0
    %p443 = por %p441, %p442
    %s445 = sadd.s32 %s444, 1
    %p448 = scmp.eq.s32.totalorder %s32, 1
    %p449 = scmp.ne.s32.totalorder %s444, %s446
    %p450 = scmp.eq.s32.totalorder %s32, 0
    %p451 = por %p449, %p450
    %p452 = scmp.ne.s32.totalorder %s444, %s446
    %p453 = scmp.eq.s32.totalorder %s37, 1
    %p454 = por %p452, %p453
    %p455 = scmp.ne.s32.totalorder %s446, %s447
    %p456 = scmp.eq.s32.totalorder %s37, 0
    %p457 = por %p455, %p456
    %p458 = scmp.ne.s32.totalorder %s446, %s447
    %p459 = scmp.eq.s32.totalorder %s38, 1
    %p460 = por %p458, %p459
    %p462 = scmp.ne.s32.totalorder %s447, %s461
    %p463 = scmp.eq.s32.totalorder %s38, 0
    %p464 = por %p462, %p463
    %s466 = sadd.s32 %s465, 1
    %p469 = scmp.eq.s32.totalorder %s32, 1
    %p470 = scmp.ne.s32.totalorder %s465, %s467
    %p471 = scmp.eq.s32.totalorder %s32, 0
    %p472 = por %p470, %p471
    %p473 = scmp.ne.s32.totalorder %s465, %s467
    %p474 = scmp.eq.s32.totalorder %s37, 1
    %p475 = por %p473, %p474
    %p476 = scmp.ne.s32.totalorder %s467, %s468
    %p477 = scmp.eq.s32.totalorder %s37, 0
    %p478 = por %p476, %p477
    %p479 = scmp.ne.s32.totalorder %s467, %s468
    %p480 = scmp.eq.s32.totalorder %s38, 1
    %p481 = por %p479, %p480
    %p483 = scmp.ne.s32.totalorder %s468, %s482
    %p484 = scmp.eq.s32.totalorder %s38, 0
    %p485 = por %p483, %p484
    %s487 = sadd.s32 %s486, 1
    %p490 = scmp.eq.s32.totalorder %s32, 1
    %p491 = scmp.ne.s32.totalorder %s486, %s488
    %p492 = scmp.eq.s32.totalorder %s32, 0
    %p493 = por %p491, %p492
    %p494 = scmp.ne.s32.totalorder %s486, %s488
    %p495 = scmp.eq.s32.totalorder %s37, 1
    %p496 = por %p494, %p495
    %p497 = scmp.ne.s32.totalorder %s488, %s489
    %p498 = scmp.eq.s32.totalorder %s37, 0
    %p499 = por %p497, %p498
    %p500 = scmp.ne.s32.totalorder %s488, %s489
    %p501 = scmp.eq.s32.totalorder %s38, 1
    %p502 = por %p500, %p501
    %p504 = scmp.ne.s32.totalorder %s489, %s503
    %p505 = scmp.eq.s32.totalorder %s38, 0
    %p506 = por %p504, %p505
    %s508 = sadd.s32 %s507, 1
    %p511 = scmp.eq.s32.totalorder %s32, 1
    %p512 = scmp.ne.s32.totalorder %s507, %s509
    %p513 = scmp.eq.s32.totalorder %s32, 0
    %p514 = por %p512, %p513
    %p515 = scmp.ne.s32.totalorder %s507, %s509
    %p516 = scmp.eq.s32.totalorder %s37, 1
    %p517 = por %p515, %p516
    %p518 = scmp.ne.s32.totalorder %s509, %s510
    %p519 = scmp.eq.s32.totalorder %s37, 0
    %p520 = por %p518, %p519
    %p521 = scmp.ne.s32.totalorder %s509, %s510
    %p522 = scmp.eq.s32.totalorder %s38, 1
    %p523 = por %p521, %p522
    %p525 = scmp.ne.s32.totalorder %s510, %s524
    %p526 = scmp.eq.s32.totalorder %s38, 0
    %p527 = por %p525, %p526
    %s529 = sadd.s32 %s528, 1
    %p532 = scmp.eq.s32.totalorder %s32, 1
    %p533 = scmp.ne.s32.totalorder %s528, %s530
    %p534 = scmp.eq.s32.totalorder %s32, 0
    %p535 = por %p533, %p534
    %p536 = scmp.ne.s32.totalorder %s528, %s530
    %p537 = scmp.eq.s32.totalorder %s37, 1
    %p538 = por %p536, %p537
    %p539 = scmp.ne.s32.totalorder %s530, %s531
    %p540 = scmp.eq.s32.totalorder %s37, 0
    %p541 = por %p539, %p540
    %p542 = scmp.ne.s32.totalorder %s530, %s531
    %p543 = scmp.eq.s32.totalorder %s38, 1
    %p544 = por %p542, %p543
    %p546 = scmp.ne.s32.totalorder %s531, %s545
    %p547 = scmp.eq.s32.totalorder %s38, 0
    %p548 = por %p546, %p547
    %s549 = ssub.s32 %s32, %s39
    %p550 = scmp.eq.s32.totalorder %s549, 0
    %s552 = sadd.s32 %s551, 1
    %s553 = scalar_select %p550, %s551, %s552
    %p556 = pneg %p550
    %p557 = scmp.eq.s32.totalorder %s32, 1
    %p558 = por %p556, %p557
    %p559 = scmp.ne.s32.totalorder %s551, %s554
    %p560 = scmp.eq.s32.totalorder %s32, 0
    %p561 = por %p559, %p560
    %p562 = scmp.ne.s32.totalorder %s551, %s554
    %p563 = scmp.eq.s32.totalorder %s37, 1
    %p564 = por %p562, %p563
    %p565 = scmp.ne.s32.totalorder %s554, %s555
    %p566 = scmp.eq.s32.totalorder %s37, 0
    %p567 = por %p565, %p566
    %p568 = scmp.ne.s32.totalorder %s554, %s555
    %p569 = scmp.eq.s32.totalorder %s38, 1
    %p570 = por %p568, %p569
    %p572 = scmp.ne.s32.totalorder %s555, %s571
    %p573 = scmp.eq.s32.totalorder %s38, 0
    %p574 = por %p572, %p573
    %p575 = scmp.le.s32.totalorder 1, %s32
    %p576 = scmp.lt.s32.totalorder %s32, 3
    %p577 = pnand %p575, %p576
    %p578 = pneg %p577
    // Predicated region
    $region9: #{critic_forward.1} parent=5 // pred_check
      _
    $region10: #{critic_forward.1} parent=5 // pred_check_branch
      %580 = sbr.rel (%p577) target = $region12
    $region11: #{critic_forward.1} parent=5 // pred_region
      %s581 = ssub.s32 %s32, 1
      // Predicated region
      $region13: #{critic_forward.1} parent=11 // pred_check
        %p582 = pneg %p79
      $region14: #{critic_forward.1} parent=11 // pred_check_branch
        %584 = sbr.rel (%p582) target = $region16
      $region15: #{critic_forward.1} parent=11 // pred_region
        _
      $region16: #{critic_forward.1} parent=11 // pred_fallthru
        _
      // Predicated region
      $region17: #{critic_forward.1} parent=11 // pred_check
        %p585 = pneg %p100
      $region18: #{critic_forward.1} parent=11 // pred_check_branch
        %587 = sbr.rel (%p585) target = $region20
      $region19: #{critic_forward.1} parent=11 // pred_region
        _
      $region20: #{critic_forward.1} parent=11 // pred_fallthru
        _
      // Predicated region
      $region21: #{critic_forward.1} parent=11 // pred_check
        %p588 = pneg %p121
      $region22: #{critic_forward.1} parent=11 // pred_check_branch
        %590 = sbr.rel (%p588) target = $region24
      $region23: #{critic_forward.1} parent=11 // pred_region
        _
      $region24: #{critic_forward.1} parent=11 // pred_fallthru
        _
      // Predicated region
      $region25: #{critic_forward.1} parent=11 // pred_check
        %p591 = pneg %p142
      $region26: #{critic_forward.1} parent=11 // pred_check_branch
        %593 = sbr.rel (%p591) target = $region28
      $region27: #{critic_forward.1} parent=11 // pred_region
        _
      $region28: #{critic_forward.1} parent=11 // pred_fallthru
        _
      // Predicated region
      $region29: #{critic_forward.1} parent=11 // pred_check
        %p594 = pneg %p163
      $region30: #{critic_forward.1} parent=11 // pred_check_branch
        %596 = sbr.rel (%p594) target = $region32
      $region31: #{critic_forward.1} parent=11 // pred_region
        _
      $region32: #{critic_forward.1} parent=11 // pred_fallthru
        _
      // Predicated region
      $region33: #{critic_forward.1} parent=11 // pred_check
        %p597 = pneg %p184
      $region34: #{critic_forward.1} parent=11 // pred_check_branch
        %599 = sbr.rel (%p597) target = $region36
      $region35: #{critic_forward.1} parent=11 // pred_region
        _
      $region36: #{critic_forward.1} parent=11 // pred_fallthru
        _
      // Predicated region
      $region37: #{critic_forward.1} parent=11 // pred_check
        %p600 = pneg %p205
      $region38: #{critic_forward.1} parent=11 // pred_check_branch
        %602 = sbr.rel (%p600) target = $region40
      $region39: #{critic_forward.1} parent=11 // pred_region
        _
      $region40: #{critic_forward.1} parent=11 // pred_fallthru
        _
      // Predicated region
      $region41: #{critic_forward.1} parent=11 // pred_check
        %p603 = pneg %p226
      $region42: #{critic_forward.1} parent=11 // pred_check_branch
        %605 = sbr.rel (%p603) target = $region44
      $region43: #{critic_forward.1} parent=11 // pred_region
        _
      $region44: #{critic_forward.1} parent=11 // pred_fallthru
        _
      // Predicated region
      $region45: #{critic_forward.1} parent=11 // pred_check
        %p606 = pneg %p247
      $region46: #{critic_forward.1} parent=11 // pred_check_branch
        %608 = sbr.rel (%p606) target = $region48
      $region47: #{critic_forward.1} parent=11 // pred_region
        _
      $region48: #{critic_forward.1} parent=11 // pred_fallthru
        _
      // Predicated region
      $region49: #{critic_forward.1} parent=11 // pred_check
        %p609 = pneg %p268
      $region50: #{critic_forward.1} parent=11 // pred_check_branch
        %611 = sbr.rel (%p609) target = $region52
      $region51: #{critic_forward.1} parent=11 // pred_region
        _
      $region52: #{critic_forward.1} parent=11 // pred_fallthru
        _
      // Predicated region
      $region53: #{critic_forward.1} parent=11 // pred_check
        %p612 = pneg %p289
      $region54: #{critic_forward.1} parent=11 // pred_check_branch
        %614 = sbr.rel (%p612) target = $region56
      $region55: #{critic_forward.1} parent=11 // pred_region
        _
      $region56: #{critic_forward.1} parent=11 // pred_fallthru
        _
      // Predicated region
      $region57: #{critic_forward.1} parent=11 // pred_check
        %p615 = pneg %p310
      $region58: #{critic_forward.1} parent=11 // pred_check_branch
        %617 = sbr.rel (%p615) target = $region60
      $region59: #{critic_forward.1} parent=11 // pred_region
        _
      $region60: #{critic_forward.1} parent=11 // pred_fallthru
        _
      // Predicated region
      $region61: #{critic_forward.1} parent=11 // pred_check
        %p618 = pneg %p331
      $region62: #{critic_forward.1} parent=11 // pred_check_branch
        %620 = sbr.rel (%p618) target = $region64
      $region63: #{critic_forward.1} parent=11 // pred_region
        _
      $region64: #{critic_forward.1} parent=11 // pred_fallthru
        _
      // Predicated region
      $region65: #{critic_forward.1} parent=11 // pred_check
        %p621 = pneg %p352
      $region66: #{critic_forward.1} parent=11 // pred_check_branch
        %623 = sbr.rel (%p621) target = $region68
      $region67: #{critic_forward.1} parent=11 // pred_region
        _
      $region68: #{critic_forward.1} parent=11 // pred_fallthru
        _
      // Predicated region
      $region69: #{critic_forward.1} parent=11 // pred_check
        %p624 = pneg %p373
      $region70: #{critic_forward.1} parent=11 // pred_check_branch
        %626 = sbr.rel (%p624) target = $region72
      $region71: #{critic_forward.1} parent=11 // pred_region
        _
      $region72: #{critic_forward.1} parent=11 // pred_fallthru
        _
      // Predicated region
      $region73: #{critic_forward.1} parent=11 // pred_check
        %p627 = pneg %p394
      $region74: #{critic_forward.1} parent=11 // pred_check_branch
        %629 = sbr.rel (%p627) target = $region76
      $region75: #{critic_forward.1} parent=11 // pred_region
        _
      $region76: #{critic_forward.1} parent=11 // pred_fallthru
        _
      // Predicated region
      $region77: #{critic_forward.1} parent=11 // pred_check
        %p630 = pneg %p415
      $region78: #{critic_forward.1} parent=11 // pred_check_branch
        %632 = sbr.rel (%p630) target = $region80
      $region79: #{critic_forward.1} parent=11 // pred_region
        _
      $region80: #{critic_forward.1} parent=11 // pred_fallthru
        _
      // Predicated region
      $region81: #{critic_forward.1} parent=11 // pred_check
        %p633 = pneg %p436
      $region82: #{critic_forward.1} parent=11 // pred_check_branch
        %635 = sbr.rel (%p633) target = $region84
      $region83: #{critic_forward.1} parent=11 // pred_region
        _
      $region84: #{critic_forward.1} parent=11 // pred_fallthru
        _
      // Predicated region
      $region85: #{critic_forward.1} parent=11 // pred_check
        %p636 = pneg %p457
      $region86: #{critic_forward.1} parent=11 // pred_check_branch
        %638 = sbr.rel (%p636) target = $region88
      $region87: #{critic_forward.1} parent=11 // pred_region
        _
      $region88: #{critic_forward.1} parent=11 // pred_fallthru
        _
      // Predicated region
      $region89: #{critic_forward.1} parent=11 // pred_check
        %p639 = pneg %p478
      $region90: #{critic_forward.1} parent=11 // pred_check_branch
        %641 = sbr.rel (%p639) target = $region92
      $region91: #{critic_forward.1} parent=11 // pred_region
        _
      $region92: #{critic_forward.1} parent=11 // pred_fallthru
        _
      // Predicated region
      $region93: #{critic_forward.1} parent=11 // pred_check
        %p642 = pneg %p499
      $region94: #{critic_forward.1} parent=11 // pred_check_branch
        %644 = sbr.rel (%p642) target = $region96
      $region95: #{critic_forward.1} parent=11 // pred_region
        _
      $region96: #{critic_forward.1} parent=11 // pred_fallthru
        _
      // Predicated region
      $region97: #{critic_forward.1} parent=11 // pred_check
        %p645 = pneg %p520
      $region98: #{critic_forward.1} parent=11 // pred_check_branch
        %647 = sbr.rel (%p645) target = $region100
      $region99: #{critic_forward.1} parent=11 // pred_region
        _
      $region100: #{critic_forward.1} parent=11 // pred_fallthru
        _
      // Predicated region
      $region101: #{critic_forward.1} parent=11 // pred_check
        %p648 = pneg %p541
      $region102: #{critic_forward.1} parent=11 // pred_check_branch
        %650 = sbr.rel (%p648) target = $region104
      $region103: #{critic_forward.1} parent=11 // pred_region
        _
      $region104: #{critic_forward.1} parent=11 // pred_fallthru
        _
    $region12: #{critic_forward.1} parent=5 // pred_fallthru
      _
    %p651 = scmp.lt.s32.totalorder %s32, 2
    // Predicated region
    $region105: #{critic_forward.1} parent=5 // pred_check
      %p652 = pneg %p651
    $region106: #{critic_forward.1} parent=5 // pred_check_branch
      %654 = sbr.rel (%p652) target = $region108
    $region107: #{critic_forward.1} parent=5 // pred_region
      // Predicated region
      $region109: #{critic_forward.1} parent=107 // pred_check
        %p655 = pneg %p52
      $region110: #{critic_forward.1} parent=107 // pred_check_branch
        %657 = sbr.rel (%p655) target = $region112
      $region111: #{critic_forward.1} parent=107 // pred_region
        %p658 = scmp.lt.s32.totalorder %s32, 1
        %s659 = scalar_select %p658, %s32, 1
        %s660 = smul.addr %s659, 3
        %s661 = smul.addr %s660, 8
        %s662 = scalar_lea.vmem %s0, %s661
      $region112: #{critic_forward.1} parent=107 // pred_fallthru
        _
    $region108: #{critic_forward.1} parent=5 // pred_fallthru
      _
    %p663 = scmp.le.s32.totalorder 1, %s32
    %p664 = scmp.lt.s32.totalorder %s32, 3
    %p665 = pnand %p663, %p664
    %p666 = pneg %p665
    // Predicated region
    $region113: #{critic_forward.1} parent=5 // pred_check
      _
    $region114: #{critic_forward.1} parent=5 // pred_check_branch
      %668 = sbr.rel (%p665) target = $region116
    $region115: #{critic_forward.1} parent=5 // pred_region
      %s669 = ssub.s32 %s32, 1
      %p670 = scmp.lt.s32.totalorder %s37, 1
      %s671 = scalar_select %p670, %s37, 1
      %s672 = smul.addr %s671, 3
      %s673 = smul.addr %s672, 8
      %s674 = scalar_lea.vmem %s0, %s673
      %p675 = pneg %p58
      %p676 = pneg %p55
      %p677 = pneg %p79
      %p678 = pneg %p76
      %p679 = pneg %p100
      %p680 = pneg %p97
      %p681 = pneg %p121
      %p682 = pneg %p118
      %p683 = pneg %p142
      %p684 = pneg %p139
      %p685 = pneg %p163
      %p686 = pneg %p160
      %p687 = pneg %p184
      %p688 = pneg %p181
      %p689 = pneg %p205
      %p690 = pneg %p202
      %p691 = pneg %p226
      %p692 = pneg %p223
      %p693 = pneg %p247
      %p694 = pneg %p244
      %p695 = pneg %p268
      %p696 = pneg %p265
      %p697 = pneg %p289
      %p698 = pneg %p286
      %p699 = pneg %p310
      %p700 = pneg %p307
      %p701 = pneg %p331
      %p702 = pneg %p328
      %p703 = pneg %p352
      %p704 = pneg %p349
      %p705 = pneg %p373
      %p706 = pneg %p370
      %p707 = pneg %p394
      %p708 = pneg %p391
      %p709 = pneg %p415
      %p710 = pneg %p412
      %p711 = pneg %p436
      %p712 = pneg %p433
      %p713 = pneg %p457
      %p714 = pneg %p454
      %p715 = pneg %p478
      %p716 = pneg %p475
      %p717 = pneg %p499
      %p718 = pneg %p496
      %p719 = pneg %p520
      %p720 = pneg %p517
      %p721 = pneg %p541
      %p722 = pneg %p538
      %p723 = pneg %p567
      %p724 = pneg %p564
      %p725 = scmp.lt.s32.totalorder %s37, 1
      %s726 = scalar_select %p725, %s37, 1
      %s727 = scalar_lea.vmem %s24, %s726
      %p728 = scmp.lt.s32.totalorder %s37, 1
      %s729 = scalar_select %p728, %s37, 1
      %s730 = smul.addr %s729, 3
      %s731 = smul.addr %s730, 8
      %s732 = scalar_lea.vmem %s0, %s731
      %p733 = scmp.lt.s32.totalorder %s37, 1
      %s734 = scalar_select %p733, %s37, 1
      %s735 = scalar_lea.vmem %s24, %s734
      %v737 = vld [vmem:[%s732] sm:$0xff]
      %v738 = vld [vmem:[%s732 + $0x8] sm:$0xff]
      %v739 = vld [vmem:[%s732 + $0x10] sm:$0xff]
      %v740 = vpack.c.bf16 %v737, %v737
      %v741 = vpack.c.bf16 %v738, %v738
      %v742 = vpack.c.bf16 %v739, %v739
      %v743 = vld [vmem:[%s1] sm:$0xf]
      %v745 = vunpack.c.l.b16 %v743
      %v746 = vpack.c.b16 %v745, %v745
      %747 = vrot.lane.b32.xlu0 %v746, 120
      %v748 = vpop.permute.xlu0 %747
      %752 = vrot.lane.b32.xlu0 %v740, 127
      %v753 = vpop.permute.xlu0 %752
      %754 = vrot.lane.b32.xlu0 %v741, 127
      %v755 = vpop.permute.xlu0 %754
      %756 = vrot.lane.b32.xlu0 %v742, 127
      %v757 = vpop.permute.xlu0 %756
      %vm758 = vcmask 1039360
      %v759 = vsel %vm758, %v753, %v755
      %v760 = vsel %vm758, %v755, %v757
      %vm761 = vcmask 64512
      %v763 = vsel %vm761, %v748, 0
      %vm765 = vcmask 1043456
      %v767 = vsel %vm765, %v759, 0
      %v770 = vsel %vm765, %v760, 0
      %v773 = vsel %vm765, %v757, 0
      %775 = vmatpush.bf16.msra.mxu0 0
      %776 = vmatpush.bf16.msra.mxu0 0
      %777 = vmatpush.bf16.msra.mxu0 0
      %778 = vmatpush.bf16.msra.mxu0 0
      %779 = vmatpush.bf16.msra.mxu0 0
      %780 = vmatpush.bf16.msra.mxu0 0
      %781 = vmatpush.bf16.msra.mxu0 0
      %782 = vmatpush.bf16.msra.mxu0 %v767
      %783 = vmatmul.bf16.gmra.mxu0 %v763
      %v784 = vpop.f32.mrf.mxu0
      %v785 = vadd.f32 0.0, %v784
      %v786 = vpop.f32.mrf.mxu0
      %787 = vdwg.mxu0
      %788 = vmatpush.bf16.msra.mxu0 0
      %789 = vmatpush.bf16.msra.mxu0 0
      %790 = vmatpush.bf16.msra.mxu0 0
      %791 = vmatpush.bf16.msra.mxu0 0
      %792 = vmatpush.bf16.msra.mxu0 0
      %793 = vmatpush.bf16.msra.mxu0 0
      %794 = vmatpush.bf16.msra.mxu0 0
      %795 = vmatpush.bf16.msra.mxu0 %v770
      %796 = vmatmul.bf16.gmra.mxu0 %v763
      %v797 = vpop.f32.mrf.mxu0
      %v798 = vadd.f32 0.0, %v797
      %v799 = vpop.f32.mrf.mxu0
      %800 = vdwg.mxu0
      %801 = vmatpush.bf16.msra.mxu0 0
      %802 = vmatpush.bf16.msra.mxu0 0
      %803 = vmatpush.bf16.msra.mxu0 0
      %804 = vmatpush.bf16.msra.mxu0 0
      %805 = vmatpush.bf16.msra.mxu0 0
      %806 = vmatpush.bf16.msra.mxu0 0
      %807 = vmatpush.bf16.msra.mxu0 0
      %808 = vmatpush.bf16.msra.mxu0 %v773
      %809 = vmatmul.bf16.gmra.mxu0 %v763
      %v810 = vpop.f32.mrf.mxu0
      %v811 = vadd.f32 0.0, %v810
      %v812 = vpop.f32.mrf.mxu0
      %813 = vdwg.mxu0
      %v815 = vsel %vm761, %v743, 0
      %v818 = vsel %vm765, %v740, 0
      %v821 = vsel %vm765, %v741, 0
      %v824 = vsel %vm765, %v742, 0
      %826 = vmatpush.bf16.msra.mxu0 0
      %827 = vmatpush.bf16.msra.mxu0 0
      %828 = vmatpush.bf16.msra.mxu0 0
      %829 = vmatpush.bf16.msra.mxu0 0
      %830 = vmatpush.bf16.msra.mxu0 0
      %831 = vmatpush.bf16.msra.mxu0 0
      %832 = vmatpush.bf16.msra.mxu0 0
      %833 = vmatpush.bf16.msra.mxu0 %v818
      %834 = vmatmul.bf16.gmra.mxu0 %v815
      %v835 = vpop.f32.mrf.mxu0
      %v836 = vadd.f32 %v785, %v835
      %v837 = vpop.f32.mrf.mxu0
      %838 = vdwg.mxu0
      %839 = vmatpush.bf16.msra.mxu0 0
      %840 = vmatpush.bf16.msra.mxu0 0
      %841 = vmatpush.bf16.msra.mxu0 0
      %842 = vmatpush.bf16.msra.mxu0 0
      %843 = vmatpush.bf16.msra.mxu0 0
      %844 = vmatpush.bf16.msra.mxu0 0
      %845 = vmatpush.bf16.msra.mxu0 0
      %846 = vmatpush.bf16.msra.mxu0 %v821
      %847 = vmatmul.bf16.gmra.mxu0 %v815
      %v848 = vpop.f32.mrf.mxu0
      %v849 = vadd.f32 %v798, %v848
      %v850 = vpop.f32.mrf.mxu0
      %851 = vdwg.mxu0
      %852 = vmatpush.bf16.msra.mxu0 0
      %853 = vmatpush.bf16.msra.mxu0 0
      %854 = vmatpush.bf16.msra.mxu0 0
      %855 = vmatpush.bf16.msra.mxu0 0
      %856 = vmatpush.bf16.msra.mxu0 0
      %857 = vmatpush.bf16.msra.mxu0 0
      %858 = vmatpush.bf16.msra.mxu0 0
      %859 = vmatpush.bf16.msra.mxu0 %v824
      %860 = vmatmul.bf16.gmra.mxu0 %v815
      %v861 = vpop.f32.mrf.mxu0
      %v862 = vadd.f32 %v811, %v861
      %v863 = vpop.f32.mrf.mxu0
      %864 = vdwg.mxu0
      %865 = vrot.lane.b32.xlu0 %v746, 112
      %v866 = vpop.permute.xlu0 %865
      %867 = vrot.lane.b32.xlu0 %v740, 126
      %v868 = vpop.permute.xlu0 %867
      %869 = vrot.lane.b32.xlu0 %v741, 126
      %v870 = vpop.permute.xlu0 %869
      %871 = vrot.lane.b32.xlu0 %v742, 126
      %v872 = vpop.permute.xlu0 %871
      %vm873 = vcmask 1031168
      %v874 = vsel %vm873, %v868, %v870
      %v875 = vsel %vm873, %v870, %v872
      %v877 = vsel %vm761, %v866, 0
      %v880 = vsel %vm765, %v874, 0
      %v883 = vsel %vm765, %v875, 0
      %v886 = vsel %vm765, %v872, 0
      %888 = vmatpush.bf16.msra.mxu0 0
      %889 = vmatpush.bf16.msra.mxu0 0
      %890 = vmatpush.bf16.msra.mxu0 0
      %891 = vmatpush.bf16.msra.mxu0 0
      %892 = vmatpush.bf16.msra.mxu0 0
      %893 = vmatpush.bf16.msra.mxu0 0
      %894 = vmatpush.bf16.msra.mxu0 0
      %895 = vmatpush.bf16.msra.mxu0 %v880
      %896 = vmatmul.bf16.gmra.mxu0 %v877
      %v897 = vpop.f32.mrf.mxu0
      %v898 = vadd.f32 0.0, %v897
      %v899 = vpop.f32.mrf.mxu0
      %900 = vdwg.mxu0
      %901 = vmatpush.bf16.msra.mxu0 0
      %902 = vmatpush.bf16.msra.mxu0 0
      %903 = vmatpush.bf16.msra.mxu0 0
      %904 = vmatpush.bf16.msra.mxu0 0
      %905 = vmatpush.bf16.msra.mxu0 0
      %906 = vmatpush.bf16.msra.mxu0 0
      %907 = vmatpush.bf16.msra.mxu0 0
      %908 = vmatpush.bf16.msra.mxu0 %v883
      %909 = vmatmul.bf16.gmra.mxu0 %v877
      %v910 = vpop.f32.mrf.mxu0
      %v911 = vadd.f32 0.0, %v910
      %v912 = vpop.f32.mrf.mxu0
      %913 = vdwg.mxu0
      %914 = vmatpush.bf16.msra.mxu0 0
      %915 = vmatpush.bf16.msra.mxu0 0
      %916 = vmatpush.bf16.msra.mxu0 0
      %917 = vmatpush.bf16.msra.mxu0 0
      %918 = vmatpush.bf16.msra.mxu0 0
      %919 = vmatpush.bf16.msra.mxu0 0
      %920 = vmatpush.bf16.msra.mxu0 0
      %921 = vmatpush.bf16.msra.mxu0 %v886
      %922 = vmatmul.bf16.gmra.mxu0 %v877
      %v923 = vpop.f32.mrf.mxu0
      %v924 = vadd.f32 0.0, %v923
      %v925 = vpop.f32.mrf.mxu0
      %926 = vdwg.mxu0
      %v927 = vadd.f32 %v836, %v898
      %v928 = vadd.f32 %v849, %v911
      %v929 = vadd.f32 %v862, %v924
      %930 = vrot.lane.b32.xlu0 %v746, 104
      %v931 = vpop.permute.xlu0 %930
      %932 = vrot.lane.b32.xlu0 %v740, 110
      %v933 = vpop.permute.xlu0 %932
      %934 = vrot.lane.b32.xlu0 %v741, 110
      %v935 = vpop.permute.xlu0 %934
      %936 = vrot.lane.b32.xlu0 %v742, 110
      %v937 = vpop.permute.xlu0 %936
      %vm938 = vcmask 900096
      %v939 = vsel %vm938, %v933, %v935
      %v940 = vsel %vm938, %v935, %v937
      %v942 = vsel %vm761, %v931, 0
      %v945 = vsel %vm765, %v939, 0
      %v948 = vsel %vm765, %v940, 0
      %v951 = vsel %vm765, %v937, 0
      %953 = vmatpush.bf16.msra.mxu0 0
      %954 = vmatpush.bf16.msra.mxu0 0
      %955 = vmatpush.bf16.msra.mxu0 0
      %956 = vmatpush.bf16.msra.mxu0 0
      %957 = vmatpush.bf16.msra.mxu0 0
      %958 = vmatpush.bf16.msra.mxu0 0
      %959 = vmatpush.bf16.msra.mxu0 0
      %960 = vmatpush.bf16.msra.mxu0 %v945
      %961 = vmatmul.bf16.gmra.mxu0 %v942
      %v962 = vpop.f32.mrf.mxu0
      %v963 = vadd.f32 0.0, %v962
      %v964 = vpop.f32.mrf.mxu0
      %965 = vdwg.mxu0
      %966 = vmatpush.bf16.msra.mxu0 0
      %967 = vmatpush.bf16.msra.mxu0 0
      %968 = vmatpush.bf16.msra.mxu0 0
      %969 = vmatpush.bf16.msra.mxu0 0
      %970 = vmatpush.bf16.msra.mxu0 0
      %971 = vmatpush.bf16.msra.mxu0 0
      %972 = vmatpush.bf16.msra.mxu0 0
      %973 = vmatpush.bf16.msra.mxu0 %v948
      %974 = vmatmul.bf16.gmra.mxu0 %v942
      %v975 = vpop.f32.mrf.mxu0
      %v976 = vadd.f32 0.0, %v975
      %v977 = vpop.f32.mrf.mxu0
      %978 = vdwg.mxu0
      %979 = vmatpush.bf16.msra.mxu0 0
      %980 = vmatpush.bf16.msra.mxu0 0
      %981 = vmatpush.bf16.msra.mxu0 0
      %982 = vmatpush.bf16.msra.mxu0 0
      %983 = vmatpush.bf16.msra.mxu0 0
      %984 = vmatpush.bf16.msra.mxu0 0
      %985 = vmatpush.bf16.msra.mxu0 0
      %986 = vmatpush.bf16.msra.mxu0 %v951
      %987 = vmatmul.bf16.gmra.mxu0 %v942
      %v988 = vpop.f32.mrf.mxu0
      %v989 = vadd.f32 0.0, %v988
      %v990 = vpop.f32.mrf.mxu0
      %991 = vdwg.mxu0
      %v992 = vadd.f32 %v927, %v963
      %v993 = vadd.f32 %v928, %v976
      %v994 = vadd.f32 %v929, %v989
      %995 = vrot.lane.b32.xlu0 %v746, 96
      %v996 = vpop.permute.xlu0 %995
      %997 = vrot.lane.b32.xlu0 %v740, 109
      %v998 = vpop.permute.xlu0 %997
      %999 = vrot.lane.b32.xlu0 %v741, 109
      %v1000 = vpop.permute.xlu0 %999
      %1001 = vrot.lane.b32.xlu0 %v742, 109
      %v1002 = vpop.permute.xlu0 %1001
      %vm1003 = vcmask 891904
      %v1004 = vsel %vm1003, %v998, %v1000
      %v1005 = vsel %vm1003, %v1000, %v1002
      %v1007 = vsel %vm761, %v996, 0
      %v1010 = vsel %vm765, %v1004, 0
      %v1013 = vsel %vm765, %v1005, 0
      %v1016 = vsel %vm765, %v1002, 0
      %1018 = vmatpush.bf16.msra.mxu0 0
      %1019 = vmatpush.bf16.msra.mxu0 0
      %1020 = vmatpush.bf16.msra.mxu0 0
      %1021 = vmatpush.bf16.msra.mxu0 0
      %1022 = vmatpush.bf16.msra.mxu0 0
      %1023 = vmatpush.bf16.msra.mxu0 0
      %1024 = vmatpush.bf16.msra.mxu0 0
      %1025 = vmatpush.bf16.msra.mxu0 %v1010
      %1026 = vmatmul.bf16.gmra.mxu0 %v1007
      %v1027 = vpop.f32.mrf.mxu0
      %v1028 = vadd.f32 0.0, %v1027
      %v1029 = vpop.f32.mrf.mxu0
      %1030 = vdwg.mxu0
      %1031 = vmatpush.bf16.msra.mxu0 0
      %1032 = vmatpush.bf16.msra.mxu0 0
      %1033 = vmatpush.bf16.msra.mxu0 0
      %1034 = vmatpush.bf16.msra.mxu0 0
      %1035 = vmatpush.bf16.msra.mxu0 0
      %1036 = vmatpush.bf16.msra.mxu0 0
      %1037 = vmatpush.bf16.msra.mxu0 0
      %1038 = vmatpush.bf16.msra.mxu0 %v1013
      %1039 = vmatmul.bf16.gmra.mxu0 %v1007
      %v1040 = vpop.f32.mrf.mxu0
      %v1041 = vadd.f32 0.0, %v1040
      %v1042 = vpop.f32.mrf.mxu0
      %1043 = vdwg.mxu0
      %1044 = vmatpush.bf16.msra.mxu0 0
      %1045 = vmatpush.bf16.msra.mxu0 0
      %1046 = vmatpush.bf16.msra.mxu0 0
      %1047 = vmatpush.bf16.msra.mxu0 0
      %1048 = vmatpush.bf16.msra.mxu0 0
      %1049 = vmatpush.bf16.msra.mxu0 0
      %1050 = vmatpush.bf16.msra.mxu0 0
      %1051 = vmatpush.bf16.msra.mxu0 %v1016
      %1052 = vmatmul.bf16.gmra.mxu0 %v1007
      %v1053 = vpop.f32.mrf.mxu0
      %v1054 = vadd.f32 0.0, %v1053
      %v1055 = vpop.f32.mrf.mxu0
      %1056 = vdwg.mxu0
      %v1057 = vadd.f32 %v992, %v1028
      %v1058 = vadd.f32 %v993, %v1041
      %v1059 = vadd.f32 %v994, %v1054
      %1060 = vrot.lane.b32.xlu0 %v746, 88
      %v1061 = vpop.permute.xlu0 %1060
      %1062 = vrot.lane.b32.xlu0 %v740, 108
      %v1063 = vpop.permute.xlu0 %1062
      %1064 = vrot.lane.b32.xlu0 %v741, 108
      %v1065 = vpop.permute.xlu0 %1064
      %1066 = vrot.lane.b32.xlu0 %v742, 108
      %v1067 = vpop.permute.xlu0 %1066
      %vm1068 = vcmask 883712
      %v1069 = vsel %vm1068, %v1063, %v1065
      %v1070 = vsel %vm1068, %v1065, %v1067
      %v1072 = vsel %vm761, %v1061, 0
      %v1075 = vsel %vm765, %v1069, 0
      %v1078 = vsel %vm765, %v1070, 0
      %v1081 = vsel %vm765, %v1067, 0
      %1083 = vmatpush.bf16.msra.mxu0 0
      %1084 = vmatpush.bf16.msra.mxu0 0
      %1085 = vmatpush.bf16.msra.mxu0 0
      %1086 = vmatpush.bf16.msra.mxu0 0
      %1087 = vmatpush.bf16.msra.mxu0 0
      %1088 = vmatpush.bf16.msra.mxu0 0
      %1089 = vmatpush.bf16.msra.mxu0 0
      %1090 = vmatpush.bf16.msra.mxu0 %v1075
      %1091 = vmatmul.bf16.gmra.mxu0 %v1072
      %v1092 = vpop.f32.mrf.mxu0
      %v1093 = vadd.f32 0.0, %v1092
      %v1094 = vpop.f32.mrf.mxu0
      %1095 = vdwg.mxu0
      %1096 = vmatpush.bf16.msra.mxu0 0
      %1097 = vmatpush.bf16.msra.mxu0 0
      %1098 = vmatpush.bf16.msra.mxu0 0
      %1099 = vmatpush.bf16.msra.mxu0 0
      %1100 = vmatpush.bf16.msra.mxu0 0
      %1101 = vmatpush.bf16.msra.mxu0 0
      %1102 = vmatpush.bf16.msra.mxu0 0
      %1103 = vmatpush.bf16.msra.mxu0 %v1078
      %1104 = vmatmul.bf16.gmra.mxu0 %v1072
      %v1105 = vpop.f32.mrf.mxu0
      %v1106 = vadd.f32 0.0, %v1105
      %v1107 = vpop.f32.mrf.mxu0
      %1108 = vdwg.mxu0
      %1109 = vmatpush.bf16.msra.mxu0 0
      %1110 = vmatpush.bf16.msra.mxu0 0
      %1111 = vmatpush.bf16.msra.mxu0 0
      %1112 = vmatpush.bf16.msra.mxu0 0
      %1113 = vmatpush.bf16.msra.mxu0 0
      %1114 = vmatpush.bf16.msra.mxu0 0
      %1115 = vmatpush.bf16.msra.mxu0 0
      %1116 = vmatpush.bf16.msra.mxu0 %v1081
      %1117 = vmatmul.bf16.gmra.mxu0 %v1072
      %v1118 = vpop.f32.mrf.mxu0
      %v1119 = vadd.f32 0.0, %v1118
      %v1120 = vpop.f32.mrf.mxu0
      %1121 = vdwg.mxu0
      %v1122 = vadd.f32 %v1057, %v1093
      %v1123 = vadd.f32 %v1058, %v1106
      %v1124 = vadd.f32 %v1059, %v1119
      %1125 = vrot.lane.b32.xlu0 %v746, 80
      %v1126 = vpop.permute.xlu0 %1125
      %1127 = vrot.lane.b32.xlu0 %v740, 92
      %v1128 = vpop.permute.xlu0 %1127
      %1129 = vrot.lane.b32.xlu0 %v741, 92
      %v1130 = vpop.permute.xlu0 %1129
      %1131 = vrot.lane.b32.xlu0 %v742, 92
      %v1132 = vpop.permute.xlu0 %1131
      %vm1133 = vcmask 752640
      %v1134 = vsel %vm1133, %v1128, %v1130
      %v1135 = vsel %vm1133, %v1130, %v1132
      %v1137 = vsel %vm761, %v1126, 0
      %v1140 = vsel %vm765, %v1134, 0
      %v1143 = vsel %vm765, %v1135, 0
      %v1146 = vsel %vm765, %v1132, 0
      %1148 = vmatpush.bf16.msra.mxu0 0
      %1149 = vmatpush.bf16.msra.mxu0 0
      %1150 = vmatpush.bf16.msra.mxu0 0
      %1151 = vmatpush.bf16.msra.mxu0 0
      %1152 = vmatpush.bf16.msra.mxu0 0
      %1153 = vmatpush.bf16.msra.mxu0 0
      %1154 = vmatpush.bf16.msra.mxu0 0
      %1155 = vmatpush.bf16.msra.mxu0 %v1140
      %1156 = vmatmul.bf16.gmra.mxu0 %v1137
      %v1157 = vpop.f32.mrf.mxu0
      %v1158 = vadd.f32 0.0, %v1157
      %v1159 = vpop.f32.mrf.mxu0
      %1160 = vdwg.mxu0
      %1161 = vmatpush.bf16.msra.mxu0 0
      %1162 = vmatpush.bf16.msra.mxu0 0
      %1163 = vmatpush.bf16.msra.mxu0 0
      %1164 = vmatpush.bf16.msra.mxu0 0
      %1165 = vmatpush.bf16.msra.mxu0 0
      %1166 = vmatpush.bf16.msra.mxu0 0
      %1167 = vmatpush.bf16.msra.mxu0 0
      %1168 = vmatpush.bf16.msra.mxu0 %v1143
      %1169 = vmatmul.bf16.gmra.mxu0 %v1137
      %v1170 = vpop.f32.mrf.mxu0
      %v1171 = vadd.f32 0.0, %v1170
      %v1172 = vpop.f32.mrf.mxu0
      %1173 = vdwg.mxu0
      %1174 = vmatpush.bf16.msra.mxu0 0
      %1175 = vmatpush.bf16.msra.mxu0 0
      %1176 = vmatpush.bf16.msra.mxu0 0
      %1177 = vmatpush.bf16.msra.mxu0 0
      %1178 = vmatpush.bf16.msra.mxu0 0
      %1179 = vmatpush.bf16.msra.mxu0 0
      %1180 = vmatpush.bf16.msra.mxu0 0
      %1181 = vmatpush.bf16.msra.mxu0 %v1146
      %1182 = vmatmul.bf16.gmra.mxu0 %v1137
      %v1183 = vpop.f32.mrf.mxu0
      %v1184 = vadd.f32 0.0, %v1183
      %v1185 = vpop.f32.mrf.mxu0
      %1186 = vdwg.mxu0
      %v1187 = vadd.f32 %v1122, %v1158
      %v1188 = vadd.f32 %v1123, %v1171
      %v1189 = vadd.f32 %v1124, %v1184
      %1190 = vrot.lane.b32.xlu0 %v746, 72
      %v1191 = vpop.permute.xlu0 %1190
      %1192 = vrot.lane.b32.xlu0 %v740, 91
      %v1193 = vpop.permute.xlu0 %1192
      %1194 = vrot.lane.b32.xlu0 %v741, 91
      %v1195 = vpop.permute.xlu0 %1194
      %1196 = vrot.lane.b32.xlu0 %v742, 91
      %v1197 = vpop.permute.xlu0 %1196
      %vm1198 = vcmask 744448
      %v1199 = vsel %vm1198, %v1193, %v1195
      %v1200 = vsel %vm1198, %v1195, %v1197
      %v1202 = vsel %vm761, %v1191, 0
      %v1205 = vsel %vm765, %v1199, 0
      %v1208 = vsel %vm765, %v1200, 0
      %v1211 = vsel %vm765, %v1197, 0
      %1213 = vmatpush.bf16.msra.mxu0 0
      %1214 = vmatpush.bf16.msra.mxu0 0
      %1215 = vmatpush.bf16.msra.mxu0 0
      %1216 = vmatpush.bf16.msra.mxu0 0
      %1217 = vmatpush.bf16.msra.mxu0 0
      %1218 = vmatpush.bf16.msra.mxu0 0
      %1219 = vmatpush.bf16.msra.mxu0 0
      %1220 = vmatpush.bf16.msra.mxu0 %v1205
      %1221 = vmatmul.bf16.gmra.mxu0 %v1202
      %v1222 = vpop.f32.mrf.mxu0
      %v1223 = vadd.f32 0.0, %v1222
      %v1224 = vpop.f32.mrf.mxu0
      %1225 = vdwg.mxu0
      %1226 = vmatpush.bf16.msra.mxu0 0
      %1227 = vmatpush.bf16.msra.mxu0 0
      %1228 = vmatpush.bf16.msra.mxu0 0
      %1229 = vmatpush.bf16.msra.mxu0 0
      %1230 = vmatpush.bf16.msra.mxu0 0
      %1231 = vmatpush.bf16.msra.mxu0 0
      %1232 = vmatpush.bf16.msra.mxu0 0
      %1233 = vmatpush.bf16.msra.mxu0 %v1208
      %1234 = vmatmul.bf16.gmra.mxu0 %v1202
      %v1235 = vpop.f32.mrf.mxu0
      %v1236 = vadd.f32 0.0, %v1235
      %v1237 = vpop.f32.mrf.mxu0
      %1238 = vdwg.mxu0
      %1239 = vmatpush.bf16.msra.mxu0 0
      %1240 = vmatpush.bf16.msra.mxu0 0
      %1241 = vmatpush.bf16.msra.mxu0 0
      %1242 = vmatpush.bf16.msra.mxu0 0
      %1243 = vmatpush.bf16.msra.mxu0 0
      %1244 = vmatpush.bf16.msra.mxu0 0
      %1245 = vmatpush.bf16.msra.mxu0 0
      %1246 = vmatpush.bf16.msra.mxu0 %v1211
      %1247 = vmatmul.bf16.gmra.mxu0 %v1202
      %v1248 = vpop.f32.mrf.mxu0
      %v1249 = vadd.f32 0.0, %v1248
      %v1250 = vpop.f32.mrf.mxu0
      %1251 = vdwg.mxu0
      %v1252 = vadd.f32 %v1187, %v1223
      %v1253 = vadd.f32 %v1188, %v1236
      %v1254 = vadd.f32 %v1189, %v1249
      %1255 = vrot.lane.b32.xlu0 %v746, 64
      %v1256 = vpop.permute.xlu0 %1255
      %1257 = vrot.lane.b32.xlu0 %v740, 90
      %v1258 = vpop.permute.xlu0 %1257
      %1259 = vrot.lane.b32.xlu0 %v741, 90
      %v1260 = vpop.permute.xlu0 %1259
      %1261 = vrot.lane.b32.xlu0 %v742, 90
      %v1262 = vpop.permute.xlu0 %1261
      %vm1263 = vcmask 736256
      %v1264 = vsel %vm1263, %v1258, %v1260
      %v1265 = vsel %vm1263, %v1260, %v1262
      %v1267 = vsel %vm761, %v1256, 0
      %v1270 = vsel %vm765, %v1264, 0
      %v1273 = vsel %vm765, %v1265, 0
      %v1276 = vsel %vm765, %v1262, 0
      %1278 = vmatpush.bf16.msra.mxu0 0
      %1279 = vmatpush.bf16.msra.mxu0 0
      %1280 = vmatpush.bf16.msra.mxu0 0
      %1281 = vmatpush.bf16.msra.mxu0 0
      %1282 = vmatpush.bf16.msra.mxu0 0
      %1283 = vmatpush.bf16.msra.mxu0 0
      %1284 = vmatpush.bf16.msra.mxu0 0
      %1285 = vmatpush.bf16.msra.mxu0 %v1270
      %1286 = vmatmul.bf16.gmra.mxu0 %v1267
      %v1287 = vpop.f32.mrf.mxu0
      %v1288 = vadd.f32 0.0, %v1287
      %v1289 = vpop.f32.mrf.mxu0
      %1290 = vdwg.mxu0
      %1291 = vmatpush.bf16.msra.mxu0 0
      %1292 = vmatpush.bf16.msra.mxu0 0
      %1293 = vmatpush.bf16.msra.mxu0 0
      %1294 = vmatpush.bf16.msra.mxu0 0
      %1295 = vmatpush.bf16.msra.mxu0 0
      %1296 = vmatpush.bf16.msra.mxu0 0
      %1297 = vmatpush.bf16.msra.mxu0 0
      %1298 = vmatpush.bf16.msra.mxu0 %v1273
      %1299 = vmatmul.bf16.gmra.mxu0 %v1267
      %v1300 = vpop.f32.mrf.mxu0
      %v1301 = vadd.f32 0.0, %v1300
      %v1302 = vpop.f32.mrf.mxu0
      %1303 = vdwg.mxu0
      %1304 = vmatpush.bf16.msra.mxu0 0
      %1305 = vmatpush.bf16.msra.mxu0 0
      %1306 = vmatpush.bf16.msra.mxu0 0
      %1307 = vmatpush.bf16.msra.mxu0 0
      %1308 = vmatpush.bf16.msra.mxu0 0
      %1309 = vmatpush.bf16.msra.mxu0 0
      %1310 = vmatpush.bf16.msra.mxu0 0
      %1311 = vmatpush.bf16.msra.mxu0 %v1276
      %1312 = vmatmul.bf16.gmra.mxu0 %v1267
      %v1313 = vpop.f32.mrf.mxu0
      %v1314 = vadd.f32 0.0, %v1313
      %v1315 = vpop.f32.mrf.mxu0
      %1316 = vdwg.mxu0
      %v1317 = vadd.f32 %v1252, %v1288
      %v1318 = vadd.f32 %v1253, %v1301
      %v1319 = vadd.f32 %v1254, %v1314
      %v1320 = vld [vmem:[%s2] sm:$0xff]
      %1322 = vset.pattern.permute.xlu0 0
      %1323 = vperm.xlu0 %1322, %v1320
      %v1324 = vpop.permute.xlu0 %1323
      %v1326 = vadd.f32 %v1317, %v1324
      %v1327 = vadd.f32 %v1318, %v1324
      %v1328 = vadd.f32 %v1319, %v1324
      %vm1329 = vcmp.ge.f32.partialorder %v1326, 0.0
      %vm1330 = vcmp.ge.f32.partialorder %v1327, 0.0
      %vm1331 = vcmp.ge.f32.partialorder %v1328, 0.0
      %v1332 = vmul.f32 %v1326, 0.2
      %v1333 = vmul.f32 %v1327, 0.2
      %v1334 = vmul.f32 %v1328, 0.2
      %v1335 = vsel %vm1329, %v1326, %v1332
      %v1336 = vsel %vm1330, %v1327, %v1333
      %v1337 = vsel %vm1331, %v1328, %v1334
      %v1338 = vld [vmem:[%s3] sm:$0xff]
      %v1339 = vld [vmem:[%s3 + $0x8] sm:$0xff]
      %v1340 = vld [vmem:[%s3 + $0x10] sm:$0xff]
      %v1341 = vld [vmem:[%s3 + $0x18] sm:$0xff]
      %v1342 = vld [vmem:[%s3 + $0x20] sm:$0xff]
      %v1343 = vld [vmem:[%s3 + $0x28] sm:$0xff]
      %v1344 = vld [vmem:[%s3 + $0x30] sm:$0xff]
      %v1345 = vld [vmem:[%s3 + $0x38] sm:$0xff]
      %v1346 = vld [vmem:[%s3 + $0x40] sm:$0xff]
      %v1347 = vld [vmem:[%s3 + $0x48] sm:$0xff]
      %v1348 = vld [vmem:[%s3 + $0x50] sm:$0xff]
      %v1349 = vld [vmem:[%s3 + $0x58] sm:$0xff]
      %v1350 = vld [vmem:[%s3 + $0x60] sm:$0xff]
      %v1351 = vld [vmem:[%s3 + $0x68] sm:$0xff]
      %v1352 = vld [vmem:[%s3 + $0x70] sm:$0xff]
      %v1353 = vld [vmem:[%s3 + $0x78] sm:$0xff]
      %v1354 = vld [vmem:[%s3 + $0x80] sm:$0xff]
      %v1355 = vld [vmem:[%s3 + $0x88] sm:$0xff]
      %v1356 = vld [vmem:[%s3 + $0x90] sm:$0xff]
      %v1357 = vld [vmem:[%s3 + $0x98] sm:$0xff]
      %v1358 = vld [vmem:[%s3 + $0xa0] sm:$0xff]
      %v1359 = vld [vmem:[%s3 + $0xa8] sm:$0xff]
      %v1360 = vld [vmem:[%s3 + $0xb0] sm:$0xff]
      %v1361 = vld [vmem:[%s3 + $0xb8] sm:$0xff]
      %v1362 = vld [vmem:[%s3 + $0xc0] sm:$0xff]
      %v1363 = vld [vmem:[%s3 + $0xc8] sm:$0xff]
      %v1364 = vld [vmem:[%s3 + $0xd0] sm:$0xff]
      %v1365 = vld [vmem:[%s3 + $0xd8] sm:$0xff]
      %v1366 = vld [vmem:[%s3 + $0xe0] sm:$0xff]
      %v1367 = vld [vmem:[%s3 + $0xe8] sm:$0xff]
      %v1368 = vld [vmem:[%s3 + $0xf0] sm:$0xff]
      %v1369 = vld [vmem:[%s3 + $0xf8] sm:$0xff]
      %v1370 = vld [vmem:[%s3 + $0x100] sm:$0xff]
      %v1371 = vld [vmem:[%s3 + $0x108] sm:$0xff]
      %v1372 = vld [vmem:[%s3 + $0x110] sm:$0xff]
      %v1373 = vld [vmem:[%s3 + $0x118] sm:$0xff]
      %v1374 = vld [vmem:[%s3 + $0x120] sm:$0xff]
      %v1375 = vld [vmem:[%s3 + $0x128] sm:$0xff]
      %v1376 = vld [vmem:[%s3 + $0x130] sm:$0xff]
      %v1377 = vld [vmem:[%s3 + $0x138] sm:$0xff]
      %v1378 = vld [vmem:[%s3 + $0x140] sm:$0xff]
      %v1379 = vld [vmem:[%s3 + $0x148] sm:$0xff]
      %v1380 = vld [vmem:[%s3 + $0x150] sm:$0xff]
      %v1381 = vld [vmem:[%s3 + $0x158] sm:$0xff]
      %v1382 = vld [vmem:[%s3 + $0x160] sm:$0xff]
      %v1383 = vld [vmem:[%s3 + $0x168] sm:$0xff]
      %v1384 = vld [vmem:[%s3 + $0x170] sm:$0xff]
      %v1385 = vld [vmem:[%s3 + $0x178] sm:$0xff]
      %v1386 = vld [vmem:[%s3 + $0x180] sm:$0xff]
      %v1387 = vld [vmem:[%s3 + $0x188] sm:$0xff]
      %v1388 = vld [vmem:[%s3 + $0x190] sm:$0xff]
      %v1389 = vld [vmem:[%s3 + $0x198] sm:$0xff]
      %v1390 = vld [vmem:[%s3 + $0x1a0] sm:$0xff]
      %v1391 = vld [vmem:[%s3 + $0x1a8] sm:$0xff]
      %v1392 = vld [vmem:[%s3 + $0x1b0] sm:$0xff]
      %v1393 = vld [vmem:[%s3 + $0x1b8] sm:$0xff]
      %v1394 = vld [vmem:[%s3 + $0x1c0] sm:$0xff]
      %v1395 = vld [vmem:[%s3 + $0x1c8] sm:$0xff]
      %v1396 = vld [vmem:[%s3 + $0x1d0] sm:$0xff]
      %v1397 = vld [vmem:[%s3 + $0x1d8] sm:$0xff]
      %v1398 = vld [vmem:[%s3 + $0x1e0] sm:$0xff]
      %v1399 = vld [vmem:[%s3 + $0x1e8] sm:$0xff]
      %v1400 = vld [vmem:[%s3 + $0x1f0] sm:$0xff]
      %v1401 = vld [vmem:[%s3 + $0x1f8] sm:$0xff]
      %v1402 = vld [vmem:[%s3 + $0x200] sm:$0xff]
      %v1403 = vld [vmem:[%s3 + $0x208] sm:$0xff]
      %v1404 = vld [vmem:[%s3 + $0x210] sm:$0xff]
      %v1405 = vld [vmem:[%s3 + $0x218] sm:$0xff]
      %v1406 = vld [vmem:[%s3 + $0x220] sm:$0xff]
      %v1407 = vld [vmem:[%s3 + $0x228] sm:$0xff]
      %v1408 = vld [vmem:[%s3 + $0x230] sm:$0xff]
      %v1409 = vld [vmem:[%s3 + $0x238] sm:$0xff]
      %v1410 = vld [vmem:[%s3 + $0x240] sm:$0xff]
      %v1411 = vld [vmem:[%s3 + $0x248] sm:$0xff]
      %v1412 = vld [vmem:[%s3 + $0x250] sm:$0xff]
      %v1413 = vld [vmem:[%s3 + $0x258] sm:$0xff]
      %v1414 = vld [vmem:[%s3 + $0x260] sm:$0xff]
      %v1415 = vld [vmem:[%s3 + $0x268] sm:$0xff]
      %v1416 = vld [vmem:[%s3 + $0x270] sm:$0xff]
      %v1417 = vld [vmem:[%s3 + $0x278] sm:$0xff]
      %v1418 = vld [vmem:[%s3 + $0x280] sm:$0xff]
      %v1419 = vld [vmem:[%s3 + $0x288] sm:$0xff]
      %v1420 = vld [vmem:[%s3 + $0x290] sm:$0xff]
      %v1421 = vld [vmem:[%s3 + $0x298] sm:$0xff]
      %v1422 = vld [vmem:[%s3 + $0x2a0] sm:$0xff]
      %v1423 = vld [vmem:[%s3 + $0x2a8] sm:$0xff]
      %v1424 = vld [vmem:[%s3 + $0x2b0] sm:$0xff]
      %v1425 = vld [vmem:[%s3 + $0x2b8] sm:$0xff]
      %v1426 = vld [vmem:[%s3 + $0x2c0] sm:$0xff]
      %v1427 = vld [vmem:[%s3 + $0x2c8] sm:$0xff]
      %v1428 = vld [vmem:[%s3 + $0x2d0] sm:$0xff]
      %v1429 = vld [vmem:[%s3 + $0x2d8] sm:$0xff]
      %v1430 = vld [vmem:[%s3 + $0x2e0] sm:$0xff]
      %v1431 = vld [vmem:[%s3 + $0x2e8] sm:$0xff]
      %v1432 = vld [vmem:[%s3 + $0x2f0] sm:$0xff]
      %v1433 = vld [vmem:[%s3 + $0x2f8] sm:$0xff]
      %v1434 = vld [vmem:[%s3 + $0x300] sm:$0xff]
      %v1435 = vld [vmem:[%s3 + $0x308] sm:$0xff]
      %v1436 = vld [vmem:[%s3 + $0x310] sm:$0xff]
      %v1437 = vld [vmem:[%s3 + $0x318] sm:$0xff]
      %v1438 = vld [vmem:[%s3 + $0x320] sm:$0xff]
      %v1439 = vld [vmem:[%s3 + $0x328] sm:$0xff]
      %v1440 = vld [vmem:[%s3 + $0x330] sm:$0xff]
      %v1441 = vld [vmem:[%s3 + $0x338] sm:$0xff]
      %v1442 = vld [vmem:[%s3 + $0x340] sm:$0xff]
      %v1443 = vld [vmem:[%s3 + $0x348] sm:$0xff]
      %v1444 = vld [vmem:[%s3 + $0x350] sm:$0xff]
      %v1445 = vld [vmem:[%s3 + $0x358] sm:$0xff]
      %vm1446 = vcmask 261120
      %v1448 = vsel %vm1446, %v1337, 0
      %1450 = vmatpush.msra.mxu0 %v1383
      %1451 = vmatpush.msra.mxu0 %v1380
      %1452 = vmatpush.msra.mxu0 %v1377
      %1453 = vmatpush.msra.mxu0 %v1374
      %1454 = vmatpush.msra.mxu0 %v1371
      %1455 = vmatpush.msra.mxu0 %v1368
      %1456 = vmatpush.msra.mxu0 %v1365
      %1457 = vmatpush.msra.mxu0 %v1362
      %1458 = vmatpush.msra.mxu0 %v1359
      %1459 = vmatpush.msra.mxu0 %v1356
      %1460 = vmatpush.msra.mxu0 %v1353
      %1461 = vmatpush.msra.mxu0 %v1350
      %1462 = vmatpush.msra.mxu0 %v1347
      %1463 = vmatpush.msra.mxu0 %v1344
      %1464 = vmatpush.msra.mxu0 %v1341
      %1465 = vmatpush.msra.mxu0 %v1338
      %1466 = vmatmul.f32.gmra.mxu0 %v1335
      %v1467 = vpop.f32.mrf.mxu0
      %v1468 = vadd.f32 0.0, %v1467
      %1469 = vdwg.mxu0
      %1470 = vmatpush.msra.mxu0 %v1431
      %1471 = vmatpush.msra.mxu0 %v1428
      %1472 = vmatpush.msra.mxu0 %v1425
      %1473 = vmatpush.msra.mxu0 %v1422
      %1474 = vmatpush.msra.mxu0 %v1419
      %1475 = vmatpush.msra.mxu0 %v1416
      %1476 = vmatpush.msra.mxu0 %v1413
      %1477 = vmatpush.msra.mxu0 %v1410
      %1478 = vmatpush.msra.mxu0 %v1407
      %1479 = vmatpush.msra.mxu0 %v1404
      %1480 = vmatpush.msra.mxu0 %v1401
      %1481 = vmatpush.msra.mxu0 %v1398
      %1482 = vmatpush.msra.mxu0 %v1395
      %1483 = vmatpush.msra.mxu0 %v1392
      %1484 = vmatpush.msra.mxu0 %v1389
      %1485 = vmatpush.msra.mxu0 %v1386
      %1486 = vmatmul.f32.gmra.mxu0 %v1336
      %v1487 = vpop.f32.mrf.mxu0
      %v1488 = vadd.f32 %v1468, %v1487
      %1489 = vdwg.mxu0
      %1490 = vmatpush.msra.mxu0 0.0
      %1491 = vmatpush.msra.mxu0 0.0
      %1492 = vmatpush.msra.mxu0 0.0
      %1493 = vmatpush.msra.mxu0 0.0
      %1494 = vmatpush.msra.mxu0 0.0
      %1495 = vmatpush.msra.mxu0 0.0
      %1496 = vmatpush.msra.mxu0 0.0
      %1497 = vmatpush.msra.mxu0 0.0
      %1498 = vmatpush.msra.mxu0 0.0
      %1499 = vmatpush.msra.mxu0 0.0
      %1500 = vmatpush.msra.mxu0 0.0
      %1501 = vmatpush.msra.mxu0 0.0
      %1502 = vmatpush.msra.mxu0 %v1443
      %1503 = vmatpush.msra.mxu0 %v1440
      %1504 = vmatpush.msra.mxu0 %v1437
      %1505 = vmatpush.msra.mxu0 %v1434
      %1506 = vmatmul.f32.gmra.mxu0 %v1448
      %v1507 = vpop.f32.mrf.mxu0
      %v1508 = vadd.f32 %v1488, %v1507
      %1509 = vdwg.mxu0
      %1510 = vmatpush.msra.mxu0 %v1384
      %1511 = vmatpush.msra.mxu0 %v1381
      %1512 = vmatpush.msra.mxu0 %v1378
      %1513 = vmatpush.msra.mxu0 %v1375
      %1514 = vmatpush.msra.mxu0 %v1372
      %1515 = vmatpush.msra.mxu0 %v1369
      %1516 = vmatpush.msra.mxu0 %v1366
      %1517 = vmatpush.msra.mxu0 %v1363
      %1518 = vmatpush.msra.mxu0 %v1360
      %1519 = vmatpush.msra.mxu0 %v1357
      %1520 = vmatpush.msra.mxu0 %v1354
      %1521 = vmatpush.msra.mxu0 %v1351
      %1522 = vmatpush.msra.mxu0 %v1348
      %1523 = vmatpush.msra.mxu0 %v1345
      %1524 = vmatpush.msra.mxu0 %v1342
      %1525 = vmatpush.msra.mxu0 %v1339
      %1526 = vmatmul.f32.gmra.mxu0 %v1335
      %v1527 = vpop.f32.mrf.mxu0
      %v1528 = vadd.f32 0.0, %v1527
      %1529 = vdwg.mxu0
      %1530 = vmatpush.msra.mxu0 %v1432
      %1531 = vmatpush.msra.mxu0 %v1429
      %1532 = vmatpush.msra.mxu0 %v1426
      %1533 = vmatpush.msra.mxu0 %v1423
      %1534 = vmatpush.msra.mxu0 %v1420
      %1535 = vmatpush.msra.mxu0 %v1417
      %1536 = vmatpush.msra.mxu0 %v1414
      %1537 = vmatpush.msra.mxu0 %v1411
      %1538 = vmatpush.msra.mxu0 %v1408
      %1539 = vmatpush.msra.mxu0 %v1405
      %1540 = vmatpush.msra.mxu0 %v1402
      %1541 = vmatpush.msra.mxu0 %v1399
      %1542 = vmatpush.msra.mxu0 %v1396
      %1543 = vmatpush.msra.mxu0 %v1393
      %1544 = vmatpush.msra.mxu0 %v1390
      %1545 = vmatpush.msra.mxu0 %v1387
      %1546 = vmatmul.f32.gmra.mxu0 %v1336
      %v1547 = vpop.f32.mrf.mxu0
      %v1548 = vadd.f32 %v1528, %v1547
      %1549 = vdwg.mxu0
      %1550 = vmatpush.msra.mxu0 0.0
      %1551 = vmatpush.msra.mxu0 0.0
      %1552 = vmatpush.msra.mxu0 0.0
      %1553 = vmatpush.msra.mxu0 0.0
      %1554 = vmatpush.msra.mxu0 0.0
      %1555 = vmatpush.msra.mxu0 0.0
      %1556 = vmatpush.msra.mxu0 0.0
      %1557 = vmatpush.msra.mxu0 0.0
      %1558 = vmatpush.msra.mxu0 0.0
      %1559 = vmatpush.msra.mxu0 0.0
      %1560 = vmatpush.msra.mxu0 0.0
      %1561 = vmatpush.msra.mxu0 0.0
      %1562 = vmatpush.msra.mxu0 %v1444
      %1563 = vmatpush.msra.mxu0 %v1441
      %1564 = vmatpush.msra.mxu0 %v1438
      %1565 = vmatpush.msra.mxu0 %v1435
      %1566 = vmatmul.f32.gmra.mxu0 %v1448
      %v1567 = vpop.f32.mrf.mxu0
      %v1568 = vadd.f32 %v1548, %v1567
      %1569 = vdwg.mxu0
      %1570 = vmatpush.msra.mxu0 %v1385
      %1571 = vmatpush.msra.mxu0 %v1382
      %1572 = vmatpush.msra.mxu0 %v1379
      %1573 = vmatpush.msra.mxu0 %v1376
      %1574 = vmatpush.msra.mxu0 %v1373
      %1575 = vmatpush.msra.mxu0 %v1370
      %1576 = vmatpush.msra.mxu0 %v1367
      %1577 = vmatpush.msra.mxu0 %v1364
      %1578 = vmatpush.msra.mxu0 %v1361
      %1579 = vmatpush.msra.mxu0 %v1358
      %1580 = vmatpush.msra.mxu0 %v1355
      %1581 = vmatpush.msra.mxu0 %v1352
      %1582 = vmatpush.msra.mxu0 %v1349
      %1583 = vmatpush.msra.mxu0 %v1346
      %1584 = vmatpush.msra.mxu0 %v1343
      %1585 = vmatpush.msra.mxu0 %v1340
      %1586 = vmatmul.f32.gmra.mxu0 %v1335
      %v1587 = vpop.f32.mrf.mxu0
      %v1588 = vadd.f32 0.0, %v1587
      %1589 = vdwg.mxu0
      %1590 = vmatpush.msra.mxu0 %v1433
      %1591 = vmatpush.msra.mxu0 %v1430
      %1592 = vmatpush.msra.mxu0 %v1427
      %1593 = vmatpush.msra.mxu0 %v1424
      %1594 = vmatpush.msra.mxu0 %v1421
      %1595 = vmatpush.msra.mxu0 %v1418
      %1596 = vmatpush.msra.mxu0 %v1415
      %1597 = vmatpush.msra.mxu0 %v1412
      %1598 = vmatpush.msra.mxu0 %v1409
      %1599 = vmatpush.msra.mxu0 %v1406
      %1600 = vmatpush.msra.mxu0 %v1403
      %1601 = vmatpush.msra.mxu0 %v1400
      %1602 = vmatpush.msra.mxu0 %v1397
      %1603 = vmatpush.msra.mxu0 %v1394
      %1604 = vmatpush.msra.mxu0 %v1391
      %1605 = vmatpush.msra.mxu0 %v1388
      %1606 = vmatmul.f32.gmra.mxu0 %v1336
      %v1607 = vpop.f32.mrf.mxu0
      %v1608 = vadd.f32 %v1588, %v1607
      %1609 = vdwg.mxu0
      %1610 = vmatpush.msra.mxu0 0.0
      %1611 = vmatpush.msra.mxu0 0.0
      %1612 = vmatpush.msra.mxu0 0.0
      %1613 = vmatpush.msra.mxu0 0.0
      %1614 = vmatpush.msra.mxu0 0.0
      %1615 = vmatpush.msra.mxu0 0.0
      %1616 = vmatpush.msra.mxu0 0.0
      %1617 = vmatpush.msra.mxu0 0.0
      %1618 = vmatpush.msra.mxu0 0.0
      %1619 = vmatpush.msra.mxu0 0.0
      %1620 = vmatpush.msra.mxu0 0.0
      %1621 = vmatpush.msra.mxu0 0.0
      %1622 = vmatpush.msra.mxu0 %v1445
      %1623 = vmatpush.msra.mxu0 %v1442
      %1624 = vmatpush.msra.mxu0 %v1439
      %1625 = vmatpush.msra.mxu0 %v1436
      %1626 = vmatmul.f32.gmra.mxu0 %v1448
      %v1627 = vpop.f32.mrf.mxu0
      %v1628 = vadd.f32 %v1608, %v1627
      %1629 = vdwg.mxu0
      %v1630 = vpack.c.bf16 %v1508, %v1508
      %v1631 = vpack.c.bf16 %v1568, %v1568
      %v1632 = vpack.c.bf16 %v1628, %v1628
      %v1633 = vld [vmem:[%s4] sm:$0xf]
      %v1634 = vld [vmem:[%s4 + $0x4] sm:$0xf]
      %v1637 = vunpack.c.l.b16 %v1633
      %v1638 = vunpack.c.l.b16 %v1634
      %v1639 = vpack.c.b16 %v1638, %v1637
      %1640 = vrot.lane.b32.xlu0 %v1639, 120
      %v1641 = vpop.permute.xlu0 %1640
      %1645 = vrot.lane.b32.xlu0 %v1630, 127
      %v1646 = vpop.permute.xlu0 %1645
      %1647 = vrot.lane.b32.xlu0 %v1631, 127
      %v1648 = vpop.permute.xlu0 %1647
      %1649 = vrot.lane.b32.xlu0 %v1632, 127
      %v1650 = vpop.permute.xlu0 %1649
      %v1651 = vsel %vm758, %v1646, %v1648
      %v1652 = vsel %vm758, %v1648, %v1650
      %v1654 = vsel %vm761, %v1641, 0
      %v1657 = vsel %vm765, %v1651, 0
      %v1660 = vsel %vm765, %v1652, 0
      %v1663 = vsel %vm765, %v1650, 0
      %1665 = vmatpush.bf16.msra.mxu0 0
      %1666 = vmatpush.bf16.msra.mxu0 0
      %1667 = vmatpush.bf16.msra.mxu0 0
      %1668 = vmatpush.bf16.msra.mxu0 0
      %1669 = vmatpush.bf16.msra.mxu0 0
      %1670 = vmatpush.bf16.msra.mxu0 0
      %1671 = vmatpush.bf16.msra.mxu0 0
      %1672 = vmatpush.bf16.msra.mxu0 %v1657
      %1673 = vmatmul.bf16.gmra.mxu0 %v1654
      %v1674 = vpop.f32.mrf.mxu0
      %v1675 = vadd.f32 0.0, %v1674
      %v1676 = vpop.f32.mrf.mxu0
      %v1677 = vadd.f32 0.0, %v1676
      %1678 = vdwg.mxu0
      %1679 = vmatpush.bf16.msra.mxu0 0
      %1680 = vmatpush.bf16.msra.mxu0 0
      %1681 = vmatpush.bf16.msra.mxu0 0
      %1682 = vmatpush.bf16.msra.mxu0 0
      %1683 = vmatpush.bf16.msra.mxu0 0
      %1684 = vmatpush.bf16.msra.mxu0 0
      %1685 = vmatpush.bf16.msra.mxu0 0
      %1686 = vmatpush.bf16.msra.mxu0 %v1660
      %1687 = vmatmul.bf16.gmra.mxu0 %v1654
      %v1688 = vpop.f32.mrf.mxu0
      %v1689 = vadd.f32 0.0, %v1688
      %v1690 = vpop.f32.mrf.mxu0
      %v1691 = vadd.f32 0.0, %v1690
      %1692 = vdwg.mxu0
      %1693 = vmatpush.bf16.msra.mxu0 0
      %1694 = vmatpush.bf16.msra.mxu0 0
      %1695 = vmatpush.bf16.msra.mxu0 0
      %1696 = vmatpush.bf16.msra.mxu0 0
      %1697 = vmatpush.bf16.msra.mxu0 0
      %1698 = vmatpush.bf16.msra.mxu0 0
      %1699 = vmatpush.bf16.msra.mxu0 0
      %1700 = vmatpush.bf16.msra.mxu0 %v1663
      %1701 = vmatmul.bf16.gmra.mxu0 %v1654
      %v1702 = vpop.f32.mrf.mxu0
      %v1703 = vadd.f32 0.0, %v1702
      %v1704 = vpop.f32.mrf.mxu0
      %v1705 = vadd.f32 0.0, %v1704
      %1706 = vdwg.mxu0
      %v1708 = vsel %vm761, %v1639, 0
      %v1711 = vsel %vm765, %v1630, 0
      %v1714 = vsel %vm765, %v1631, 0
      %v1717 = vsel %vm765, %v1632, 0
      %1719 = vmatpush.bf16.msra.mxu0 0
      %1720 = vmatpush.bf16.msra.mxu0 0
      %1721 = vmatpush.bf16.msra.mxu0 0
      %1722 = vmatpush.bf16.msra.mxu0 0
      %1723 = vmatpush.bf16.msra.mxu0 0
      %1724 = vmatpush.bf16.msra.mxu0 0
      %1725 = vmatpush.bf16.msra.mxu0 0
      %1726 = vmatpush.bf16.msra.mxu0 %v1711
      %1727 = vmatmul.bf16.gmra.mxu0 %v1708
      %v1728 = vpop.f32.mrf.mxu0
      %v1729 = vadd.f32 %v1675, %v1728
      %v1730 = vpop.f32.mrf.mxu0
      %v1731 = vadd.f32 %v1677, %v1730
      %1732 = vdwg.mxu0
      %1733 = vmatpush.bf16.msra.mxu0 0
      %1734 = vmatpush.bf16.msra.mxu0 0
      %1735 = vmatpush.bf16.msra.mxu0 0
      %1736 = vmatpush.bf16.msra.mxu0 0
      %1737 = vmatpush.bf16.msra.mxu0 0
      %1738 = vmatpush.bf16.msra.mxu0 0
      %1739 = vmatpush.bf16.msra.mxu0 0
      %1740 = vmatpush.bf16.msra.mxu0 %v1714
      %1741 = vmatmul.bf16.gmra.mxu0 %v1708
      %v1742 = vpop.f32.mrf.mxu0
      %v1743 = vadd.f32 %v1689, %v1742
      %v1744 = vpop.f32.mrf.mxu0
      %v1745 = vadd.f32 %v1691, %v1744
      %1746 = vdwg.mxu0
      %1747 = vmatpush.bf16.msra.mxu0 0
      %1748 = vmatpush.bf16.msra.mxu0 0
      %1749 = vmatpush.bf16.msra.mxu0 0
      %1750 = vmatpush.bf16.msra.mxu0 0
      %1751 = vmatpush.bf16.msra.mxu0 0
      %1752 = vmatpush.bf16.msra.mxu0 0
      %1753 = vmatpush.bf16.msra.mxu0 0
      %1754 = vmatpush.bf16.msra.mxu0 %v1717
      %1755 = vmatmul.bf16.gmra.mxu0 %v1708
      %v1756 = vpop.f32.mrf.mxu0
      %v1757 = vadd.f32 %v1703, %v1756
      %v1758 = vpop.f32.mrf.mxu0
      %v1759 = vadd.f32 %v1705, %v1758
      %1760 = vdwg.mxu0
      %1761 = vrot.lane.b32.xlu0 %v1639, 112
      %v1762 = vpop.permute.xlu0 %1761
      %1763 = vrot.lane.b32.xlu0 %v1630, 126
      %v1764 = vpop.permute.xlu0 %1763
      %1765 = vrot.lane.b32.xlu0 %v1631, 126
      %v1766 = vpop.permute.xlu0 %1765
      %1767 = vrot.lane.b32.xlu0 %v1632, 126
      %v1768 = vpop.permute.xlu0 %1767
      %v1769 = vsel %vm873, %v1764, %v1766
      %v1770 = vsel %vm873, %v1766, %v1768
      %v1772 = vsel %vm761, %v1762, 0
      %v1775 = vsel %vm765, %v1769, 0
      %v1778 = vsel %vm765, %v1770, 0
      %v1781 = vsel %vm765, %v1768, 0
      %1783 = vmatpush.bf16.msra.mxu0 0
      %1784 = vmatpush.bf16.msra.mxu0 0
      %1785 = vmatpush.bf16.msra.mxu0 0
      %1786 = vmatpush.bf16.msra.mxu0 0
      %1787 = vmatpush.bf16.msra.mxu0 0
      %1788 = vmatpush.bf16.msra.mxu0 0
      %1789 = vmatpush.bf16.msra.mxu0 0
      %1790 = vmatpush.bf16.msra.mxu0 %v1775
      %1791 = vmatmul.bf16.gmra.mxu0 %v1772
      %v1792 = vpop.f32.mrf.mxu0
      %v1793 = vadd.f32 0.0, %v1792
      %v1794 = vpop.f32.mrf.mxu0
      %v1795 = vadd.f32 0.0, %v1794
      %1796 = vdwg.mxu0
      %1797 = vmatpush.bf16.msra.mxu0 0
      %1798 = vmatpush.bf16.msra.mxu0 0
      %1799 = vmatpush.bf16.msra.mxu0 0
      %1800 = vmatpush.bf16.msra.mxu0 0
      %1801 = vmatpush.bf16.msra.mxu0 0
      %1802 = vmatpush.bf16.msra.mxu0 0
      %1803 = vmatpush.bf16.msra.mxu0 0
      %1804 = vmatpush.bf16.msra.mxu0 %v1778
      %1805 = vmatmul.bf16.gmra.mxu0 %v1772
      %v1806 = vpop.f32.mrf.mxu0
      %v1807 = vadd.f32 0.0, %v1806
      %v1808 = vpop.f32.mrf.mxu0
      %v1809 = vadd.f32 0.0, %v1808
      %1810 = vdwg.mxu0
      %1811 = vmatpush.bf16.msra.mxu0 0
      %1812 = vmatpush.bf16.msra.mxu0 0
      %1813 = vmatpush.bf16.msra.mxu0 0
      %1814 = vmatpush.bf16.msra.mxu0 0
      %1815 = vmatpush.bf16.msra.mxu0 0
      %1816 = vmatpush.bf16.msra.mxu0 0
      %1817 = vmatpush.bf16.msra.mxu0 0
      %1818 = vmatpush.bf16.msra.mxu0 %v1781
      %1819 = vmatmul.bf16.gmra.mxu0 %v1772
      %v1820 = vpop.f32.mrf.mxu0
      %v1821 = vadd.f32 0.0, %v1820
      %v1822 = vpop.f32.mrf.mxu0
      %v1823 = vadd.f32 0.0, %v1822
      %1824 = vdwg.mxu0
      %v1825 = vadd.f32 %v1729, %v1793
      %v1826 = vadd.f32 %v1743, %v1807
      %v1827 = vadd.f32 %v1757, %v1821
      %v1828 = vadd.f32 %v1731, %v1795
      %v1829 = vadd.f32 %v1745, %v1809
      %v1830 = vadd.f32 %v1759, %v1823
      %1831 = vrot.lane.b32.xlu0 %v1639, 104
      %v1832 = vpop.permute.xlu0 %1831
      %1833 = vrot.lane.b32.xlu0 %v1630, 110
      %v1834 = vpop.permute.xlu0 %1833
      %1835 = vrot.lane.b32.xlu0 %v1631, 110
      %v1836 = vpop.permute.xlu0 %1835
      %1837 = vrot.lane.b32.xlu0 %v1632, 110
      %v1838 = vpop.permute.xlu0 %1837
      %v1839 = vsel %vm938, %v1834, %v1836
      %v1840 = vsel %vm938, %v1836, %v1838
      %v1842 = vsel %vm761, %v1832, 0
      %v1845 = vsel %vm765, %v1839, 0
      %v1848 = vsel %vm765, %v1840, 0
      %v1851 = vsel %vm765, %v1838, 0
      %1853 = vmatpush.bf16.msra.mxu0 0
      %1854 = vmatpush.bf16.msra.mxu0 0
      %1855 = vmatpush.bf16.msra.mxu0 0
      %1856 = vmatpush.bf16.msra.mxu0 0
      %1857 = vmatpush.bf16.msra.mxu0 0
      %1858 = vmatpush.bf16.msra.mxu0 0
      %1859 = vmatpush.bf16.msra.mxu0 0
      %1860 = vmatpush.bf16.msra.mxu0 %v1845
      %1861 = vmatmul.bf16.gmra.mxu0 %v1842
      %v1862 = vpop.f32.mrf.mxu0
      %v1863 = vadd.f32 0.0, %v1862
      %v1864 = vpop.f32.mrf.mxu0
      %v1865 = vadd.f32 0.0, %v1864
      %1866 = vdwg.mxu0
      %1867 = vmatpush.bf16.msra.mxu0 0
      %1868 = vmatpush.bf16.msra.mxu0 0
      %1869 = vmatpush.bf16.msra.mxu0 0
      %1870 = vmatpush.bf16.msra.mxu0 0
      %1871 = vmatpush.bf16.msra.mxu0 0
      %1872 = vmatpush.bf16.msra.mxu0 0
      %1873 = vmatpush.bf16.msra.mxu0 0
      %1874 = vmatpush.bf16.msra.mxu0 %v1848
      %1875 = vmatmul.bf16.gmra.mxu0 %v1842
      %v1876 = vpop.f32.mrf.mxu0
      %v1877 = vadd.f32 0.0, %v1876
      %v1878 = vpop.f32.mrf.mxu0
      %v1879 = vadd.f32 0.0, %v1878
      %1880 = vdwg.mxu0
      %1881 = vmatpush.bf16.msra.mxu0 0
      %1882 = vmatpush.bf16.msra.mxu0 0
      %1883 = vmatpush.bf16.msra.mxu0 0
      %1884 = vmatpush.bf16.msra.mxu0 0
      %1885 = vmatpush.bf16.msra.mxu0 0
      %1886 = vmatpush.bf16.msra.mxu0 0
      %1887 = vmatpush.bf16.msra.mxu0 0
      %1888 = vmatpush.bf16.msra.mxu0 %v1851
      %1889 = vmatmul.bf16.gmra.mxu0 %v1842
      %v1890 = vpop.f32.mrf.mxu0
      %v1891 = vadd.f32 0.0, %v1890
      %v1892 = vpop.f32.mrf.mxu0
      %v1893 = vadd.f32 0.0, %v1892
      %1894 = vdwg.mxu0
      %v1895 = vadd.f32 %v1825, %v1863
      %v1896 = vadd.f32 %v1826, %v1877
      %v1897 = vadd.f32 %v1827, %v1891
      %v1898 = vadd.f32 %v1828, %v1865
      %v1899 = vadd.f32 %v1829, %v1879
      %v1900 = vadd.f32 %v1830, %v1893
      %1901 = vrot.lane.b32.xlu0 %v1639, 96
      %v1902 = vpop.permute.xlu0 %1901
      %1903 = vrot.lane.b32.xlu0 %v1630, 109
      %v1904 = vpop.permute.xlu0 %1903
      %1905 = vrot.lane.b32.xlu0 %v1631, 109
      %v1906 = vpop.permute.xlu0 %1905
      %1907 = vrot.lane.b32.xlu0 %v1632, 109
      %v1908 = vpop.permute.xlu0 %1907
      %v1909 = vsel %vm1003, %v1904, %v1906
      %v1910 = vsel %vm1003, %v1906, %v1908
      %v1912 = vsel %vm761, %v1902, 0
      %v1915 = vsel %vm765, %v1909, 0
      %v1918 = vsel %vm765, %v1910, 0
      %v1921 = vsel %vm765, %v1908, 0
      %1923 = vmatpush.bf16.msra.mxu0 0
      %1924 = vmatpush.bf16.msra.mxu0 0
      %1925 = vmatpush.bf16.msra.mxu0 0
      %1926 = vmatpush.bf16.msra.mxu0 0
      %1927 = vmatpush.bf16.msra.mxu0 0
      %1928 = vmatpush.bf16.msra.mxu0 0
      %1929 = vmatpush.bf16.msra.mxu0 0
      %1930 = vmatpush.bf16.msra.mxu0 %v1915
      %1931 = vmatmul.bf16.gmra.mxu0 %v1912
      %v1932 = vpop.f32.mrf.mxu0
      %v1933 = vadd.f32 0.0, %v1932
      %v1934 = vpop.f32.mrf.mxu0
      %v1935 = vadd.f32 0.0, %v1934
      %1936 = vdwg.mxu0
      %1937 = vmatpush.bf16.msra.mxu0 0
      %1938 = vmatpush.bf16.msra.mxu0 0
      %1939 = vmatpush.bf16.msra.mxu0 0
      %1940 = vmatpush.bf16.msra.mxu0 0
      %1941 = vmatpush.bf16.msra.mxu0 0
      %1942 = vmatpush.bf16.msra.mxu0 0
      %1943 = vmatpush.bf16.msra.mxu0 0
      %1944 = vmatpush.bf16.msra.mxu0 %v1918
      %1945 = vmatmul.bf16.gmra.mxu0 %v1912
      %v1946 = vpop.f32.mrf.mxu0
      %v1947 = vadd.f32 0.0, %v1946
      %v1948 = vpop.f32.mrf.mxu0
      %v1949 = vadd.f32 0.0, %v1948
      %1950 = vdwg.mxu0
      %1951 = vmatpush.bf16.msra.mxu0 0
      %1952 = vmatpush.bf16.msra.mxu0 0
      %1953 = vmatpush.bf16.msra.mxu0 0
      %1954 = vmatpush.bf16.msra.mxu0 0
      %1955 = vmatpush.bf16.msra.mxu0 0
      %1956 = vmatpush.bf16.msra.mxu0 0
      %1957 = vmatpush.bf16.msra.mxu0 0
      %1958 = vmatpush.bf16.msra.mxu0 %v1921
      %1959 = vmatmul.bf16.gmra.mxu0 %v1912
      %v1960 = vpop.f32.mrf.mxu0
      %v1961 = vadd.f32 0.0, %v1960
      %v1962 = vpop.f32.mrf.mxu0
      %v1963 = vadd.f32 0.0, %v1962
      %1964 = vdwg.mxu0
      %v1965 = vadd.f32 %v1895, %v1933
      %v1966 = vadd.f32 %v1896, %v1947
      %v1967 = vadd.f32 %v1897, %v1961
      %v1968 = vadd.f32 %v1898, %v1935
      %v1969 = vadd.f32 %v1899, %v1949
      %v1970 = vadd.f32 %v1900, %v1963
      %1971 = vrot.lane.b32.xlu0 %v1639, 88
      %v1972 = vpop.permute.xlu0 %1971
      %1973 = vrot.lane.b32.xlu0 %v1630, 108
      %v1974 = vpop.permute.xlu0 %1973
      %1975 = vrot.lane.b32.xlu0 %v1631, 108
      %v1976 = vpop.permute.xlu0 %1975
      %1977 = vrot.lane.b32.xlu0 %v1632, 108
      %v1978 = vpop.permute.xlu0 %1977
      %v1979 = vsel %vm1068, %v1974, %v1976
      %v1980 = vsel %vm1068, %v1976, %v1978
      %v1982 = vsel %vm761, %v1972, 0
      %v1985 = vsel %vm765, %v1979, 0
      %v1988 = vsel %vm765, %v1980, 0
      %v1991 = vsel %vm765, %v1978, 0
      %1993 = vmatpush.bf16.msra.mxu0 0
      %1994 = vmatpush.bf16.msra.mxu0 0
      %1995 = vmatpush.bf16.msra.mxu0 0
      %1996 = vmatpush.bf16.msra.mxu0 0
      %1997 = vmatpush.bf16.msra.mxu0 0
      %1998 = vmatpush.bf16.msra.mxu0 0
      %1999 = vmatpush.bf16.msra.mxu0 0
      %2000 = vmatpush.bf16.msra.mxu0 %v1985
      %2001 = vmatmul.bf16.gmra.mxu0 %v1982
      %v2002 = vpop.f32.mrf.mxu0
      %v2003 = vadd.f32 0.0, %v2002
      %v2004 = vpop.f32.mrf.mxu0
      %v2005 = vadd.f32 0.0, %v2004
      %2006 = vdwg.mxu0
      %2007 = vmatpush.bf16.msra.mxu0 0
      %2008 = vmatpush.bf16.msra.mxu0 0
      %2009 = vmatpush.bf16.msra.mxu0 0
      %2010 = vmatpush.bf16.msra.mxu0 0
      %2011 = vmatpush.bf16.msra.mxu0 0
      %2012 = vmatpush.bf16.msra.mxu0 0
      %2013 = vmatpush.bf16.msra.mxu0 0
      %2014 = vmatpush.bf16.msra.mxu0 %v1988
      %2015 = vmatmul.bf16.gmra.mxu0 %v1982
      %v2016 = vpop.f32.mrf.mxu0
      %v2017 = vadd.f32 0.0, %v2016
      %v2018 = vpop.f32.mrf.mxu0
      %v2019 = vadd.f32 0.0, %v2018
      %2020 = vdwg.mxu0
      %2021 = vmatpush.bf16.msra.mxu0 0
      %2022 = vmatpush.bf16.msra.mxu0 0
      %2023 = vmatpush.bf16.msra.mxu0 0
      %2024 = vmatpush.bf16.msra.mxu0 0
      %2025 = vmatpush.bf16.msra.mxu0 0
      %2026 = vmatpush.bf16.msra.mxu0 0
      %2027 = vmatpush.bf16.msra.mxu0 0
      %2028 = vmatpush.bf16.msra.mxu0 %v1991
      %2029 = vmatmul.bf16.gmra.mxu0 %v1982
      %v2030 = vpop.f32.mrf.mxu0
      %v2031 = vadd.f32 0.0, %v2030
      %v2032 = vpop.f32.mrf.mxu0
      %v2033 = vadd.f32 0.0, %v2032
      %2034 = vdwg.mxu0
      %v2035 = vadd.f32 %v1965, %v2003
      %v2036 = vadd.f32 %v1966, %v2017
      %v2037 = vadd.f32 %v1967, %v2031
      %v2038 = vadd.f32 %v1968, %v2005
      %v2039 = vadd.f32 %v1969, %v2019
      %v2040 = vadd.f32 %v1970, %v2033
      %2041 = vrot.lane.b32.xlu0 %v1639, 80
      %v2042 = vpop.permute.xlu0 %2041
      %2043 = vrot.lane.b32.xlu0 %v1630, 92
      %v2044 = vpop.permute.xlu0 %2043
      %2045 = vrot.lane.b32.xlu0 %v1631, 92
      %v2046 = vpop.permute.xlu0 %2045
      %2047 = vrot.lane.b32.xlu0 %v1632, 92
      %v2048 = vpop.permute.xlu0 %2047
      %v2049 = vsel %vm1133, %v2044, %v2046
      %v2050 = vsel %vm1133, %v2046, %v2048
      %v2052 = vsel %vm761, %v2042, 0
      %v2055 = vsel %vm765, %v2049, 0
      %v2058 = vsel %vm765, %v2050, 0
      %v2061 = vsel %vm765, %v2048, 0
      %2063 = vmatpush.bf16.msra.mxu0 0
      %2064 = vmatpush.bf16.msra.mxu0 0
      %2065 = vmatpush.bf16.msra.mxu0 0
      %2066 = vmatpush.bf16.msra.mxu0 0
      %2067 = vmatpush.bf16.msra.mxu0 0
      %2068 = vmatpush.bf16.msra.mxu0 0
      %2069 = vmatpush.bf16.msra.mxu0 0
      %2070 = vmatpush.bf16.msra.mxu0 %v2055
      %2071 = vmatmul.bf16.gmra.mxu0 %v2052
      %v2072 = vpop.f32.mrf.mxu0
      %v2073 = vadd.f32 0.0, %v2072
      %v2074 = vpop.f32.mrf.mxu0
      %v2075 = vadd.f32 0.0, %v2074
      %2076 = vdwg.mxu0
      %2077 = vmatpush.bf16.msra.mxu0 0
      %2078 = vmatpush.bf16.msra.mxu0 0
      %2079 = vmatpush.bf16.msra.mxu0 0
      %2080 = vmatpush.bf16.msra.mxu0 0
      %2081 = vmatpush.bf16.msra.mxu0 0
      %2082 = vmatpush.bf16.msra.mxu0 0
      %2083 = vmatpush.bf16.msra.mxu0 0
      %2084 = vmatpush.bf16.msra.mxu0 %v2058
      %2085 = vmatmul.bf16.gmra.mxu0 %v2052
      %v2086 = vpop.f32.mrf.mxu0
      %v2087 = vadd.f32 0.0, %v2086
      %v2088 = vpop.f32.mrf.mxu0
      %v2089 = vadd.f32 0.0, %v2088
      %2090 = vdwg.mxu0
      %2091 = vmatpush.bf16.msra.mxu0 0
      %2092 = vmatpush.bf16.msra.mxu0 0
      %2093 = vmatpush.bf16.msra.mxu0 0
      %2094 = vmatpush.bf16.msra.mxu0 0
      %2095 = vmatpush.bf16.msra.mxu0 0
      %2096 = vmatpush.bf16.msra.mxu0 0
      %2097 = vmatpush.bf16.msra.mxu0 0
      %2098 = vmatpush.bf16.msra.mxu0 %v2061
      %2099 = vmatmul.bf16.gmra.mxu0 %v2052
      %v2100 = vpop.f32.mrf.mxu0
      %v2101 = vadd.f32 0.0, %v2100
      %v2102 = vpop.f32.mrf.mxu0
      %v2103 = vadd.f32 0.0, %v2102
      %2104 = vdwg.mxu0
      %v2105 = vadd.f32 %v2035, %v2073
      %v2106 = vadd.f32 %v2036, %v2087
      %v2107 = vadd.f32 %v2037, %v2101
      %v2108 = vadd.f32 %v2038, %v2075
      %v2109 = vadd.f32 %v2039, %v2089
      %v2110 = vadd.f32 %v2040, %v2103
      %2111 = vrot.lane.b32.xlu0 %v1639, 72
      %v2112 = vpop.permute.xlu0 %2111
      %2113 = vrot.lane.b32.xlu0 %v1630, 91
      %v2114 = vpop.permute.xlu0 %2113
      %2115 = vrot.lane.b32.xlu0 %v1631, 91
      %v2116 = vpop.permute.xlu0 %2115
      %2117 = vrot.lane.b32.xlu0 %v1632, 91
      %v2118 = vpop.permute.xlu0 %2117
      %v2119 = vsel %vm1198, %v2114, %v2116
      %v2120 = vsel %vm1198, %v2116, %v2118
      %v2122 = vsel %vm761, %v2112, 0
      %v2125 = vsel %vm765, %v2119, 0
      %v2128 = vsel %vm765, %v2120, 0
      %v2131 = vsel %vm765, %v2118, 0
      %2133 = vmatpush.bf16.msra.mxu0 0
      %2134 = vmatpush.bf16.msra.mxu0 0
      %2135 = vmatpush.bf16.msra.mxu0 0
      %2136 = vmatpush.bf16.msra.mxu0 0
      %2137 = vmatpush.bf16.msra.mxu0 0
      %2138 = vmatpush.bf16.msra.mxu0 0
      %2139 = vmatpush.bf16.msra.mxu0 0
      %2140 = vmatpush.bf16.msra.mxu0 %v2125
      %2141 = vmatmul.bf16.gmra.mxu0 %v2122
      %v2142 = vpop.f32.mrf.mxu0
      %v2143 = vadd.f32 0.0, %v2142
      %v2144 = vpop.f32.mrf.mxu0
      %v2145 = vadd.f32 0.0, %v2144
      %2146 = vdwg.mxu0
      %2147 = vmatpush.bf16.msra.mxu0 0
      %2148 = vmatpush.bf16.msra.mxu0 0
      %2149 = vmatpush.bf16.msra.mxu0 0
      %2150 = vmatpush.bf16.msra.mxu0 0
      %2151 = vmatpush.bf16.msra.mxu0 0
      %2152 = vmatpush.bf16.msra.mxu0 0
      %2153 = vmatpush.bf16.msra.mxu0 0
      %2154 = vmatpush.bf16.msra.mxu0 %v2128
      %2155 = vmatmul.bf16.gmra.mxu0 %v2122
      %v2156 = vpop.f32.mrf.mxu0
      %v2157 = vadd.f32 0.0, %v2156
      %v2158 = vpop.f32.mrf.mxu0
      %v2159 = vadd.f32 0.0, %v2158
      %2160 = vdwg.mxu0
      %2161 = vmatpush.bf16.msra.mxu0 0
      %2162 = vmatpush.bf16.msra.mxu0 0
      %2163 = vmatpush.bf16.msra.mxu0 0
      %2164 = vmatpush.bf16.msra.mxu0 0
      %2165 = vmatpush.bf16.msra.mxu0 0
      %2166 = vmatpush.bf16.msra.mxu0 0
      %2167 = vmatpush.bf16.msra.mxu0 0
      %2168 = vmatpush.bf16.msra.mxu0 %v2131
      %2169 = vmatmul.bf16.gmra.mxu0 %v2122
      %v2170 = vpop.f32.mrf.mxu0
      %v2171 = vadd.f32 0.0, %v2170
      %v2172 = vpop.f32.mrf.mxu0
      %v2173 = vadd.f32 0.0, %v2172
      %2174 = vdwg.mxu0
      %v2175 = vadd.f32 %v2105, %v2143
      %v2176 = vadd.f32 %v2106, %v2157
      %v2177 = vadd.f32 %v2107, %v2171
      %v2178 = vadd.f32 %v2108, %v2145
      %v2179 = vadd.f32 %v2109, %v2159
      %v2180 = vadd.f32 %v2110, %v2173
      %2181 = vrot.lane.b32.xlu0 %v1639, 64
      %v2182 = vpop.permute.xlu0 %2181
      %2183 = vrot.lane.b32.xlu0 %v1630, 90
      %v2184 = vpop.permute.xlu0 %2183
      %2185 = vrot.lane.b32.xlu0 %v1631, 90
      %v2186 = vpop.permute.xlu0 %2185
      %2187 = vrot.lane.b32.xlu0 %v1632, 90
      %v2188 = vpop.permute.xlu0 %2187
      %v2189 = vsel %vm1263, %v2184, %v2186
      %v2190 = vsel %vm1263, %v2186, %v2188
      %v2192 = vsel %vm761, %v2182, 0
      %v2195 = vsel %vm765, %v2189, 0
      %v2198 = vsel %vm765, %v2190, 0
      %v2201 = vsel %vm765, %v2188, 0
      %2203 = vmatpush.bf16.msra.mxu0 0
      %2204 = vmatpush.bf16.msra.mxu0 0
      %2205 = vmatpush.bf16.msra.mxu0 0
      %2206 = vmatpush.bf16.msra.mxu0 0
      %2207 = vmatpush.bf16.msra.mxu0 0
      %2208 = vmatpush.bf16.msra.mxu0 0
      %2209 = vmatpush.bf16.msra.mxu0 0
      %2210 = vmatpush.bf16.msra.mxu0 %v2195
      %2211 = vmatmul.bf16.gmra.mxu0 %v2192
      %v2212 = vpop.f32.mrf.mxu0
      %v2213 = vadd.f32 0.0, %v2212
      %v2214 = vpop.f32.mrf.mxu0
      %v2215 = vadd.f32 0.0, %v2214
      %2216 = vdwg.mxu0
      %2217 = vmatpush.bf16.msra.mxu0 0
      %2218 = vmatpush.bf16.msra.mxu0 0
      %2219 = vmatpush.bf16.msra.mxu0 0
      %2220 = vmatpush.bf16.msra.mxu0 0
      %2221 = vmatpush.bf16.msra.mxu0 0
      %2222 = vmatpush.bf16.msra.mxu0 0
      %2223 = vmatpush.bf16.msra.mxu0 0
      %2224 = vmatpush.bf16.msra.mxu0 %v2198
      %2225 = vmatmul.bf16.gmra.mxu0 %v2192
      %v2226 = vpop.f32.mrf.mxu0
      %v2227 = vadd.f32 0.0, %v2226
      %v2228 = vpop.f32.mrf.mxu0
      %v2229 = vadd.f32 0.0, %v2228
      %2230 = vdwg.mxu0
      %2231 = vmatpush.bf16.msra.mxu0 0
      %2232 = vmatpush.bf16.msra.mxu0 0
      %2233 = vmatpush.bf16.msra.mxu0 0
      %2234 = vmatpush.bf16.msra.mxu0 0
      %2235 = vmatpush.bf16.msra.mxu0 0
      %2236 = vmatpush.bf16.msra.mxu0 0
      %2237 = vmatpush.bf16.msra.mxu0 0
      %2238 = vmatpush.bf16.msra.mxu0 %v2201
      %2239 = vmatmul.bf16.gmra.mxu0 %v2192
      %v2240 = vpop.f32.mrf.mxu0
      %v2241 = vadd.f32 0.0, %v2240
      %v2242 = vpop.f32.mrf.mxu0
      %v2243 = vadd.f32 0.0, %v2242
      %2244 = vdwg.mxu0
      %v2245 = vadd.f32 %v2175, %v2213
      %v2246 = vadd.f32 %v2176, %v2227
      %v2247 = vadd.f32 %v2177, %v2241
      %v2248 = vadd.f32 %v2178, %v2215
      %v2249 = vadd.f32 %v2179, %v2229
      %v2250 = vadd.f32 %v2180, %v2243
      %v2251 = vld [vmem:[%s5] sm:$0xff]
      %v2252 = vld [vmem:[%s5 + $0x8] sm:$0xff]
      %2254 = vset.pattern.permute.xlu0 0
      %2255 = vperm.xlu0 %2254, %v2251
      %v2256 = vpop.permute.xlu0 %2255
      %2259 = vset.pattern.permute.xlu0 0
      %2260 = vperm.xlu0 %2259, %v2252
      %v2261 = vpop.permute.xlu0 %2260
      %v2263 = vadd.f32 %v2245, %v2256
      %v2264 = vadd.f32 %v2246, %v2256
      %v2265 = vadd.f32 %v2247, %v2256
      %v2266 = vadd.f32 %v2248, %v2261
      %v2267 = vadd.f32 %v2249, %v2261
      %v2268 = vadd.f32 %v2250, %v2261
      %vm2269 = vcmp.ge.f32.partialorder %v2263, 0.0
      %vm2270 = vcmp.ge.f32.partialorder %v2264, 0.0
      %vm2271 = vcmp.ge.f32.partialorder %v2265, 0.0
      %vm2272 = vcmp.ge.f32.partialorder %v2266, 0.0
      %vm2273 = vcmp.ge.f32.partialorder %v2267, 0.0
      %vm2274 = vcmp.ge.f32.partialorder %v2268, 0.0
      %v2275 = vmul.f32 %v2263, 0.2
      %v2276 = vmul.f32 %v2264, 0.2
      %v2277 = vmul.f32 %v2265, 0.2
      %v2278 = vmul.f32 %v2266, 0.2
      %v2279 = vmul.f32 %v2267, 0.2
      %v2280 = vmul.f32 %v2268, 0.2
      %v2281 = vsel %vm2269, %v2263, %v2275
      %v2282 = vsel %vm2270, %v2264, %v2276
      %v2283 = vsel %vm2271, %v2265, %v2277
      %v2284 = vsel %vm2272, %v2266, %v2278
      %v2285 = vsel %vm2273, %v2267, %v2279
      %v2286 = vsel %vm2274, %v2268, %v2280
      %v2287 = vld [vmem:[%s6] sm:$0xff]
      %v2288 = vld [vmem:[%s6 + $0x8] sm:$0xff]
      %v2289 = vld [vmem:[%s6 + $0x10] sm:$0xff]
      %v2290 = vld [vmem:[%s6 + $0x18] sm:$0xff]
      %v2291 = vld [vmem:[%s6 + $0x20] sm:$0xff]
      %v2292 = vld [vmem:[%s6 + $0x28] sm:$0xff]
      %v2293 = vld [vmem:[%s6 + $0x30] sm:$0xff]
      %v2294 = vld [vmem:[%s6 + $0x38] sm:$0xff]
      %v2295 = vld [vmem:[%s6 + $0x40] sm:$0xff]
      %v2296 = vld [vmem:[%s6 + $0x48] sm:$0xff]
      %v2297 = vld [vmem:[%s6 + $0x50] sm:$0xff]
      %v2298 = vld [vmem:[%s6 + $0x58] sm:$0xff]
      %v2299 = vld [vmem:[%s6 + $0x60] sm:$0xff]
      %v2300 = vld [vmem:[%s6 + $0x68] sm:$0xff]
      %v2301 = vld [vmem:[%s6 + $0x70] sm:$0xff]
      %v2302 = vld [vmem:[%s6 + $0x78] sm:$0xff]
      %v2303 = vld [vmem:[%s6 + $0x80] sm:$0xff]
      %v2304 = vld [vmem:[%s6 + $0x88] sm:$0xff]
      %v2305 = vld [vmem:[%s6 + $0x90] sm:$0xff]
      %v2306 = vld [vmem:[%s6 + $0x98] sm:$0xff]
      %v2307 = vld [vmem:[%s6 + $0xa0] sm:$0xff]
      %v2308 = vld [vmem:[%s6 + $0xa8] sm:$0xff]
      %v2309 = vld [vmem:[%s6 + $0xb0] sm:$0xff]
      %v2310 = vld [vmem:[%s6 + $0xb8] sm:$0xff]
      %v2311 = vld [vmem:[%s6 + $0xc0] sm:$0xff]
      %v2312 = vld [vmem:[%s6 + $0xc8] sm:$0xff]
      %v2313 = vld [vmem:[%s6 + $0xd0] sm:$0xff]
      %v2314 = vld [vmem:[%s6 + $0xd8] sm:$0xff]
      %v2315 = vld [vmem:[%s6 + $0xe0] sm:$0xff]
      %v2316 = vld [vmem:[%s6 + $0xe8] sm:$0xff]
      %v2317 = vld [vmem:[%s6 + $0xf0] sm:$0xff]
      %v2318 = vld [vmem:[%s6 + $0xf8] sm:$0xff]
      %v2319 = vld [vmem:[%s6 + $0x100] sm:$0xff]
      %v2320 = vld [vmem:[%s6 + $0x108] sm:$0xff]
      %v2321 = vld [vmem:[%s6 + $0x110] sm:$0xff]
      %v2322 = vld [vmem:[%s6 + $0x118] sm:$0xff]
      %v2324 = vsel %vm1446, %v2283, 0
      %v2327 = vsel %vm1446, %v2286, 0
      %2329 = vmatpush.msra.mxu0 %v2302
      %2330 = vmatpush.msra.mxu0 %v2301
      %2331 = vmatpush.msra.mxu0 %v2300
      %2332 = vmatpush.msra.mxu0 %v2299
      %2333 = vmatpush.msra.mxu0 %v2298
      %2334 = vmatpush.msra.mxu0 %v2297
      %2335 = vmatpush.msra.mxu0 %v2296
      %2336 = vmatpush.msra.mxu0 %v2295
      %2337 = vmatpush.msra.mxu0 %v2294
      %2338 = vmatpush.msra.mxu0 %v2293
      %2339 = vmatpush.msra.mxu0 %v2292
      %2340 = vmatpush.msra.mxu0 %v2291
      %2341 = vmatpush.msra.mxu0 %v2290
      %2342 = vmatpush.msra.mxu0 %v2289
      %2343 = vmatpush.msra.mxu0 %v2288
      %2344 = vmatpush.msra.mxu0 %v2287
      %2345 = vmatmul.f32.gmra.mxu0 %v2281
      %v2346 = vpop.f32.mrf.mxu0
      %v2347 = vadd.f32 0.0, %v2346
      %2348 = vmatmul.f32.gmra.mxu0 %v2284
      %v2349 = vpop.f32.mrf.mxu0
      %v2350 = vadd.f32 0.0, %v2349
      %2351 = vdwg.mxu0
      %2352 = vmatpush.msra.mxu0 %v2318
      %2353 = vmatpush.msra.mxu0 %v2317
      %2354 = vmatpush.msra.mxu0 %v2316
      %2355 = vmatpush.msra.mxu0 %v2315
      %2356 = vmatpush.msra.mxu0 %v2314
      %2357 = vmatpush.msra.mxu0 %v2313
      %2358 = vmatpush.msra.mxu0 %v2312
      %2359 = vmatpush.msra.mxu0 %v2311
      %2360 = vmatpush.msra.mxu0 %v2310
      %2361 = vmatpush.msra.mxu0 %v2309
      %2362 = vmatpush.msra.mxu0 %v2308
      %2363 = vmatpush.msra.mxu0 %v2307
      %2364 = vmatpush.msra.mxu0 %v2306
      %2365 = vmatpush.msra.mxu0 %v2305
      %2366 = vmatpush.msra.mxu0 %v2304
      %2367 = vmatpush.msra.mxu0 %v2303
      %2368 = vmatmul.f32.gmra.mxu0 %v2282
      %v2369 = vpop.f32.mrf.mxu0
      %v2370 = vadd.f32 %v2347, %v2369
      %2371 = vmatmul.f32.gmra.mxu0 %v2285
      %v2372 = vpop.f32.mrf.mxu0
      %v2373 = vadd.f32 %v2350, %v2372
      %2374 = vdwg.mxu0
      %2375 = vmatpush.msra.mxu0 0.0
      %2376 = vmatpush.msra.mxu0 0.0
      %2377 = vmatpush.msra.mxu0 0.0
      %2378 = vmatpush.msra.mxu0 0.0
      %2379 = vmatpush.msra.mxu0 0.0
      %2380 = vmatpush.msra.mxu0 0.0
      %2381 = vmatpush.msra.mxu0 0.0
      %2382 = vmatpush.msra.mxu0 0.0
      %2383 = vmatpush.msra.mxu0 0.0
      %2384 = vmatpush.msra.mxu0 0.0
      %2385 = vmatpush.msra.mxu0 0.0
      %2386 = vmatpush.msra.mxu0 0.0
      %2387 = vmatpush.msra.mxu0 %v2322
      %2388 = vmatpush.msra.mxu0 %v2321
      %2389 = vmatpush.msra.mxu0 %v2320
      %2390 = vmatpush.msra.mxu0 %v2319
      %2391 = vmatmul.f32.gmra.mxu0 %v2324
      %v2392 = vpop.f32.mrf.mxu0
      %v2393 = vadd.f32 %v2370, %v2392
      %2394 = vmatmul.f32.gmra.mxu0 %v2327
      %v2395 = vpop.f32.mrf.mxu0
      %v2396 = vadd.f32 %v2373, %v2395
      %2397 = vdwg.mxu0
      %v2398 = vpack.c.bf16 %v2396, %v2393
      %v2399 = vld [vmem:[%s7] sm:$0xf]
      %v2400 = vld [vmem:[%s7 + $0x8] sm:$0xf]
      %v2403 = vunpack.c.l.b16 %v2399
      %v2404 = vunpack.c.l.b16 %v2400
      %v2405 = vpack.c.b16 %v2404, %v2403
      %2406 = vrot.lane.b32.xlu0 %v2405, 112
      %v2407 = vpop.permute.xlu0 %2406
      %2409 = vrot.lane.b32.xlu0 %v2398, 127
      %v2410 = vpop.permute.xlu0 %2409
      %vm2412 = vcmask 130048
      %v2414 = vsel %vm2412, %v2407, 0
      %2416 = vmatpush.bf16.msra.mxu0 0
      %2417 = vmatpush.bf16.msra.mxu0 0
      %2418 = vmatpush.bf16.msra.mxu0 0
      %2419 = vmatpush.bf16.msra.mxu0 0
      %2420 = vmatpush.bf16.msra.mxu0 0
      %2421 = vmatpush.bf16.msra.mxu0 0
      %2422 = vmatpush.bf16.msra.mxu0 0
      %2423 = vmatpush.bf16.msra.mxu0 %v2410
      %2424 = vmatmul.bf16.gmra.mxu0 %v2414
      %v2425 = vpop.f32.mrf.mxu0
      %v2426 = vadd.f32 0.0, %v2425
      %v2427 = vpop.f32.mrf.mxu0
      %v2428 = vadd.f32 0.0, %v2427
      %2429 = vdwg.mxu0
      %v2431 = vsel %vm2412, %v2405, 0
      %2433 = vmatpush.bf16.msra.mxu0 0
      %2434 = vmatpush.bf16.msra.mxu0 0
      %2435 = vmatpush.bf16.msra.mxu0 0
      %2436 = vmatpush.bf16.msra.mxu0 0
      %2437 = vmatpush.bf16.msra.mxu0 0
      %2438 = vmatpush.bf16.msra.mxu0 0
      %2439 = vmatpush.bf16.msra.mxu0 0
      %2440 = vmatpush.bf16.msra.mxu0 %v2398
      %2441 = vmatmul.bf16.gmra.mxu0 %v2431
      %v2442 = vpop.f32.mrf.mxu0
      %v2443 = vadd.f32 %v2426, %v2442
      %v2444 = vpop.f32.mrf.mxu0
      %v2445 = vadd.f32 %v2428, %v2444
      %2446 = vdwg.mxu0
      %2447 = vrot.lane.b32.xlu0 %v2405, 96
      %v2448 = vpop.permute.xlu0 %2447
      %2449 = vrot.lane.b32.xlu0 %v2398, 126
      %v2450 = vpop.permute.xlu0 %2449
      %v2453 = vsel %vm2412, %v2448, 0
      %2455 = vmatpush.bf16.msra.mxu0 0
      %2456 = vmatpush.bf16.msra.mxu0 0
      %2457 = vmatpush.bf16.msra.mxu0 0
      %2458 = vmatpush.bf16.msra.mxu0 0
      %2459 = vmatpush.bf16.msra.mxu0 0
      %2460 = vmatpush.bf16.msra.mxu0 0
      %2461 = vmatpush.bf16.msra.mxu0 0
      %2462 = vmatpush.bf16.msra.mxu0 %v2450
      %2463 = vmatmul.bf16.gmra.mxu0 %v2453
      %v2464 = vpop.f32.mrf.mxu0
      %v2465 = vadd.f32 0.0, %v2464
      %v2466 = vpop.f32.mrf.mxu0
      %v2467 = vadd.f32 0.0, %v2466
      %2468 = vdwg.mxu0
      %v2469 = vadd.f32 %v2443, %v2465
      %v2470 = vadd.f32 %v2445, %v2467
      %2471 = vrot.lane.b32.xlu0 %v2405, 80
      %v2472 = vpop.permute.xlu0 %2471
      %2473 = vrot.lane.b32.xlu0 %v2398, 118
      %v2474 = vpop.permute.xlu0 %2473
      %v2477 = vsel %vm2412, %v2472, 0
      %2479 = vmatpush.bf16.msra.mxu0 0
      %2480 = vmatpush.bf16.msra.mxu0 0
      %2481 = vmatpush.bf16.msra.mxu0 0
      %2482 = vmatpush.bf16.msra.mxu0 0
      %2483 = vmatpush.bf16.msra.mxu0 0
      %2484 = vmatpush.bf16.msra.mxu0 0
      %2485 = vmatpush.bf16.msra.mxu0 0
      %2486 = vmatpush.bf16.msra.mxu0 %v2474
      %2487 = vmatmul.bf16.gmra.mxu0 %v2477
      %v2488 = vpop.f32.mrf.mxu0
      %v2489 = vadd.f32 0.0, %v2488
      %v2490 = vpop.f32.mrf.mxu0
      %v2491 = vadd.f32 0.0, %v2490
      %2492 = vdwg.mxu0
      %v2493 = vadd.f32 %v2469, %v2489
      %v2494 = vadd.f32 %v2470, %v2491
      %2495 = vrot.lane.b32.xlu0 %v2405, 64
      %v2496 = vpop.permute.xlu0 %2495
      %2497 = vrot.lane.b32.xlu0 %v2398, 117
      %v2498 = vpop.permute.xlu0 %2497
      %v2501 = vsel %vm2412, %v2496, 0
      %2503 = vmatpush.bf16.msra.mxu0 0
      %2504 = vmatpush.bf16.msra.mxu0 0
      %2505 = vmatpush.bf16.msra.mxu0 0
      %2506 = vmatpush.bf16.msra.mxu0 0
      %2507 = vmatpush.bf16.msra.mxu0 0
      %2508 = vmatpush.bf16.msra.mxu0 0
      %2509 = vmatpush.bf16.msra.mxu0 0
      %2510 = vmatpush.bf16.msra.mxu0 %v2498
      %2511 = vmatmul.bf16.gmra.mxu0 %v2501
      %v2512 = vpop.f32.mrf.mxu0
      %v2513 = vadd.f32 0.0, %v2512
      %v2514 = vpop.f32.mrf.mxu0
      %v2515 = vadd.f32 0.0, %v2514
      %2516 = vdwg.mxu0
      %v2517 = vadd.f32 %v2493, %v2513
      %v2518 = vadd.f32 %v2494, %v2515
      %2519 = vrot.lane.b32.xlu0 %v2405, 48
      %v2520 = vpop.permute.xlu0 %2519
      %2521 = vrot.lane.b32.xlu0 %v2398, 116
      %v2522 = vpop.permute.xlu0 %2521
      %v2525 = vsel %vm2412, %v2520, 0
      %2527 = vmatpush.bf16.msra.mxu0 0
      %2528 = vmatpush.bf16.msra.mxu0 0
      %2529 = vmatpush.bf16.msra.mxu0 0
      %2530 = vmatpush.bf16.msra.mxu0 0
      %2531 = vmatpush.bf16.msra.mxu0 0
      %2532 = vmatpush.bf16.msra.mxu0 0
      %2533 = vmatpush.bf16.msra.mxu0 0
      %2534 = vmatpush.bf16.msra.mxu0 %v2522
      %2535 = vmatmul.bf16.gmra.mxu0 %v2525
      %v2536 = vpop.f32.mrf.mxu0
      %v2537 = vadd.f32 0.0, %v2536
      %v2538 = vpop.f32.mrf.mxu0
      %v2539 = vadd.f32 0.0, %v2538
      %2540 = vdwg.mxu0
      %v2541 = vadd.f32 %v2517, %v2537
      %v2542 = vadd.f32 %v2518, %v2539
      %2543 = vrot.lane.b32.xlu0 %v2405, 32
      %v2544 = vpop.permute.xlu0 %2543
      %2545 = vrot.lane.b32.xlu0 %v2398, 108
      %v2546 = vpop.permute.xlu0 %2545
      %v2549 = vsel %vm2412, %v2544, 0
      %2551 = vmatpush.bf16.msra.mxu0 0
      %2552 = vmatpush.bf16.msra.mxu0 0
      %2553 = vmatpush.bf16.msra.mxu0 0
      %2554 = vmatpush.bf16.msra.mxu0 0
      %2555 = vmatpush.bf16.msra.mxu0 0
      %2556 = vmatpush.bf16.msra.mxu0 0
      %2557 = vmatpush.bf16.msra.mxu0 0
      %2558 = vmatpush.bf16.msra.mxu0 %v2546
      %2559 = vmatmul.bf16.gmra.mxu0 %v2549
      %v2560 = vpop.f32.mrf.mxu0
      %v2561 = vadd.f32 0.0, %v2560
      %v2562 = vpop.f32.mrf.mxu0
      %v2563 = vadd.f32 0.0, %v2562
      %2564 = vdwg.mxu0
      %v2565 = vadd.f32 %v2541, %v2561
      %v2566 = vadd.f32 %v2542, %v2563
      %2567 = vrot.lane.b32.xlu0 %v2405, 16
      %v2568 = vpop.permute.xlu0 %2567
      %2569 = vrot.lane.b32.xlu0 %v2398, 107
      %v2570 = vpop.permute.xlu0 %2569
      %v2573 = vsel %vm2412, %v2568, 0
      %2575 = vmatpush.bf16.msra.mxu0 0
      %2576 = vmatpush.bf16.msra.mxu0 0
      %2577 = vmatpush.bf16.msra.mxu0 0
      %2578 = vmatpush.bf16.msra.mxu0 0
      %2579 = vmatpush.bf16.msra.mxu0 0
      %2580 = vmatpush.bf16.msra.mxu0 0
      %2581 = vmatpush.bf16.msra.mxu0 0
      %2582 = vmatpush.bf16.msra.mxu0 %v2570
      %2583 = vmatmul.bf16.gmra.mxu0 %v2573
      %v2584 = vpop.f32.mrf.mxu0
      %v2585 = vadd.f32 0.0, %v2584
      %v2586 = vpop.f32.mrf.mxu0
      %v2587 = vadd.f32 0.0, %v2586
      %2588 = vdwg.mxu0
      %v2589 = vadd.f32 %v2565, %v2585
      %v2590 = vadd.f32 %v2566, %v2587
      %v2591 = vld [vmem:[%s7 + $0x4] sm:$0xf]
      %v2592 = vld [vmem:[%s7 + $0xc] sm:$0xf]
      %v2595 = vunpack.c.l.b16 %v2591
      %v2596 = vunpack.c.l.b16 %v2592
      %v2597 = vpack.c.b16 %v2596, %v2595
      %2598 = vrot.lane.b32.xlu0 %v2398, 106
      %v2599 = vpop.permute.xlu0 %2598
      %v2602 = vsel %vm2412, %v2597, 0
      %2604 = vmatpush.bf16.msra.mxu0 0
      %2605 = vmatpush.bf16.msra.mxu0 0
      %2606 = vmatpush.bf16.msra.mxu0 0
      %2607 = vmatpush.bf16.msra.mxu0 0
      %2608 = vmatpush.bf16.msra.mxu0 0
      %2609 = vmatpush.bf16.msra.mxu0 0
      %2610 = vmatpush.bf16.msra.mxu0 0
      %2611 = vmatpush.bf16.msra.mxu0 %v2599
      %2612 = vmatmul.bf16.gmra.mxu0 %v2602
      %v2613 = vpop.f32.mrf.mxu0
      %v2614 = vadd.f32 0.0, %v2613
      %v2615 = vpop.f32.mrf.mxu0
      %v2616 = vadd.f32 0.0, %v2615
      %2617 = vdwg.mxu0
      %v2618 = vadd.f32 %v2589, %v2614
      %v2619 = vadd.f32 %v2590, %v2616
      %v2620 = vld [vmem:[%s8] sm:$0xff]
      %v2621 = vld [vmem:[%s8 + $0x8] sm:$0xff]
      %2623 = vset.pattern.permute.xlu0 0
      %2624 = vperm.xlu0 %2623, %v2620
      %v2625 = vpop.permute.xlu0 %2624
      %2628 = vset.pattern.permute.xlu0 0
      %2629 = vperm.xlu0 %2628, %v2621
      %v2630 = vpop.permute.xlu0 %2629
      %v2632 = vadd.f32 %v2618, %v2625
      %v2633 = vadd.f32 %v2619, %v2630
      %vm2634 = vcmp.ge.f32.partialorder %v2632, 0.0
      %vm2635 = vcmp.ge.f32.partialorder %v2633, 0.0
      %v2636 = vmul.f32 %v2632, 0.2
      %v2637 = vmul.f32 %v2633, 0.2
      %v2638 = vsel %vm2634, %v2632, %v2636
      %v2639 = vsel %vm2635, %v2633, %v2637
      %v2640 = vld [vmem:[%s9] sm:$0xff]
      %v2641 = vld [vmem:[%s9 + $0x8] sm:$0xff]
      %v2642 = vld [vmem:[%s9 + $0x10] sm:$0xff]
      %v2643 = vld [vmem:[%s9 + $0x18] sm:$0xff]
      %v2644 = vld [vmem:[%s9 + $0x20] sm:$0xff]
      %v2645 = vld [vmem:[%s9 + $0x28] sm:$0xff]
      %v2646 = vld [vmem:[%s9 + $0x30] sm:$0xff]
      %v2647 = vld [vmem:[%s9 + $0x38] sm:$0xff]
      %v2648 = vld [vmem:[%s9 + $0x40] sm:$0xff]
      %v2649 = vld [vmem:[%s9 + $0x48] sm:$0xff]
      %vm2650 = vcmask 654336
      %v2652 = vsel %vm2650, %v2638, 0
      %v2655 = vsel %vm2650, %v2639, 0
      %2657 = vmatpush.msra.mxu0 0.0
      %2658 = vmatpush.msra.mxu0 0.0
      %2659 = vmatpush.msra.mxu0 0.0
      %2660 = vmatpush.msra.mxu0 0.0
      %2661 = vmatpush.msra.mxu0 0.0
      %2662 = vmatpush.msra.mxu0 0.0
      %2663 = vmatpush.msra.mxu0 %v2649
      %2664 = vmatpush.msra.mxu0 %v2648
      %2665 = vmatpush.msra.mxu0 %v2647
      %2666 = vmatpush.msra.mxu0 %v2646
      %2667 = vmatpush.msra.mxu0 %v2645
      %2668 = vmatpush.msra.mxu0 %v2644
      %2669 = vmatpush.msra.mxu0 %v2643
      %2670 = vmatpush.msra.mxu0 %v2642
      %2671 = vmatpush.msra.mxu0 %v2641
      %2672 = vmatpush.msra.mxu0 %v2640
      %2673 = vmatmul.f32.gmra.mxu0 %v2652
      %v2674 = vpop.f32.mrf.mxu0
      %v2675 = vadd.f32 0.0, %v2674
      %2676 = vmatmul.f32.gmra.mxu0 %v2655
      %v2677 = vpop.f32.mrf.mxu0
      %v2678 = vadd.f32 0.0, %v2677
      %2679 = vdwg.mxu0
      %v2680 = vpack.c.bf16 %v2678, %v2675
      %v2681 = vld [vmem:[%s10] sm:$0xf]
      %v2682 = vld [vmem:[%s10 + $0x8] sm:$0xf]
      %v2683 = vld [vmem:[%s10 + $0x10] sm:$0xf]
      %v2684 = vld [vmem:[%s10 + $0x18] sm:$0xf]
      %v2689 = vunpack.c.l.b16 %v2681
      %v2690 = vunpack.c.l.b16 %v2682
      %v2691 = vunpack.c.l.b16 %v2683
      %v2692 = vunpack.c.l.b16 %v2684
      %v2693 = vpack.c.b16 %v2690, %v2689
      %v2694 = vpack.c.b16 %v2692, %v2691
      %2695 = vrot.lane.b32.xlu0 %v2693, 112
      %v2696 = vpop.permute.xlu0 %2695
      %2697 = vrot.lane.b32.xlu0 %v2694, 112
      %v2698 = vpop.permute.xlu0 %2697
      %2700 = vrot.lane.b32.xlu0 %v2680, 127
      %v2701 = vpop.permute.xlu0 %2700
      %v2704 = vsel %vm2412, %v2696, 0
      %v2707 = vsel %vm2412, %v2698, 0
      %2709 = vmatpush.bf16.msra.mxu0 0
      %2710 = vmatpush.bf16.msra.mxu0 0
      %2711 = vmatpush.bf16.msra.mxu0 0
      %2712 = vmatpush.bf16.msra.mxu0 0
      %2713 = vmatpush.bf16.msra.mxu0 0
      %2714 = vmatpush.bf16.msra.mxu0 0
      %2715 = vmatpush.bf16.msra.mxu0 0
      %2716 = vmatpush.bf16.msra.mxu0 %v2701
      %2717 = vmatmul.bf16.gmra.mxu0 %v2704
      %v2718 = vpop.f32.mrf.mxu0
      %v2719 = vadd.f32 0.0, %v2718
      %v2720 = vpop.f32.mrf.mxu0
      %v2721 = vadd.f32 0.0, %v2720
      %2722 = vmatmul.bf16.gmra.mxu0 %v2707
      %v2723 = vpop.f32.mrf.mxu0
      %v2724 = vadd.f32 0.0, %v2723
      %v2725 = vpop.f32.mrf.mxu0
      %v2726 = vadd.f32 0.0, %v2725
      %2727 = vdwg.mxu0
      %v2729 = vsel %vm2412, %v2693, 0
      %v2732 = vsel %vm2412, %v2694, 0
      %2734 = vmatpush.bf16.msra.mxu0 0
      %2735 = vmatpush.bf16.msra.mxu0 0
      %2736 = vmatpush.bf16.msra.mxu0 0
      %2737 = vmatpush.bf16.msra.mxu0 0
      %2738 = vmatpush.bf16.msra.mxu0 0
      %2739 = vmatpush.bf16.msra.mxu0 0
      %2740 = vmatpush.bf16.msra.mxu0 0
      %2741 = vmatpush.bf16.msra.mxu0 %v2680
      %2742 = vmatmul.bf16.gmra.mxu0 %v2729
      %v2743 = vpop.f32.mrf.mxu0
      %v2744 = vadd.f32 %v2719, %v2743
      %v2745 = vpop.f32.mrf.mxu0
      %v2746 = vadd.f32 %v2721, %v2745
      %2747 = vmatmul.bf16.gmra.mxu0 %v2732
      %v2748 = vpop.f32.mrf.mxu0
      %v2749 = vadd.f32 %v2724, %v2748
      %v2750 = vpop.f32.mrf.mxu0
      %v2751 = vadd.f32 %v2726, %v2750
      %2752 = vdwg.mxu0
      %2753 = vrot.lane.b32.xlu0 %v2693, 96
      %v2754 = vpop.permute.xlu0 %2753
      %2755 = vrot.lane.b32.xlu0 %v2694, 96
      %v2756 = vpop.permute.xlu0 %2755
      %2757 = vrot.lane.b32.xlu0 %v2680, 126
      %v2758 = vpop.permute.xlu0 %2757
      %v2761 = vsel %vm2412, %v2754, 0
      %v2764 = vsel %vm2412, %v2756, 0
      %2766 = vmatpush.bf16.msra.mxu0 0
      %2767 = vmatpush.bf16.msra.mxu0 0
      %2768 = vmatpush.bf16.msra.mxu0 0
      %2769 = vmatpush.bf16.msra.mxu0 0
      %2770 = vmatpush.bf16.msra.mxu0 0
      %2771 = vmatpush.bf16.msra.mxu0 0
      %2772 = vmatpush.bf16.msra.mxu0 0
      %2773 = vmatpush.bf16.msra.mxu0 %v2758
      %2774 = vmatmul.bf16.gmra.mxu0 %v2761
      %v2775 = vpop.f32.mrf.mxu0
      %v2776 = vadd.f32 0.0, %v2775
      %v2777 = vpop.f32.mrf.mxu0
      %v2778 = vadd.f32 0.0, %v2777
      %2779 = vmatmul.bf16.gmra.mxu0 %v2764
      %v2780 = vpop.f32.mrf.mxu0
      %v2781 = vadd.f32 0.0, %v2780
      %v2782 = vpop.f32.mrf.mxu0
      %v2783 = vadd.f32 0.0, %v2782
      %2784 = vdwg.mxu0
      %v2785 = vadd.f32 %v2744, %v2776
      %v2786 = vadd.f32 %v2746, %v2778
      %v2787 = vadd.f32 %v2749, %v2781
      %v2788 = vadd.f32 %v2751, %v2783
      %2789 = vrot.lane.b32.xlu0 %v2693, 80
      %v2790 = vpop.permute.xlu0 %2789
      %2791 = vrot.lane.b32.xlu0 %v2694, 80
      %v2792 = vpop.permute.xlu0 %2791
      %2793 = vrot.lane.b32.xlu0 %v2680, 118
      %v2794 = vpop.permute.xlu0 %2793
      %v2797 = vsel %vm2412, %v2790, 0
      %v2800 = vsel %vm2412, %v2792, 0
      %2802 = vmatpush.bf16.msra.mxu0 0
      %2803 = vmatpush.bf16.msra.mxu0 0
      %2804 = vmatpush.bf16.msra.mxu0 0
      %2805 = vmatpush.bf16.msra.mxu0 0
      %2806 = vmatpush.bf16.msra.mxu0 0
      %2807 = vmatpush.bf16.msra.mxu0 0
      %2808 = vmatpush.bf16.msra.mxu0 0
      %2809 = vmatpush.bf16.msra.mxu0 %v2794
      %2810 = vmatmul.bf16.gmra.mxu0 %v2797
      %v2811 = vpop.f32.mrf.mxu0
      %v2812 = vadd.f32 0.0, %v2811
      %v2813 = vpop.f32.mrf.mxu0
      %v2814 = vadd.f32 0.0, %v2813
      %2815 = vmatmul.bf16.gmra.mxu0 %v2800
      %v2816 = vpop.f32.mrf.mxu0
      %v2817 = vadd.f32 0.0, %v2816
      %v2818 = vpop.f32.mrf.mxu0
      %v2819 = vadd.f32 0.0, %v2818
      %2820 = vdwg.mxu0
      %v2821 = vadd.f32 %v2785, %v2812
      %v2822 = vadd.f32 %v2786, %v2814
      %v2823 = vadd.f32 %v2787, %v2817
      %v2824 = vadd.f32 %v2788, %v2819
      %2825 = vrot.lane.b32.xlu0 %v2693, 64
      %v2826 = vpop.permute.xlu0 %2825
      %2827 = vrot.lane.b32.xlu0 %v2694, 64
      %v2828 = vpop.permute.xlu0 %2827
      %2829 = vrot.lane.b32.xlu0 %v2680, 117
      %v2830 = vpop.permute.xlu0 %2829
      %v2833 = vsel %vm2412, %v2826, 0
      %v2836 = vsel %vm2412, %v2828, 0
      %2838 = vmatpush.bf16.msra.mxu0 0
      %2839 = vmatpush.bf16.msra.mxu0 0
      %2840 = vmatpush.bf16.msra.mxu0 0
      %2841 = vmatpush.bf16.msra.mxu0 0
      %2842 = vmatpush.bf16.msra.mxu0 0
      %2843 = vmatpush.bf16.msra.mxu0 0
      %2844 = vmatpush.bf16.msra.mxu0 0
      %2845 = vmatpush.bf16.msra.mxu0 %v2830
      %2846 = vmatmul.bf16.gmra.mxu0 %v2833
      %v2847 = vpop.f32.mrf.mxu0
      %v2848 = vadd.f32 0.0, %v2847
      %v2849 = vpop.f32.mrf.mxu0
      %v2850 = vadd.f32 0.0, %v2849
      %2851 = vmatmul.bf16.gmra.mxu0 %v2836
      %v2852 = vpop.f32.mrf.mxu0
      %v2853 = vadd.f32 0.0, %v2852
      %v2854 = vpop.f32.mrf.mxu0
      %v2855 = vadd.f32 0.0, %v2854
      %2856 = vdwg.mxu0
      %v2857 = vadd.f32 %v2821, %v2848
      %v2858 = vadd.f32 %v2822, %v2850
      %v2859 = vadd.f32 %v2823, %v2853
      %v2860 = vadd.f32 %v2824, %v2855
      %2861 = vrot.lane.b32.xlu0 %v2693, 48
      %v2862 = vpop.permute.xlu0 %2861
      %2863 = vrot.lane.b32.xlu0 %v2694, 48
      %v2864 = vpop.permute.xlu0 %2863
      %2865 = vrot.lane.b32.xlu0 %v2680, 116
      %v2866 = vpop.permute.xlu0 %2865
      %v2869 = vsel %vm2412, %v2862, 0
      %v2872 = vsel %vm2412, %v2864, 0
      %2874 = vmatpush.bf16.msra.mxu0 0
      %2875 = vmatpush.bf16.msra.mxu0 0
      %2876 = vmatpush.bf16.msra.mxu0 0
      %2877 = vmatpush.bf16.msra.mxu0 0
      %2878 = vmatpush.bf16.msra.mxu0 0
      %2879 = vmatpush.bf16.msra.mxu0 0
      %2880 = vmatpush.bf16.msra.mxu0 0
      %2881 = vmatpush.bf16.msra.mxu0 %v2866
      %2882 = vmatmul.bf16.gmra.mxu0 %v2869
      %v2883 = vpop.f32.mrf.mxu0
      %v2884 = vadd.f32 0.0, %v2883
      %v2885 = vpop.f32.mrf.mxu0
      %v2886 = vadd.f32 0.0, %v2885
      %2887 = vmatmul.bf16.gmra.mxu0 %v2872
      %v2888 = vpop.f32.mrf.mxu0
      %v2889 = vadd.f32 0.0, %v2888
      %v2890 = vpop.f32.mrf.mxu0
      %v2891 = vadd.f32 0.0, %v2890
      %2892 = vdwg.mxu0
      %v2893 = vadd.f32 %v2857, %v2884
      %v2894 = vadd.f32 %v2858, %v2886
      %v2895 = vadd.f32 %v2859, %v2889
      %v2896 = vadd.f32 %v2860, %v2891
      %2897 = vrot.lane.b32.xlu0 %v2693, 32
      %v2898 = vpop.permute.xlu0 %2897
      %2899 = vrot.lane.b32.xlu0 %v2694, 32
      %v2900 = vpop.permute.xlu0 %2899
      %2901 = vrot.lane.b32.xlu0 %v2680, 108
      %v2902 = vpop.permute.xlu0 %2901
      %v2905 = vsel %vm2412, %v2898, 0
      %v2908 = vsel %vm2412, %v2900, 0
      %2910 = vmatpush.bf16.msra.mxu0 0
      %2911 = vmatpush.bf16.msra.mxu0 0
      %2912 = vmatpush.bf16.msra.mxu0 0
      %2913 = vmatpush.bf16.msra.mxu0 0
      %2914 = vmatpush.bf16.msra.mxu0 0
      %2915 = vmatpush.bf16.msra.mxu0 0
      %2916 = vmatpush.bf16.msra.mxu0 0
      %2917 = vmatpush.bf16.msra.mxu0 %v2902
      %2918 = vmatmul.bf16.gmra.mxu0 %v2905
      %v2919 = vpop.f32.mrf.mxu0
      %v2920 = vadd.f32 0.0, %v2919
      %v2921 = vpop.f32.mrf.mxu0
      %v2922 = vadd.f32 0.0, %v2921
      %2923 = vmatmul.bf16.gmra.mxu0 %v2908
      %v2924 = vpop.f32.mrf.mxu0
      %v2925 = vadd.f32 0.0, %v2924
      %v2926 = vpop.f32.mrf.mxu0
      %v2927 = vadd.f32 0.0, %v2926
      %2928 = vdwg.mxu0
      %v2929 = vadd.f32 %v2893, %v2920
      %v2930 = vadd.f32 %v2894, %v2922
      %v2931 = vadd.f32 %v2895, %v2925
      %v2932 = vadd.f32 %v2896, %v2927
      %2933 = vrot.lane.b32.xlu0 %v2693, 16
      %v2934 = vpop.permute.xlu0 %2933
      %2935 = vrot.lane.b32.xlu0 %v2694, 16
      %v2936 = vpop.permute.xlu0 %2935
      %2937 = vrot.lane.b32.xlu0 %v2680, 107
      %v2938 = vpop.permute.xlu0 %2937
      %v2941 = vsel %vm2412, %v2934, 0
      %v2944 = vsel %vm2412, %v2936, 0
      %2946 = vmatpush.bf16.msra.mxu0 0
      %2947 = vmatpush.bf16.msra.mxu0 0
      %2948 = vmatpush.bf16.msra.mxu0 0
      %2949 = vmatpush.bf16.msra.mxu0 0
      %2950 = vmatpush.bf16.msra.mxu0 0
      %2951 = vmatpush.bf16.msra.mxu0 0
      %2952 = vmatpush.bf16.msra.mxu0 0
      %2953 = vmatpush.bf16.msra.mxu0 %v2938
      %2954 = vmatmul.bf16.gmra.mxu0 %v2941
      %v2955 = vpop.f32.mrf.mxu0
      %v2956 = vadd.f32 0.0, %v2955
      %v2957 = vpop.f32.mrf.mxu0
      %v2958 = vadd.f32 0.0, %v2957
      %2959 = vmatmul.bf16.gmra.mxu0 %v2944
      %v2960 = vpop.f32.mrf.mxu0
      %v2961 = vadd.f32 0.0, %v2960
      %v2962 = vpop.f32.mrf.mxu0
      %v2963 = vadd.f32 0.0, %v2962
      %2964 = vdwg.mxu0
      %v2965 = vadd.f32 %v2929, %v2956
      %v2966 = vadd.f32 %v2930, %v2958
      %v2967 = vadd.f32 %v2931, %v2961
      %v2968 = vadd.f32 %v2932, %v2963
      %v2969 = vld [vmem:[%s10 + $0x4] sm:$0xf]
      %v2970 = vld [vmem:[%s10 + $0xc] sm:$0xf]
      %v2971 = vld [vmem:[%s10 + $0x14] sm:$0xf]
      %v2972 = vld [vmem:[%s10 + $0x1c] sm:$0xf]
      %v2977 = vunpack.c.l.b16 %v2969
      %v2978 = vunpack.c.l.b16 %v2970
      %v2979 = vunpack.c.l.b16 %v2971
      %v2980 = vunpack.c.l.b16 %v2972
      %v2981 = vpack.c.b16 %v2978, %v2977
      %v2982 = vpack.c.b16 %v2980, %v2979
      %2983 = vrot.lane.b32.xlu0 %v2680, 106
      %v2984 = vpop.permute.xlu0 %2983
      %v2987 = vsel %vm2412, %v2981, 0
      %v2990 = vsel %vm2412, %v2982, 0
      %2992 = vmatpush.bf16.msra.mxu0 0
      %2993 = vmatpush.bf16.msra.mxu0 0
      %2994 = vmatpush.bf16.msra.mxu0 0
      %2995 = vmatpush.bf16.msra.mxu0 0
      %2996 = vmatpush.bf16.msra.mxu0 0
      %2997 = vmatpush.bf16.msra.mxu0 0
      %2998 = vmatpush.bf16.msra.mxu0 0
      %2999 = vmatpush.bf16.msra.mxu0 %v2984
      %3000 = vmatmul.bf16.gmra.mxu0 %v2987
      %v3001 = vpop.f32.mrf.mxu0
      %v3002 = vadd.f32 0.0, %v3001
      %v3003 = vpop.f32.mrf.mxu0
      %v3004 = vadd.f32 0.0, %v3003
      %3005 = vmatmul.bf16.gmra.mxu0 %v2990
      %v3006 = vpop.f32.mrf.mxu0
      %v3007 = vadd.f32 0.0, %v3006
      %v3008 = vpop.f32.mrf.mxu0
      %v3009 = vadd.f32 0.0, %v3008
      %3010 = vdwg.mxu0
      %v3011 = vadd.f32 %v2965, %v3002
      %v3012 = vadd.f32 %v2966, %v3004
      %v3013 = vadd.f32 %v2967, %v3007
      %v3014 = vadd.f32 %v2968, %v3009
      %v3015 = vld [vmem:[%s11] sm:$0xff]
      %v3016 = vld [vmem:[%s11 + $0x8] sm:$0xff]
      %v3017 = vld [vmem:[%s11 + $0x10] sm:$0xff]
      %v3018 = vld [vmem:[%s11 + $0x18] sm:$0xff]
      %3020 = vset.pattern.permute.xlu0 0
      %3021 = vperm.xlu0 %3020, %v3015
      %v3022 = vpop.permute.xlu0 %3021
      %3025 = vset.pattern.permute.xlu0 0
      %3026 = vperm.xlu0 %3025, %v3016
      %v3027 = vpop.permute.xlu0 %3026
      %3030 = vset.pattern.permute.xlu0 0
      %3031 = vperm.xlu0 %3030, %v3017
      %v3032 = vpop.permute.xlu0 %3031
      %3035 = vset.pattern.permute.xlu0 0
      %3036 = vperm.xlu0 %3035, %v3018
      %v3037 = vpop.permute.xlu0 %3036
      %v3039 = vadd.f32 %v3011, %v3022
      %v3040 = vadd.f32 %v3012, %v3027
      %v3041 = vadd.f32 %v3013, %v3032
      %v3042 = vadd.f32 %v3014, %v3037
      %vm3043 = vcmp.ge.f32.partialorder %v3039, 0.0
      %vm3044 = vcmp.ge.f32.partialorder %v3040, 0.0
      %vm3045 = vcmp.ge.f32.partialorder %v3041, 0.0
      %vm3046 = vcmp.ge.f32.partialorder %v3042, 0.0
      %v3047 = vmul.f32 %v3039, 0.2
      %v3048 = vmul.f32 %v3040, 0.2
      %v3049 = vmul.f32 %v3041, 0.2
      %v3050 = vmul.f32 %v3042, 0.2
      %v3051 = vsel %vm3043, %v3039, %v3047
      %v3052 = vsel %vm3044, %v3040, %v3048
      %v3053 = vsel %vm3045, %v3041, %v3049
      %v3054 = vsel %vm3046, %v3042, %v3050
      %v3055 = vld [vmem:[%s12] sm:$0xff]
      %v3056 = vld [vmem:[%s12 + $0x8] sm:$0xff]
      %v3057 = vld [vmem:[%s12 + $0x10] sm:$0xff]
      %v3058 = vld [vmem:[%s12 + $0x18] sm:$0xff]
      %v3059 = vld [vmem:[%s12 + $0x20] sm:$0xff]
      %v3060 = vld [vmem:[%s12 + $0x28] sm:$0xff]
      %v3061 = vld [vmem:[%s12 + $0x30] sm:$0xff]
      %v3062 = vld [vmem:[%s12 + $0x38] sm:$0xff]
      %v3063 = vld [vmem:[%s12 + $0x40] sm:$0xff]
      %v3064 = vld [vmem:[%s12 + $0x48] sm:$0xff]
      %v3066 = vsel %vm2650, %v3051, 0
      %v3069 = vsel %vm2650, %v3052, 0
      %v3072 = vsel %vm2650, %v3053, 0
      %v3075 = vsel %vm2650, %v3054, 0
      %3077 = vmatpush.msra.mxu0 0.0
      %3078 = vmatpush.msra.mxu0 0.0
      %3079 = vmatpush.msra.mxu0 0.0
      %3080 = vmatpush.msra.mxu0 0.0
      %3081 = vmatpush.msra.mxu0 0.0
      %3082 = vmatpush.msra.mxu0 0.0
      %3083 = vmatpush.msra.mxu0 %v3064
      %3084 = vmatpush.msra.mxu0 %v3063
      %3085 = vmatpush.msra.mxu0 %v3062
      %3086 = vmatpush.msra.mxu0 %v3061
      %3087 = vmatpush.msra.mxu0 %v3060
      %3088 = vmatpush.msra.mxu0 %v3059
      %3089 = vmatpush.msra.mxu0 %v3058
      %3090 = vmatpush.msra.mxu0 %v3057
      %3091 = vmatpush.msra.mxu0 %v3056
      %3092 = vmatpush.msra.mxu0 %v3055
      %3093 = vmatmul.f32.gmra.mxu0 %v3066
      %v3094 = vpop.f32.mrf.mxu0
      %v3095 = vadd.f32 0.0, %v3094
      %3096 = vmatmul.f32.gmra.mxu0 %v3069
      %v3097 = vpop.f32.mrf.mxu0
      %v3098 = vadd.f32 0.0, %v3097
      %3099 = vmatmul.f32.gmra.mxu0 %v3072
      %v3100 = vpop.f32.mrf.mxu0
      %v3101 = vadd.f32 0.0, %v3100
      %3102 = vmatmul.f32.gmra.mxu0 %v3075
      %v3103 = vpop.f32.mrf.mxu0
      %v3104 = vadd.f32 0.0, %v3103
      %3105 = vdwg.mxu0
      %v3106 = vpack.c.bf16 %v3098, %v3095
      %v3107 = vpack.c.bf16 %v3104, %v3101
      %v3108 = vld [vmem:[%s13] sm:$0xf]
      %v3109 = vld [vmem:[%s13 + $0xc] sm:$0xf]
      %v3110 = vld [vmem:[%s13 + $0x18] sm:$0xf]
      %v3111 = vld [vmem:[%s13 + $0x24] sm:$0xf]
      %v3116 = vunpack.c.l.b16 %v3108
      %v3117 = vunpack.c.l.b16 %v3109
      %v3118 = vunpack.c.l.b16 %v3110
      %v3119 = vunpack.c.l.b16 %v3111
      %v3120 = vpack.c.b16 %v3117, %v3116
      %v3121 = vpack.c.b16 %v3119, %v3118
      %3122 = vrot.lane.b32.xlu0 %v3120, 96
      %v3123 = vpop.permute.xlu0 %3122
      %3124 = vrot.lane.b32.xlu0 %v3121, 96
      %v3125 = vpop.permute.xlu0 %3124
      %3128 = vrot.lane.b32.xlu0 %v3106, 127
      %v3129 = vpop.permute.xlu0 %3128
      %3130 = vrot.lane.b32.xlu0 %v3107, 127
      %v3131 = vpop.permute.xlu0 %3130
      %v3135 = vsel %vm1446, %v3123, 0
      %v3138 = vsel %vm1446, %v3125, 0
      %3140 = vmatpush.bf16.msra.mxu0 0
      %3141 = vmatpush.bf16.msra.mxu0 0
      %3142 = vmatpush.bf16.msra.mxu0 0
      %3143 = vmatpush.bf16.msra.mxu0 0
      %3144 = vmatpush.bf16.msra.mxu0 0
      %3145 = vmatpush.bf16.msra.mxu0 0
      %3146 = vmatpush.bf16.msra.mxu0 %v3131
      %3147 = vmatpush.bf16.msra.mxu0 %v3129
      %3148 = vmatmul.bf16.gmra.mxu0 %v3135
      %v3149 = vpop.f32.mrf.mxu0
      %v3150 = vadd.f32 0.0, %v3149
      %v3151 = vpop.f32.mrf.mxu0
      %v3152 = vadd.f32 0.0, %v3151
      %3153 = vmatmul.bf16.gmra.mxu0 %v3138
      %v3154 = vpop.f32.mrf.mxu0
      %v3155 = vadd.f32 0.0, %v3154
      %v3156 = vpop.f32.mrf.mxu0
      %v3157 = vadd.f32 0.0, %v3156
      %3158 = vdwg.mxu0
      %v3160 = vsel %vm1446, %v3120, 0
      %v3163 = vsel %vm1446, %v3121, 0
      %3165 = vmatpush.bf16.msra.mxu0 0
      %3166 = vmatpush.bf16.msra.mxu0 0
      %3167 = vmatpush.bf16.msra.mxu0 0
      %3168 = vmatpush.bf16.msra.mxu0 0
      %3169 = vmatpush.bf16.msra.mxu0 0
      %3170 = vmatpush.bf16.msra.mxu0 0
      %3171 = vmatpush.bf16.msra.mxu0 %v3107
      %3172 = vmatpush.bf16.msra.mxu0 %v3106
      %3173 = vmatmul.bf16.gmra.mxu0 %v3160
      %v3174 = vpop.f32.mrf.mxu0
      %v3175 = vadd.f32 %v3150, %v3174
      %v3176 = vpop.f32.mrf.mxu0
      %v3177 = vadd.f32 %v3152, %v3176
      %3178 = vmatmul.bf16.gmra.mxu0 %v3163
      %v3179 = vpop.f32.mrf.mxu0
      %v3180 = vadd.f32 %v3155, %v3179
      %v3181 = vpop.f32.mrf.mxu0
      %v3182 = vadd.f32 %v3157, %v3181
      %3183 = vdwg.mxu0
      %3184 = vrot.lane.b32.xlu0 %v3120, 64
      %v3185 = vpop.permute.xlu0 %3184
      %3186 = vrot.lane.b32.xlu0 %v3121, 64
      %v3187 = vpop.permute.xlu0 %3186
      %3188 = vrot.lane.b32.xlu0 %v3106, 126
      %v3189 = vpop.permute.xlu0 %3188
      %3190 = vrot.lane.b32.xlu0 %v3107, 126
      %v3191 = vpop.permute.xlu0 %3190
      %v3195 = vsel %vm1446, %v3185, 0
      %v3198 = vsel %vm1446, %v3187, 0
      %3200 = vmatpush.bf16.msra.mxu0 0
      %3201 = vmatpush.bf16.msra.mxu0 0
      %3202 = vmatpush.bf16.msra.mxu0 0
      %3203 = vmatpush.bf16.msra.mxu0 0
      %3204 = vmatpush.bf16.msra.mxu0 0
      %3205 = vmatpush.bf16.msra.mxu0 0
      %3206 = vmatpush.bf16.msra.mxu0 %v3191
      %3207 = vmatpush.bf16.msra.mxu0 %v3189
      %3208 = vmatmul.bf16.gmra.mxu0 %v3195
      %v3209 = vpop.f32.mrf.mxu0
      %v3210 = vadd.f32 0.0, %v3209
      %v3211 = vpop.f32.mrf.mxu0
      %v3212 = vadd.f32 0.0, %v3211
      %3213 = vmatmul.bf16.gmra.mxu0 %v3198
      %v3214 = vpop.f32.mrf.mxu0
      %v3215 = vadd.f32 0.0, %v3214
      %v3216 = vpop.f32.mrf.mxu0
      %v3217 = vadd.f32 0.0, %v3216
      %3218 = vdwg.mxu0
      %v3219 = vadd.f32 %v3175, %v3210
      %v3220 = vadd.f32 %v3177, %v3212
      %v3221 = vadd.f32 %v3180, %v3215
      %v3222 = vadd.f32 %v3182, %v3217
      %3223 = vrot.lane.b32.xlu0 %v3120, 32
      %v3224 = vpop.permute.xlu0 %3223
      %3225 = vrot.lane.b32.xlu0 %v3121, 32
      %v3226 = vpop.permute.xlu0 %3225
      %3227 = vrot.lane.b32.xlu0 %v3106, 122
      %v3228 = vpop.permute.xlu0 %3227
      %3229 = vrot.lane.b32.xlu0 %v3107, 122
      %v3230 = vpop.permute.xlu0 %3229
      %v3234 = vsel %vm1446, %v3224, 0
      %v3237 = vsel %vm1446, %v3226, 0
      %3239 = vmatpush.bf16.msra.mxu0 0
      %3240 = vmatpush.bf16.msra.mxu0 0
      %3241 = vmatpush.bf16.msra.mxu0 0
      %3242 = vmatpush.bf16.msra.mxu0 0
      %3243 = vmatpush.bf16.msra.mxu0 0
      %3244 = vmatpush.bf16.msra.mxu0 0
      %3245 = vmatpush.bf16.msra.mxu0 %v3230
      %3246 = vmatpush.bf16.msra.mxu0 %v3228
      %3247 = vmatmul.bf16.gmra.mxu0 %v3234
      %v3248 = vpop.f32.mrf.mxu0
      %v3249 = vadd.f32 0.0, %v3248
      %v3250 = vpop.f32.mrf.mxu0
      %v3251 = vadd.f32 0.0, %v3250
      %3252 = vmatmul.bf16.gmra.mxu0 %v3237
      %v3253 = vpop.f32.mrf.mxu0
      %v3254 = vadd.f32 0.0, %v3253
      %v3255 = vpop.f32.mrf.mxu0
      %v3256 = vadd.f32 0.0, %v3255
      %3257 = vdwg.mxu0
      %v3258 = vadd.f32 %v3219, %v3249
      %v3259 = vadd.f32 %v3220, %v3251
      %v3260 = vadd.f32 %v3221, %v3254
      %v3261 = vadd.f32 %v3222, %v3256
      %v3262 = vld [vmem:[%s13 + $0x4] sm:$0xf]
      %v3263 = vld [vmem:[%s13 + $0x10] sm:$0xf]
      %v3264 = vld [vmem:[%s13 + $0x1c] sm:$0xf]
      %v3265 = vld [vmem:[%s13 + $0x28] sm:$0xf]
      %v3270 = vunpack.c.l.b16 %v3262
      %v3271 = vunpack.c.l.b16 %v3263
      %v3272 = vunpack.c.l.b16 %v3264
      %v3273 = vunpack.c.l.b16 %v3265
      %v3274 = vpack.c.b16 %v3271, %v3270
      %v3275 = vpack.c.b16 %v3273, %v3272
      %3276 = vrot.lane.b32.xlu0 %v3106, 121
      %v3277 = vpop.permute.xlu0 %3276
      %3278 = vrot.lane.b32.xlu0 %v3107, 121
      %v3279 = vpop.permute.xlu0 %3278
      %v3283 = vsel %vm1446, %v3274, 0
      %v3286 = vsel %vm1446, %v3275, 0
      %3288 = vmatpush.bf16.msra.mxu0 0
      %3289 = vmatpush.bf16.msra.mxu0 0
      %3290 = vmatpush.bf16.msra.mxu0 0
      %3291 = vmatpush.bf16.msra.mxu0 0
      %3292 = vmatpush.bf16.msra.mxu0 0
      %3293 = vmatpush.bf16.msra.mxu0 0
      %3294 = vmatpush.bf16.msra.mxu0 %v3279
      %3295 = vmatpush.bf16.msra.mxu0 %v3277
      %3296 = vmatmul.bf16.gmra.mxu0 %v3283
      %v3297 = vpop.f32.mrf.mxu0
      %v3298 = vadd.f32 0.0, %v3297
      %v3299 = vpop.f32.mrf.mxu0
      %v3300 = vadd.f32 0.0, %v3299
      %3301 = vmatmul.bf16.gmra.mxu0 %v3286
      %v3302 = vpop.f32.mrf.mxu0
      %v3303 = vadd.f32 0.0, %v3302
      %v3304 = vpop.f32.mrf.mxu0
      %v3305 = vadd.f32 0.0, %v3304
      %3306 = vdwg.mxu0
      %v3307 = vadd.f32 %v3258, %v3298
      %v3308 = vadd.f32 %v3259, %v3300
      %v3309 = vadd.f32 %v3260, %v3303
      %v3310 = vadd.f32 %v3261, %v3305
      %3311 = vrot.lane.b32.xlu0 %v3274, 96
      %v3312 = vpop.permute.xlu0 %3311
      %3313 = vrot.lane.b32.xlu0 %v3275, 96
      %v3314 = vpop.permute.xlu0 %3313
      %3315 = vrot.lane.b32.xlu0 %v3106, 120
      %v3316 = vpop.permute.xlu0 %3315
      %3317 = vrot.lane.b32.xlu0 %v3107, 120
      %v3318 = vpop.permute.xlu0 %3317
      %v3322 = vsel %vm1446, %v3312, 0
      %v3325 = vsel %vm1446, %v3314, 0
      %3327 = vmatpush.bf16.msra.mxu0 0
      %3328 = vmatpush.bf16.msra.mxu0 0
      %3329 = vmatpush.bf16.msra.mxu0 0
      %3330 = vmatpush.bf16.msra.mxu0 0
      %3331 = vmatpush.bf16.msra.mxu0 0
      %3332 = vmatpush.bf16.msra.mxu0 0
      %3333 = vmatpush.bf16.msra.mxu0 %v3318
      %3334 = vmatpush.bf16.msra.mxu0 %v3316
      %3335 = vmatmul.bf16.gmra.mxu0 %v3322
      %v3336 = vpop.f32.mrf.mxu0
      %v3337 = vadd.f32 0.0, %v3336
      %v3338 = vpop.f32.mrf.mxu0
      %v3339 = vadd.f32 0.0, %v3338
      %3340 = vmatmul.bf16.gmra.mxu0 %v3325
      %v3341 = vpop.f32.mrf.mxu0
      %v3342 = vadd.f32 0.0, %v3341
      %v3343 = vpop.f32.mrf.mxu0
      %v3344 = vadd.f32 0.0, %v3343
      %3345 = vdwg.mxu0
      %v3346 = vadd.f32 %v3307, %v3337
      %v3347 = vadd.f32 %v3308, %v3339
      %v3348 = vadd.f32 %v3309, %v3342
      %v3349 = vadd.f32 %v3310, %v3344
      %3350 = vrot.lane.b32.xlu0 %v3274, 64
      %v3351 = vpop.permute.xlu0 %3350
      %3352 = vrot.lane.b32.xlu0 %v3275, 64
      %v3353 = vpop.permute.xlu0 %3352
      %3354 = vrot.lane.b32.xlu0 %v3106, 116
      %v3355 = vpop.permute.xlu0 %3354
      %3356 = vrot.lane.b32.xlu0 %v3107, 116
      %v3357 = vpop.permute.xlu0 %3356
      %v3361 = vsel %vm1446, %v3351, 0
      %v3364 = vsel %vm1446, %v3353, 0
      %3366 = vmatpush.bf16.msra.mxu0 0
      %3367 = vmatpush.bf16.msra.mxu0 0
      %3368 = vmatpush.bf16.msra.mxu0 0
      %3369 = vmatpush.bf16.msra.mxu0 0
      %3370 = vmatpush.bf16.msra.mxu0 0
      %3371 = vmatpush.bf16.msra.mxu0 0
      %3372 = vmatpush.bf16.msra.mxu0 %v3357
      %3373 = vmatpush.bf16.msra.mxu0 %v3355
      %3374 = vmatmul.bf16.gmra.mxu0 %v3361
      %v3375 = vpop.f32.mrf.mxu0
      %v3376 = vadd.f32 0.0, %v3375
      %v3377 = vpop.f32.mrf.mxu0
      %v3378 = vadd.f32 0.0, %v3377
      %3379 = vmatmul.bf16.gmra.mxu0 %v3364
      %v3380 = vpop.f32.mrf.mxu0
      %v3381 = vadd.f32 0.0, %v3380
      %v3382 = vpop.f32.mrf.mxu0
      %v3383 = vadd.f32 0.0, %v3382
      %3384 = vdwg.mxu0
      %v3385 = vadd.f32 %v3346, %v3376
      %v3386 = vadd.f32 %v3347, %v3378
      %v3387 = vadd.f32 %v3348, %v3381
      %v3388 = vadd.f32 %v3349, %v3383
      %3389 = vrot.lane.b32.xlu0 %v3274, 32
      %v3390 = vpop.permute.xlu0 %3389
      %3391 = vrot.lane.b32.xlu0 %v3275, 32
      %v3392 = vpop.permute.xlu0 %3391
      %3393 = vrot.lane.b32.xlu0 %v3106, 115
      %v3394 = vpop.permute.xlu0 %3393
      %3395 = vrot.lane.b32.xlu0 %v3107, 115
      %v3396 = vpop.permute.xlu0 %3395
      %v3400 = vsel %vm1446, %v3390, 0
      %v3403 = vsel %vm1446, %v3392, 0
      %3405 = vmatpush.bf16.msra.mxu0 0
      %3406 = vmatpush.bf16.msra.mxu0 0
      %3407 = vmatpush.bf16.msra.mxu0 0
      %3408 = vmatpush.bf16.msra.mxu0 0
      %3409 = vmatpush.bf16.msra.mxu0 0
      %3410 = vmatpush.bf16.msra.mxu0 0
      %3411 = vmatpush.bf16.msra.mxu0 %v3396
      %3412 = vmatpush.bf16.msra.mxu0 %v3394
      %3413 = vmatmul.bf16.gmra.mxu0 %v3400
      %v3414 = vpop.f32.mrf.mxu0
      %v3415 = vadd.f32 0.0, %v3414
      %v3416 = vpop.f32.mrf.mxu0
      %v3417 = vadd.f32 0.0, %v3416
      %3418 = vmatmul.bf16.gmra.mxu0 %v3403
      %v3419 = vpop.f32.mrf.mxu0
      %v3420 = vadd.f32 0.0, %v3419
      %v3421 = vpop.f32.mrf.mxu0
      %v3422 = vadd.f32 0.0, %v3421
      %3423 = vdwg.mxu0
      %v3424 = vadd.f32 %v3385, %v3415
      %v3425 = vadd.f32 %v3386, %v3417
      %v3426 = vadd.f32 %v3387, %v3420
      %v3427 = vadd.f32 %v3388, %v3422
      %v3428 = vld [vmem:[%s13 + $0x8] sm:$0xf]
      %v3429 = vld [vmem:[%s13 + $0x14] sm:$0xf]
      %v3430 = vld [vmem:[%s13 + $0x20] sm:$0xf]
      %v3431 = vld [vmem:[%s13 + $0x2c] sm:$0xf]
      %v3436 = vunpack.c.l.b16 %v3428
      %v3437 = vunpack.c.l.b16 %v3429
      %v3438 = vunpack.c.l.b16 %v3430
      %v3439 = vunpack.c.l.b16 %v3431
      %v3440 = vpack.c.b16 %v3437, %v3436
      %v3441 = vpack.c.b16 %v3439, %v3438
      %3442 = vrot.lane.b32.xlu0 %v3106, 114
      %v3443 = vpop.permute.xlu0 %3442
      %3444 = vrot.lane.b32.xlu0 %v3107, 114
      %v3445 = vpop.permute.xlu0 %3444
      %v3449 = vsel %vm1446, %v3440, 0
      %v3452 = vsel %vm1446, %v3441, 0
      %3454 = vmatpush.bf16.msra.mxu0 0
      %3455 = vmatpush.bf16.msra.mxu0 0
      %3456 = vmatpush.bf16.msra.mxu0 0
      %3457 = vmatpush.bf16.msra.mxu0 0
      %3458 = vmatpush.bf16.msra.mxu0 0
      %3459 = vmatpush.bf16.msra.mxu0 0
      %3460 = vmatpush.bf16.msra.mxu0 %v3445
      %3461 = vmatpush.bf16.msra.mxu0 %v3443
      %3462 = vmatmul.bf16.gmra.mxu0 %v3449
      %v3463 = vpop.f32.mrf.mxu0
      %v3464 = vadd.f32 0.0, %v3463
      %v3465 = vpop.f32.mrf.mxu0
      %v3466 = vadd.f32 0.0, %v3465
      %3467 = vmatmul.bf16.gmra.mxu0 %v3452
      %v3468 = vpop.f32.mrf.mxu0
      %v3469 = vadd.f32 0.0, %v3468
      %v3470 = vpop.f32.mrf.mxu0
      %v3471 = vadd.f32 0.0, %v3470
      %3472 = vdwg.mxu0
      %v3473 = vadd.f32 %v3424, %v3464
      %v3474 = vadd.f32 %v3425, %v3466
      %v3475 = vadd.f32 %v3426, %v3469
      %v3476 = vadd.f32 %v3427, %v3471
      %v3477 = vld [vmem:[%s14] sm:$0xff]
      %v3478 = vld [vmem:[%s14 + $0x8] sm:$0xff]
      %v3479 = vld [vmem:[%s14 + $0x10] sm:$0xff]
      %v3480 = vld [vmem:[%s14 + $0x18] sm:$0xff]
      %3482 = vset.pattern.permute.xlu0 0
      %3483 = vperm.xlu0 %3482, %v3477
      %v3484 = vpop.permute.xlu0 %3483
      %3487 = vset.pattern.permute.xlu0 0
      %3488 = vperm.xlu0 %3487, %v3478
      %v3489 = vpop.permute.xlu0 %3488
      %3492 = vset.pattern.permute.xlu0 0
      %3493 = vperm.xlu0 %3492, %v3479
      %v3494 = vpop.permute.xlu0 %3493
      %3497 = vset.pattern.permute.xlu0 0
      %3498 = vperm.xlu0 %3497, %v3480
      %v3499 = vpop.permute.xlu0 %3498
      %v3501 = vadd.f32 %v3473, %v3484
      %v3502 = vadd.f32 %v3474, %v3489
      %v3503 = vadd.f32 %v3475, %v3494
      %v3504 = vadd.f32 %v3476, %v3499
      %vm3505 = vcmp.ge.f32.partialorder %v3501, 0.0
      %vm3506 = vcmp.ge.f32.partialorder %v3502, 0.0
      %vm3507 = vcmp.ge.f32.partialorder %v3503, 0.0
      %vm3508 = vcmp.ge.f32.partialorder %v3504, 0.0
      %v3509 = vmul.f32 %v3501, 0.2
      %v3510 = vmul.f32 %v3502, 0.2
      %v3511 = vmul.f32 %v3503, 0.2
      %v3512 = vmul.f32 %v3504, 0.2
      %v3513 = vsel %vm3505, %v3501, %v3509
      %v3514 = vsel %vm3506, %v3502, %v3510
      %v3515 = vsel %vm3507, %v3503, %v3511
      %v3516 = vsel %vm3508, %v3504, %v3512
      %v3517 = vld [vmem:[%s15] sm:$0xff]
      %v3518 = vld [vmem:[%s15 + $0x8] sm:$0xff]
      %v3519 = vld [vmem:[%s15 + $0x10] sm:$0xff]
      %vm3520 = vcmask 195584
      %v3522 = vsel %vm3520, %v3513, 0
      %v3525 = vsel %vm3520, %v3514, 0
      %v3528 = vsel %vm3520, %v3515, 0
      %v3531 = vsel %vm3520, %v3516, 0
      %3533 = vmatpush.msra.mxu0 0.0
      %3534 = vmatpush.msra.mxu0 0.0
      %3535 = vmatpush.msra.mxu0 0.0
      %3536 = vmatpush.msra.mxu0 0.0
      %3537 = vmatpush.msra.mxu0 0.0
      %3538 = vmatpush.msra.mxu0 0.0
      %3539 = vmatpush.msra.mxu0 0.0
      %3540 = vmatpush.msra.mxu0 0.0
      %3541 = vmatpush.msra.mxu0 0.0
      %3542 = vmatpush.msra.mxu0 0.0
      %3543 = vmatpush.msra.mxu0 0.0
      %3544 = vmatpush.msra.mxu0 0.0
      %3545 = vmatpush.msra.mxu0 0.0
      %3546 = vmatpush.msra.mxu0 %v3519
      %3547 = vmatpush.msra.mxu0 %v3518
      %3548 = vmatpush.msra.mxu0 %v3517
      %3549 = vmatmul.f32.gmra.mxu0 %v3522
      %v3550 = vpop.f32.mrf.mxu0
      %v3551 = vadd.f32 0.0, %v3550
      %3552 = vmatmul.f32.gmra.mxu0 %v3525
      %v3553 = vpop.f32.mrf.mxu0
      %v3554 = vadd.f32 0.0, %v3553
      %3555 = vmatmul.f32.gmra.mxu0 %v3528
      %v3556 = vpop.f32.mrf.mxu0
      %v3557 = vadd.f32 0.0, %v3556
      %3558 = vmatmul.f32.gmra.mxu0 %v3531
      %v3559 = vpop.f32.mrf.mxu0
      %v3560 = vadd.f32 0.0, %v3559
      %3561 = vdwg.mxu0
      %v3562 = vpack.c.bf16 %v3554, %v3551
      %v3563 = vpack.c.bf16 %v3560, %v3557
      %v3564 = vld [vmem:[%s16] sm:$0xf]
      %v3565 = vld [vmem:[%s16 + $0xc] sm:$0xf]
      %v3566 = vld [vmem:[%s16 + $0x18] sm:$0xf]
      %v3567 = vld [vmem:[%s16 + $0x24] sm:$0xf]
      %v3568 = vld [vmem:[%s16 + $0x30] sm:$0xf]
      %v3569 = vld [vmem:[%s16 + $0x3c] sm:$0xf]
      %v3570 = vld [vmem:[%s16 + $0x48] sm:$0xf]
      %v3571 = vld [vmem:[%s16 + $0x54] sm:$0xf]
      %v3580 = vunpack.c.l.b16 %v3564
      %v3581 = vunpack.c.l.b16 %v3565
      %v3582 = vunpack.c.l.b16 %v3566
      %v3583 = vunpack.c.l.b16 %v3567
      %v3584 = vunpack.c.l.b16 %v3568
      %v3585 = vunpack.c.l.b16 %v3569
      %v3586 = vunpack.c.l.b16 %v3570
      %v3587 = vunpack.c.l.b16 %v3571
      %v3588 = vpack.c.b16 %v3581, %v3580
      %v3589 = vpack.c.b16 %v3583, %v3582
      %v3590 = vpack.c.b16 %v3585, %v3584
      %v3591 = vpack.c.b16 %v3587, %v3586
      %3592 = vrot.lane.b32.xlu0 %v3588, 96
      %v3593 = vpop.permute.xlu0 %3592
      %3594 = vrot.lane.b32.xlu0 %v3589, 96
      %v3595 = vpop.permute.xlu0 %3594
      %3596 = vrot.lane.b32.xlu0 %v3590, 96
      %v3597 = vpop.permute.xlu0 %3596
      %3598 = vrot.lane.b32.xlu0 %v3591, 96
      %v3599 = vpop.permute.xlu0 %3598
      %3602 = vrot.lane.b32.xlu0 %v3562, 127
      %v3603 = vpop.permute.xlu0 %3602
      %3604 = vrot.lane.b32.xlu0 %v3563, 127
      %v3605 = vpop.permute.xlu0 %3604
      %v3609 = vsel %vm1446, %v3593, 0
      %v3612 = vsel %vm1446, %v3595, 0
      %v3615 = vsel %vm1446, %v3597, 0
      %v3618 = vsel %vm1446, %v3599, 0
      %3620 = vmatpush.bf16.msra.mxu0 0
      %3621 = vmatpush.bf16.msra.mxu0 0
      %3622 = vmatpush.bf16.msra.mxu0 0
      %3623 = vmatpush.bf16.msra.mxu0 0
      %3624 = vmatpush.bf16.msra.mxu0 0
      %3625 = vmatpush.bf16.msra.mxu0 0
      %3626 = vmatpush.bf16.msra.mxu0 %v3605
      %3627 = vmatpush.bf16.msra.mxu0 %v3603
      %3628 = vmatmul.bf16.gmra.mxu0 %v3609
      %v3629 = vpop.f32.mrf.mxu0
      %v3630 = vadd.f32 0.0, %v3629
      %v3631 = vpop.f32.mrf.mxu0
      %v3632 = vadd.f32 0.0, %v3631
      %3633 = vmatmul.bf16.gmra.mxu0 %v3612
      %v3634 = vpop.f32.mrf.mxu0
      %v3635 = vadd.f32 0.0, %v3634
      %v3636 = vpop.f32.mrf.mxu0
      %v3637 = vadd.f32 0.0, %v3636
      %3638 = vmatmul.bf16.gmra.mxu0 %v3615
      %v3639 = vpop.f32.mrf.mxu0
      %v3640 = vadd.f32 0.0, %v3639
      %v3641 = vpop.f32.mrf.mxu0
      %v3642 = vadd.f32 0.0, %v3641
      %3643 = vmatmul.bf16.gmra.mxu0 %v3618
      %v3644 = vpop.f32.mrf.mxu0
      %v3645 = vadd.f32 0.0, %v3644
      %v3646 = vpop.f32.mrf.mxu0
      %v3647 = vadd.f32 0.0, %v3646
      %3648 = vdwg.mxu0
      %v3650 = vsel %vm1446, %v3588, 0
      %v3653 = vsel %vm1446, %v3589, 0
      %v3656 = vsel %vm1446, %v3590, 0
      %v3659 = vsel %vm1446, %v3591, 0
      %3661 = vmatpush.bf16.msra.mxu0 0
      %3662 = vmatpush.bf16.msra.mxu0 0
      %3663 = vmatpush.bf16.msra.mxu0 0
      %3664 = vmatpush.bf16.msra.mxu0 0
      %3665 = vmatpush.bf16.msra.mxu0 0
      %3666 = vmatpush.bf16.msra.mxu0 0
      %3667 = vmatpush.bf16.msra.mxu0 %v3563
      %3668 = vmatpush.bf16.msra.mxu0 %v3562
      %3669 = vmatmul.bf16.gmra.mxu0 %v3650
      %v3670 = vpop.f32.mrf.mxu0
      %v3671 = vadd.f32 %v3630, %v3670
      %v3672 = vpop.f32.mrf.mxu0
      %v3673 = vadd.f32 %v3632, %v3672
      %3674 = vmatmul.bf16.gmra.mxu0 %v3653
      %v3675 = vpop.f32.mrf.mxu0
      %v3676 = vadd.f32 %v3635, %v3675
      %v3677 = vpop.f32.mrf.mxu0
      %v3678 = vadd.f32 %v3637, %v3677
      %3679 = vmatmul.bf16.gmra.mxu0 %v3656
      %v3680 = vpop.f32.mrf.mxu0
      %v3681 = vadd.f32 %v3640, %v3680
      %v3682 = vpop.f32.mrf.mxu0
      %v3683 = vadd.f32 %v3642, %v3682
      %3684 = vmatmul.bf16.gmra.mxu0 %v3659
      %v3685 = vpop.f32.mrf.mxu0
      %v3686 = vadd.f32 %v3645, %v3685
      %v3687 = vpop.f32.mrf.mxu0
      %v3688 = vadd.f32 %v3647, %v3687
      %3689 = vdwg.mxu0
      %3690 = vrot.lane.b32.xlu0 %v3588, 64
      %v3691 = vpop.permute.xlu0 %3690
      %3692 = vrot.lane.b32.xlu0 %v3589, 64
      %v3693 = vpop.permute.xlu0 %3692
      %3694 = vrot.lane.b32.xlu0 %v3590, 64
      %v3695 = vpop.permute.xlu0 %3694
      %3696 = vrot.lane.b32.xlu0 %v3591, 64
      %v3697 = vpop.permute.xlu0 %3696
      %3698 = vrot.lane.b32.xlu0 %v3562, 126
      %v3699 = vpop.permute.xlu0 %3698
      %3700 = vrot.lane.b32.xlu0 %v3563, 126
      %v3701 = vpop.permute.xlu0 %3700
      %v3705 = vsel %vm1446, %v3691, 0
      %v3708 = vsel %vm1446, %v3693, 0
      %v3711 = vsel %vm1446, %v3695, 0
      %v3714 = vsel %vm1446, %v3697, 0
      %3716 = vmatpush.bf16.msra.mxu0 0
      %3717 = vmatpush.bf16.msra.mxu0 0
      %3718 = vmatpush.bf16.msra.mxu0 0
      %3719 = vmatpush.bf16.msra.mxu0 0
      %3720 = vmatpush.bf16.msra.mxu0 0
      %3721 = vmatpush.bf16.msra.mxu0 0
      %3722 = vmatpush.bf16.msra.mxu0 %v3701
      %3723 = vmatpush.bf16.msra.mxu0 %v3699
      %3724 = vmatmul.bf16.gmra.mxu0 %v3705
      %v3725 = vpop.f32.mrf.mxu0
      %v3726 = vadd.f32 0.0, %v3725
      %v3727 = vpop.f32.mrf.mxu0
      %v3728 = vadd.f32 0.0, %v3727
      %3729 = vmatmul.bf16.gmra.mxu0 %v3708
      %v3730 = vpop.f32.mrf.mxu0
      %v3731 = vadd.f32 0.0, %v3730
      %v3732 = vpop.f32.mrf.mxu0
      %v3733 = vadd.f32 0.0, %v3732
      %3734 = vmatmul.bf16.gmra.mxu0 %v3711
      %v3735 = vpop.f32.mrf.mxu0
      %v3736 = vadd.f32 0.0, %v3735
      %v3737 = vpop.f32.mrf.mxu0
      %v3738 = vadd.f32 0.0, %v3737
      %3739 = vmatmul.bf16.gmra.mxu0 %v3714
      %v3740 = vpop.f32.mrf.mxu0
      %v3741 = vadd.f32 0.0, %v3740
      %v3742 = vpop.f32.mrf.mxu0
      %v3743 = vadd.f32 0.0, %v3742
      %3744 = vdwg.mxu0
      %v3745 = vadd.f32 %v3671, %v3726
      %v3746 = vadd.f32 %v3673, %v3728
      %v3747 = vadd.f32 %v3676, %v3731
      %v3748 = vadd.f32 %v3678, %v3733
      %v3749 = vadd.f32 %v3681, %v3736
      %v3750 = vadd.f32 %v3683, %v3738
      %v3751 = vadd.f32 %v3686, %v3741
      %v3752 = vadd.f32 %v3688, %v3743
      %3753 = vrot.lane.b32.xlu0 %v3588, 32
      %v3754 = vpop.permute.xlu0 %3753
      %3755 = vrot.lane.b32.xlu0 %v3589, 32
      %v3756 = vpop.permute.xlu0 %3755
      %3757 = vrot.lane.b32.xlu0 %v3590, 32
      %v3758 = vpop.permute.xlu0 %3757
      %3759 = vrot.lane.b32.xlu0 %v3591, 32
      %v3760 = vpop.permute.xlu0 %3759
      %3761 = vrot.lane.b32.xlu0 %v3562, 122
      %v3762 = vpop.permute.xlu0 %3761
      %3763 = vrot.lane.b32.xlu0 %v3563, 122
      %v3764 = vpop.permute.xlu0 %3763
      %v3768 = vsel %vm1446, %v3754, 0
      %v3771 = vsel %vm1446, %v3756, 0
      %v3774 = vsel %vm1446, %v3758, 0
      %v3777 = vsel %vm1446, %v3760, 0
      %3779 = vmatpush.bf16.msra.mxu0 0
      %3780 = vmatpush.bf16.msra.mxu0 0
      %3781 = vmatpush.bf16.msra.mxu0 0
      %3782 = vmatpush.bf16.msra.mxu0 0
      %3783 = vmatpush.bf16.msra.mxu0 0
      %3784 = vmatpush.bf16.msra.mxu0 0
      %3785 = vmatpush.bf16.msra.mxu0 %v3764
      %3786 = vmatpush.bf16.msra.mxu0 %v3762
      %3787 = vmatmul.bf16.gmra.mxu0 %v3768
      %v3788 = vpop.f32.mrf.mxu0
      %v3789 = vadd.f32 0.0, %v3788
      %v3790 = vpop.f32.mrf.mxu0
      %v3791 = vadd.f32 0.0, %v3790
      %3792 = vmatmul.bf16.gmra.mxu0 %v3771
      %v3793 = vpop.f32.mrf.mxu0
      %v3794 = vadd.f32 0.0, %v3793
      %v3795 = vpop.f32.mrf.mxu0
      %v3796 = vadd.f32 0.0, %v3795
      %3797 = vmatmul.bf16.gmra.mxu0 %v3774
      %v3798 = vpop.f32.mrf.mxu0
      %v3799 = vadd.f32 0.0, %v3798
      %v3800 = vpop.f32.mrf.mxu0
      %v3801 = vadd.f32 0.0, %v3800
      %3802 = vmatmul.bf16.gmra.mxu0 %v3777
      %v3803 = vpop.f32.mrf.mxu0
      %v3804 = vadd.f32 0.0, %v3803
      %v3805 = vpop.f32.mrf.mxu0
      %v3806 = vadd.f32 0.0, %v3805
      %3807 = vdwg.mxu0
      %v3808 = vadd.f32 %v3745, %v3789
      %v3809 = vadd.f32 %v3746, %v3791
      %v3810 = vadd.f32 %v3747, %v3794
      %v3811 = vadd.f32 %v3748, %v3796
      %v3812 = vadd.f32 %v3749, %v3799
      %v3813 = vadd.f32 %v3750, %v3801
      %v3814 = vadd.f32 %v3751, %v3804
      %v3815 = vadd.f32 %v3752, %v3806
      %v3816 = vld [vmem:[%s16 + $0x4] sm:$0xf]
      %v3817 = vld [vmem:[%s16 + $0x10] sm:$0xf]
      %v3818 = vld [vmem:[%s16 + $0x1c] sm:$0xf]
      %v3819 = vld [vmem:[%s16 + $0x28] sm:$0xf]
      %v3820 = vld [vmem:[%s16 + $0x34] sm:$0xf]
      %v3821 = vld [vmem:[%s16 + $0x40] sm:$0xf]
      %v3822 = vld [vmem:[%s16 + $0x4c] sm:$0xf]
      %v3823 = vld [vmem:[%s16 + $0x58] sm:$0xf]
      %v3832 = vunpack.c.l.b16 %v3816
      %v3833 = vunpack.c.l.b16 %v3817
      %v3834 = vunpack.c.l.b16 %v3818
      %v3835 = vunpack.c.l.b16 %v3819
      %v3836 = vunpack.c.l.b16 %v3820
      %v3837 = vunpack.c.l.b16 %v3821
      %v3838 = vunpack.c.l.b16 %v3822
      %v3839 = vunpack.c.l.b16 %v3823
      %v3840 = vpack.c.b16 %v3833, %v3832
      %v3841 = vpack.c.b16 %v3835, %v3834
      %v3842 = vpack.c.b16 %v3837, %v3836
      %v3843 = vpack.c.b16 %v3839, %v3838
      %3844 = vrot.lane.b32.xlu0 %v3562, 121
      %v3845 = vpop.permute.xlu0 %3844
      %3846 = vrot.lane.b32.xlu0 %v3563, 121
      %v3847 = vpop.permute.xlu0 %3846
      %v3851 = vsel %vm1446, %v3840, 0
      %v3854 = vsel %vm1446, %v3841, 0
      %v3857 = vsel %vm1446, %v3842, 0
      %v3860 = vsel %vm1446, %v3843, 0
      %3862 = vmatpush.bf16.msra.mxu0 0
      %3863 = vmatpush.bf16.msra.mxu0 0
      %3864 = vmatpush.bf16.msra.mxu0 0
      %3865 = vmatpush.bf16.msra.mxu0 0
      %3866 = vmatpush.bf16.msra.mxu0 0
      %3867 = vmatpush.bf16.msra.mxu0 0
      %3868 = vmatpush.bf16.msra.mxu0 %v3847
      %3869 = vmatpush.bf16.msra.mxu0 %v3845
      %3870 = vmatmul.bf16.gmra.mxu0 %v3851
      %v3871 = vpop.f32.mrf.mxu0
      %v3872 = vadd.f32 0.0, %v3871
      %v3873 = vpop.f32.mrf.mxu0
      %v3874 = vadd.f32 0.0, %v3873
      %3875 = vmatmul.bf16.gmra.mxu0 %v3854
      %v3876 = vpop.f32.mrf.mxu0
      %v3877 = vadd.f32 0.0, %v3876
      %v3878 = vpop.f32.mrf.mxu0
      %v3879 = vadd.f32 0.0, %v3878
      %3880 = vmatmul.bf16.gmra.mxu0 %v3857
      %v3881 = vpop.f32.mrf.mxu0
      %v3882 = vadd.f32 0.0, %v3881
      %v3883 = vpop.f32.mrf.mxu0
      %v3884 = vadd.f32 0.0, %v3883
      %3885 = vmatmul.bf16.gmra.mxu0 %v3860
      %v3886 = vpop.f32.mrf.mxu0
      %v3887 = vadd.f32 0.0, %v3886
      %v3888 = vpop.f32.mrf.mxu0
      %v3889 = vadd.f32 0.0, %v3888
      %3890 = vdwg.mxu0
      %v3891 = vadd.f32 %v3808, %v3872
      %v3892 = vadd.f32 %v3809, %v3874
      %v3893 = vadd.f32 %v3810, %v3877
      %v3894 = vadd.f32 %v3811, %v3879
      %v3895 = vadd.f32 %v3812, %v3882
      %v3896 = vadd.f32 %v3813, %v3884
      %v3897 = vadd.f32 %v3814, %v3887
      %v3898 = vadd.f32 %v3815, %v3889
      %3899 = vrot.lane.b32.xlu0 %v3840, 96
      %v3900 = vpop.permute.xlu0 %3899
      %3901 = vrot.lane.b32.xlu0 %v3841, 96
      %v3902 = vpop.permute.xlu0 %3901
      %3903 = vrot.lane.b32.xlu0 %v3842, 96
      %v3904 = vpop.permute.xlu0 %3903
      %3905 = vrot.lane.b32.xlu0 %v3843, 96
      %v3906 = vpop.permute.xlu0 %3905
      %3907 = vrot.lane.b32.xlu0 %v3562, 120
      %v3908 = vpop.permute.xlu0 %3907
      %3909 = vrot.lane.b32.xlu0 %v3563, 120
      %v3910 = vpop.permute.xlu0 %3909
      %v3914 = vsel %vm1446, %v3900, 0
      %v3917 = vsel %vm1446, %v3902, 0
      %v3920 = vsel %vm1446, %v3904, 0
      %v3923 = vsel %vm1446, %v3906, 0
      %3925 = vmatpush.bf16.msra.mxu0 0
      %3926 = vmatpush.bf16.msra.mxu0 0
      %3927 = vmatpush.bf16.msra.mxu0 0
      %3928 = vmatpush.bf16.msra.mxu0 0
      %3929 = vmatpush.bf16.msra.mxu0 0
      %3930 = vmatpush.bf16.msra.mxu0 0
      %3931 = vmatpush.bf16.msra.mxu0 %v3910
      %3932 = vmatpush.bf16.msra.mxu0 %v3908
      %3933 = vmatmul.bf16.gmra.mxu0 %v3914
      %v3934 = vpop.f32.mrf.mxu0
      %v3935 = vadd.f32 0.0, %v3934
      %v3936 = vpop.f32.mrf.mxu0
      %v3937 = vadd.f32 0.0, %v3936
      %3938 = vmatmul.bf16.gmra.mxu0 %v3917
      %v3939 = vpop.f32.mrf.mxu0
      %v3940 = vadd.f32 0.0, %v3939
      %v3941 = vpop.f32.mrf.mxu0
      %v3942 = vadd.f32 0.0, %v3941
      %3943 = vmatmul.bf16.gmra.mxu0 %v3920
      %v3944 = vpop.f32.mrf.mxu0
      %v3945 = vadd.f32 0.0, %v3944
      %v3946 = vpop.f32.mrf.mxu0
      %v3947 = vadd.f32 0.0, %v3946
      %3948 = vmatmul.bf16.gmra.mxu0 %v3923
      %v3949 = vpop.f32.mrf.mxu0
      %v3950 = vadd.f32 0.0, %v3949
      %v3951 = vpop.f32.mrf.mxu0
      %v3952 = vadd.f32 0.0, %v3951
      %3953 = vdwg.mxu0
      %v3954 = vadd.f32 %v3891, %v3935
      %v3955 = vadd.f32 %v3892, %v3937
      %v3956 = vadd.f32 %v3893, %v3940
      %v3957 = vadd.f32 %v3894, %v3942
      %v3958 = vadd.f32 %v3895, %v3945
      %v3959 = vadd.f32 %v3896, %v3947
      %v3960 = vadd.f32 %v3897, %v3950
      %v3961 = vadd.f32 %v3898, %v3952
      %3962 = vrot.lane.b32.xlu0 %v3840, 64
      %v3963 = vpop.permute.xlu0 %3962
      %3964 = vrot.lane.b32.xlu0 %v3841, 64
      %v3965 = vpop.permute.xlu0 %3964
      %3966 = vrot.lane.b32.xlu0 %v3842, 64
      %v3967 = vpop.permute.xlu0 %3966
      %3968 = vrot.lane.b32.xlu0 %v3843, 64
      %v3969 = vpop.permute.xlu0 %3968
      %3970 = vrot.lane.b32.xlu0 %v3562, 116
      %v3971 = vpop.permute.xlu0 %3970
      %3972 = vrot.lane.b32.xlu0 %v3563, 116
      %v3973 = vpop.permute.xlu0 %3972
      %v3977 = vsel %vm1446, %v3963, 0
      %v3980 = vsel %vm1446, %v3965, 0
      %v3983 = vsel %vm1446, %v3967, 0
      %v3986 = vsel %vm1446, %v3969, 0
      %3988 = vmatpush.bf16.msra.mxu0 0
      %3989 = vmatpush.bf16.msra.mxu0 0
      %3990 = vmatpush.bf16.msra.mxu0 0
      %3991 = vmatpush.bf16.msra.mxu0 0
      %3992 = vmatpush.bf16.msra.mxu0 0
      %3993 = vmatpush.bf16.msra.mxu0 0
      %3994 = vmatpush.bf16.msra.mxu0 %v3973
      %3995 = vmatpush.bf16.msra.mxu0 %v3971
      %3996 = vmatmul.bf16.gmra.mxu0 %v3977
      %v3997 = vpop.f32.mrf.mxu0
      %v3998 = vadd.f32 0.0, %v3997
      %v3999 = vpop.f32.mrf.mxu0
      %v4000 = vadd.f32 0.0, %v3999
      %4001 = vmatmul.bf16.gmra.mxu0 %v3980
      %v4002 = vpop.f32.mrf.mxu0
      %v4003 = vadd.f32 0.0, %v4002
      %v4004 = vpop.f32.mrf.mxu0
      %v4005 = vadd.f32 0.0, %v4004
      %4006 = vmatmul.bf16.gmra.mxu0 %v3983
      %v4007 = vpop.f32.mrf.mxu0
      %v4008 = vadd.f32 0.0, %v4007
      %v4009 = vpop.f32.mrf.mxu0
      %v4010 = vadd.f32 0.0, %v4009
      %4011 = vmatmul.bf16.gmra.mxu0 %v3986
      %v4012 = vpop.f32.mrf.mxu0
      %v4013 = vadd.f32 0.0, %v4012
      %v4014 = vpop.f32.mrf.mxu0
      %v4015 = vadd.f32 0.0, %v4014
      %4016 = vdwg.mxu0
      %v4017 = vadd.f32 %v3954, %v3998
      %v4018 = vadd.f32 %v3955, %v4000
      %v4019 = vadd.f32 %v3956, %v4003
      %v4020 = vadd.f32 %v3957, %v4005
      %v4021 = vadd.f32 %v3958, %v4008
      %v4022 = vadd.f32 %v3959, %v4010
      %v4023 = vadd.f32 %v3960, %v4013
      %v4024 = vadd.f32 %v3961, %v4015
      %4025 = vrot.lane.b32.xlu0 %v3840, 32
      %v4026 = vpop.permute.xlu0 %4025
      %4027 = vrot.lane.b32.xlu0 %v3841, 32
      %v4028 = vpop.permute.xlu0 %4027
      %4029 = vrot.lane.b32.xlu0 %v3842, 32
      %v4030 = vpop.permute.xlu0 %4029
      %4031 = vrot.lane.b32.xlu0 %v3843, 32
      %v4032 = vpop.permute.xlu0 %4031
      %4033 = vrot.lane.b32.xlu0 %v3562, 115
      %v4034 = vpop.permute.xlu0 %4033
      %4035 = vrot.lane.b32.xlu0 %v3563, 115
      %v4036 = vpop.permute.xlu0 %4035
      %v4040 = vsel %vm1446, %v4026, 0
      %v4043 = vsel %vm1446, %v4028, 0
      %v4046 = vsel %vm1446, %v4030, 0
      %v4049 = vsel %vm1446, %v4032, 0
      %4051 = vmatpush.bf16.msra.mxu0 0
      %4052 = vmatpush.bf16.msra.mxu0 0
      %4053 = vmatpush.bf16.msra.mxu0 0
      %4054 = vmatpush.bf16.msra.mxu0 0
      %4055 = vmatpush.bf16.msra.mxu0 0
      %4056 = vmatpush.bf16.msra.mxu0 0
      %4057 = vmatpush.bf16.msra.mxu0 %v4036
      %4058 = vmatpush.bf16.msra.mxu0 %v4034
      %4059 = vmatmul.bf16.gmra.mxu0 %v4040
      %v4060 = vpop.f32.mrf.mxu0
      %v4061 = vadd.f32 0.0, %v4060
      %v4062 = vpop.f32.mrf.mxu0
      %v4063 = vadd.f32 0.0, %v4062
      %4064 = vmatmul.bf16.gmra.mxu0 %v4043
      %v4065 = vpop.f32.mrf.mxu0
      %v4066 = vadd.f32 0.0, %v4065
      %v4067 = vpop.f32.mrf.mxu0
      %v4068 = vadd.f32 0.0, %v4067
      %4069 = vmatmul.bf16.gmra.mxu0 %v4046
      %v4070 = vpop.f32.mrf.mxu0
      %v4071 = vadd.f32 0.0, %v4070
      %v4072 = vpop.f32.mrf.mxu0
      %v4073 = vadd.f32 0.0, %v4072
      %4074 = vmatmul.bf16.gmra.mxu0 %v4049
      %v4075 = vpop.f32.mrf.mxu0
      %v4076 = vadd.f32 0.0, %v4075
      %v4077 = vpop.f32.mrf.mxu0
      %v4078 = vadd.f32 0.0, %v4077
      %4079 = vdwg.mxu0
      %v4080 = vadd.f32 %v4017, %v4061
      %v4081 = vadd.f32 %v4018, %v4063
      %v4082 = vadd.f32 %v4019, %v4066
      %v4083 = vadd.f32 %v4020, %v4068
      %v4084 = vadd.f32 %v4021, %v4071
      %v4085 = vadd.f32 %v4022, %v4073
      %v4086 = vadd.f32 %v4023, %v4076
      %v4087 = vadd.f32 %v4024, %v4078
      %v4088 = vld [vmem:[%s16 + $0x8] sm:$0xf]
      %v4089 = vld [vmem:[%s16 + $0x14] sm:$0xf]
      %v4090 = vld [vmem:[%s16 + $0x20] sm:$0xf]
      %v4091 = vld [vmem:[%s16 + $0x2c] sm:$0xf]
      %v4092 = vld [vmem:[%s16 + $0x38] sm:$0xf]
      %v4093 = vld [vmem:[%s16 + $0x44] sm:$0xf]
      %v4094 = vld [vmem:[%s16 + $0x50] sm:$0xf]
      %v4095 = vld [vmem:[%s16 + $0x5c] sm:$0xf]
      %v4104 = vunpack.c.l.b16 %v4088
      %v4105 = vunpack.c.l.b16 %v4089
      %v4106 = vunpack.c.l.b16 %v4090
      %v4107 = vunpack.c.l.b16 %v4091
      %v4108 = vunpack.c.l.b16 %v4092
      %v4109 = vunpack.c.l.b16 %v4093
      %v4110 = vunpack.c.l.b16 %v4094
      %v4111 = vunpack.c.l.b16 %v4095
      %v4112 = vpack.c.b16 %v4105, %v4104
      %v4113 = vpack.c.b16 %v4107, %v4106
      %v4114 = vpack.c.b16 %v4109, %v4108
      %v4115 = vpack.c.b16 %v4111, %v4110
      %4116 = vrot.lane.b32.xlu0 %v3562, 114
      %v4117 = vpop.permute.xlu0 %4116
      %4118 = vrot.lane.b32.xlu0 %v3563, 114
      %v4119 = vpop.permute.xlu0 %4118
      %v4123 = vsel %vm1446, %v4112, 0
      %v4126 = vsel %vm1446, %v4113, 0
      %v4129 = vsel %vm1446, %v4114, 0
      %v4132 = vsel %vm1446, %v4115, 0
      %4134 = vmatpush.bf16.msra.mxu0 0
      %4135 = vmatpush.bf16.msra.mxu0 0
      %4136 = vmatpush.bf16.msra.mxu0 0
      %4137 = vmatpush.bf16.msra.mxu0 0
      %4138 = vmatpush.bf16.msra.mxu0 0
      %4139 = vmatpush.bf16.msra.mxu0 0
      %4140 = vmatpush.bf16.msra.mxu0 %v4119
      %4141 = vmatpush.bf16.msra.mxu0 %v4117
      %4142 = vmatmul.bf16.gmra.mxu0 %v4123
      %v4143 = vpop.f32.mrf.mxu0
      %v4144 = vadd.f32 0.0, %v4143
      %v4145 = vpop.f32.mrf.mxu0
      %v4146 = vadd.f32 0.0, %v4145
      %4147 = vmatmul.bf16.gmra.mxu0 %v4126
      %v4148 = vpop.f32.mrf.mxu0
      %v4149 = vadd.f32 0.0, %v4148
      %v4150 = vpop.f32.mrf.mxu0
      %v4151 = vadd.f32 0.0, %v4150
      %4152 = vmatmul.bf16.gmra.mxu0 %v4129
      %v4153 = vpop.f32.mrf.mxu0
      %v4154 = vadd.f32 0.0, %v4153
      %v4155 = vpop.f32.mrf.mxu0
      %v4156 = vadd.f32 0.0, %v4155
      %4157 = vmatmul.bf16.gmra.mxu0 %v4132
      %v4158 = vpop.f32.mrf.mxu0
      %v4159 = vadd.f32 0.0, %v4158
      %v4160 = vpop.f32.mrf.mxu0
      %v4161 = vadd.f32 0.0, %v4160
      %4162 = vdwg.mxu0
      %v4163 = vadd.f32 %v4080, %v4144
      %v4164 = vadd.f32 %v4081, %v4146
      %v4165 = vadd.f32 %v4082, %v4149
      %v4166 = vadd.f32 %v4083, %v4151
      %v4167 = vadd.f32 %v4084, %v4154
      %v4168 = vadd.f32 %v4085, %v4156
      %v4169 = vadd.f32 %v4086, %v4159
      %v4170 = vadd.f32 %v4087, %v4161
      %v4171 = vld [vmem:[%s17] sm:$0xff]
      %v4172 = vld [vmem:[%s17 + $0x8] sm:$0xff]
      %v4173 = vld [vmem:[%s17 + $0x10] sm:$0xff]
      %v4174 = vld [vmem:[%s17 + $0x18] sm:$0xff]
      %v4175 = vld [vmem:[%s17 + $0x20] sm:$0xff]
      %v4176 = vld [vmem:[%s17 + $0x28] sm:$0xff]
      %v4177 = vld [vmem:[%s17 + $0x30] sm:$0xff]
      %v4178 = vld [vmem:[%s17 + $0x38] sm:$0xff]
      %4180 = vset.pattern.permute.xlu0 0
      %4181 = vperm.xlu0 %4180, %v4171
      %v4182 = vpop.permute.xlu0 %4181
      %4185 = vset.pattern.permute.xlu0 0
      %4186 = vperm.xlu0 %4185, %v4172
      %v4187 = vpop.permute.xlu0 %4186
      %4190 = vset.pattern.permute.xlu0 0
      %4191 = vperm.xlu0 %4190, %v4173
      %v4192 = vpop.permute.xlu0 %4191
      %4195 = vset.pattern.permute.xlu0 0
      %4196 = vperm.xlu0 %4195, %v4174
      %v4197 = vpop.permute.xlu0 %4196
      %4200 = vset.pattern.permute.xlu0 0
      %4201 = vperm.xlu0 %4200, %v4175
      %v4202 = vpop.permute.xlu0 %4201
      %4205 = vset.pattern.permute.xlu0 0
      %4206 = vperm.xlu0 %4205, %v4176
      %v4207 = vpop.permute.xlu0 %4206
      %4210 = vset.pattern.permute.xlu0 0
      %4211 = vperm.xlu0 %4210, %v4177
      %v4212 = vpop.permute.xlu0 %4211
      %4215 = vset.pattern.permute.xlu0 0
      %4216 = vperm.xlu0 %4215, %v4178
      %v4217 = vpop.permute.xlu0 %4216
      %v4219 = vadd.f32 %v4163, %v4182
      %v4220 = vadd.f32 %v4164, %v4187
      %v4221 = vadd.f32 %v4165, %v4192
      %v4222 = vadd.f32 %v4166, %v4197
      %v4223 = vadd.f32 %v4167, %v4202
      %v4224 = vadd.f32 %v4168, %v4207
      %v4225 = vadd.f32 %v4169, %v4212
      %v4226 = vadd.f32 %v4170, %v4217
      %vm4227 = vcmp.ge.f32.partialorder %v4219, 0.0
      %vm4228 = vcmp.ge.f32.partialorder %v4220, 0.0
      %vm4229 = vcmp.ge.f32.partialorder %v4221, 0.0
      %vm4230 = vcmp.ge.f32.partialorder %v4222, 0.0
      %vm4231 = vcmp.ge.f32.partialorder %v4223, 0.0
      %vm4232 = vcmp.ge.f32.partialorder %v4224, 0.0
      %vm4233 = vcmp.ge.f32.partialorder %v4225, 0.0
      %vm4234 = vcmp.ge.f32.partialorder %v4226, 0.0
      %v4235 = vmul.f32 %v4219, 0.2
      %v4236 = vmul.f32 %v4220, 0.2
      %v4237 = vmul.f32 %v4221, 0.2
      %v4238 = vmul.f32 %v4222, 0.2
      %v4239 = vmul.f32 %v4223, 0.2
      %v4240 = vmul.f32 %v4224, 0.2
      %v4241 = vmul.f32 %v4225, 0.2
      %v4242 = vmul.f32 %v4226, 0.2
      %v4243 = vsel %vm4227, %v4219, %v4235
      %v4244 = vsel %vm4228, %v4220, %v4236
      %v4245 = vsel %vm4229, %v4221, %v4237
      %v4246 = vsel %vm4230, %v4222, %v4238
      %v4247 = vsel %vm4231, %v4223, %v4239
      %v4248 = vsel %vm4232, %v4224, %v4240
      %v4249 = vsel %vm4233, %v4225, %v4241
      %v4250 = vsel %vm4234, %v4226, %v4242
      %v4251 = vld [vmem:[%s18] sm:$0xff]
      %v4252 = vld [vmem:[%s18 + $0x8] sm:$0xff]
      %v4253 = vld [vmem:[%s18 + $0x10] sm:$0xff]
      %v4255 = vsel %vm3520, %v4243, 0
      %v4258 = vsel %vm3520, %v4244, 0
      %v4261 = vsel %vm3520, %v4245, 0
      %v4264 = vsel %vm3520, %v4246, 0
      %v4267 = vsel %vm3520, %v4247, 0
      %v4270 = vsel %vm3520, %v4248, 0
      %v4273 = vsel %vm3520, %v4249, 0
      %v4276 = vsel %vm3520, %v4250, 0
      %4278 = vmatpush.msra.mxu0 0.0
      %4279 = vmatpush.msra.mxu0 0.0
      %4280 = vmatpush.msra.mxu0 0.0
      %4281 = vmatpush.msra.mxu0 0.0
      %4282 = vmatpush.msra.mxu0 0.0
      %4283 = vmatpush.msra.mxu0 0.0
      %4284 = vmatpush.msra.mxu0 0.0
      %4285 = vmatpush.msra.mxu0 0.0
      %4286 = vmatpush.msra.mxu0 0.0
      %4287 = vmatpush.msra.mxu0 0.0
      %4288 = vmatpush.msra.mxu0 0.0
      %4289 = vmatpush.msra.mxu0 0.0
      %4290 = vmatpush.msra.mxu0 0.0
      %4291 = vmatpush.msra.mxu0 %v4253
      %4292 = vmatpush.msra.mxu0 %v4252
      %4293 = vmatpush.msra.mxu0 %v4251
      %4294 = vmatmul.f32.gmra.mxu0 %v4255
      %v4295 = vpop.f32.mrf.mxu0
      %v4296 = vadd.f32 0.0, %v4295
      %4297 = vmatmul.f32.gmra.mxu0 %v4258
      %v4298 = vpop.f32.mrf.mxu0
      %v4299 = vadd.f32 0.0, %v4298
      %4300 = vmatmul.f32.gmra.mxu0 %v4261
      %v4301 = vpop.f32.mrf.mxu0
      %v4302 = vadd.f32 0.0, %v4301
      %4303 = vmatmul.f32.gmra.mxu0 %v4264
      %v4304 = vpop.f32.mrf.mxu0
      %v4305 = vadd.f32 0.0, %v4304
      %4306 = vmatmul.f32.gmra.mxu0 %v4267
      %v4307 = vpop.f32.mrf.mxu0
      %v4308 = vadd.f32 0.0, %v4307
      %4309 = vmatmul.f32.gmra.mxu0 %v4270
      %v4310 = vpop.f32.mrf.mxu0
      %v4311 = vadd.f32 0.0, %v4310
      %4312 = vmatmul.f32.gmra.mxu0 %v4273
      %v4313 = vpop.f32.mrf.mxu0
      %v4314 = vadd.f32 0.0, %v4313
      %4315 = vmatmul.f32.gmra.mxu0 %v4276
      %v4316 = vpop.f32.mrf.mxu0
      %v4317 = vadd.f32 0.0, %v4316
      %4318 = vdwg.mxu0
      %v4319 = vpack.c.bf16 %v4299, %v4296
      %v4320 = vpack.c.bf16 %v4305, %v4302
      %v4321 = vpack.c.bf16 %v4311, %v4308
      %v4322 = vpack.c.bf16 %v4317, %v4314
      %v4323 = vld [vmem:[%s19] sm:$0xf]
      %v4324 = vld [vmem:[%s19 + $0x14] sm:$0xf]
      %v4325 = vld [vmem:[%s19 + $0x28] sm:$0xf]
      %v4326 = vld [vmem:[%s19 + $0x3c] sm:$0xf]
      %v4327 = vld [vmem:[%s19 + $0x50] sm:$0xf]
      %v4328 = vld [vmem:[%s19 + $0x64] sm:$0xf]
      %v4329 = vld [vmem:[%s19 + $0x78] sm:$0xf]
      %v4330 = vld [vmem:[%s19 + $0x8c] sm:$0xf]
      %v4339 = vunpack.c.l.b16 %v4323
      %v4340 = vunpack.c.l.b16 %v4324
      %v4341 = vunpack.c.l.b16 %v4325
      %v4342 = vunpack.c.l.b16 %v4326
      %v4343 = vunpack.c.l.b16 %v4327
      %v4344 = vunpack.c.l.b16 %v4328
      %v4345 = vunpack.c.l.b16 %v4329
      %v4346 = vunpack.c.l.b16 %v4330
      %v4347 = vpack.c.b16 %v4340, %v4339
      %v4348 = vpack.c.b16 %v4342, %v4341
      %v4349 = vpack.c.b16 %v4344, %v4343
      %v4350 = vpack.c.b16 %v4346, %v4345
      %4351 = vrot.lane.b32.xlu0 %v4347, 64
      %v4352 = vpop.permute.xlu0 %4351
      %4353 = vrot.lane.b32.xlu0 %v4348, 64
      %v4354 = vpop.permute.xlu0 %4353
      %4355 = vrot.lane.b32.xlu0 %v4349, 64
      %v4356 = vpop.permute.xlu0 %4355
      %4357 = vrot.lane.b32.xlu0 %v4350, 64
      %v4358 = vpop.permute.xlu0 %4357
      %4363 = vrot.lane.b32.xlu0 %v4319, 127
      %v4364 = vpop.permute.xlu0 %4363
      %4365 = vrot.lane.b32.xlu0 %v4320, 127
      %v4366 = vpop.permute.xlu0 %4365
      %4367 = vrot.lane.b32.xlu0 %v4321, 127
      %v4368 = vpop.permute.xlu0 %4367
      %4369 = vrot.lane.b32.xlu0 %v4322, 127
      %v4370 = vpop.permute.xlu0 %4369
      %vm4375 = vcmask 523264
      %v4377 = vsel %vm4375, %v4352, 0
      %v4380 = vsel %vm4375, %v4354, 0
      %v4383 = vsel %vm4375, %v4356, 0
      %v4386 = vsel %vm4375, %v4358, 0
      %4388 = vmatpush.bf16.msra.mxu0 0
      %4389 = vmatpush.bf16.msra.mxu0 0
      %4390 = vmatpush.bf16.msra.mxu0 0
      %4391 = vmatpush.bf16.msra.mxu0 0
      %4392 = vmatpush.bf16.msra.mxu0 %v4370
      %4393 = vmatpush.bf16.msra.mxu0 %v4368
      %4394 = vmatpush.bf16.msra.mxu0 %v4366
      %4395 = vmatpush.bf16.msra.mxu0 %v4364
      %4396 = vmatmul.bf16.gmra.mxu0 %v4377
      %v4397 = vpop.f32.mrf.mxu0
      %v4398 = vadd.f32 0.0, %v4397
      %v4399 = vpop.f32.mrf.mxu0
      %v4400 = vadd.f32 0.0, %v4399
      %4401 = vmatmul.bf16.gmra.mxu0 %v4380
      %v4402 = vpop.f32.mrf.mxu0
      %v4403 = vadd.f32 0.0, %v4402
      %v4404 = vpop.f32.mrf.mxu0
      %v4405 = vadd.f32 0.0, %v4404
      %4406 = vmatmul.bf16.gmra.mxu0 %v4383
      %v4407 = vpop.f32.mrf.mxu0
      %v4408 = vadd.f32 0.0, %v4407
      %v4409 = vpop.f32.mrf.mxu0
      %v4410 = vadd.f32 0.0, %v4409
      %4411 = vmatmul.bf16.gmra.mxu0 %v4386
      %v4412 = vpop.f32.mrf.mxu0
      %v4413 = vadd.f32 0.0, %v4412
      %v4414 = vpop.f32.mrf.mxu0
      %v4415 = vadd.f32 0.0, %v4414
      %4416 = vdwg.mxu0
      %v4418 = vsel %vm4375, %v4347, 0
      %v4421 = vsel %vm4375, %v4348, 0
      %v4424 = vsel %vm4375, %v4349, 0
      %v4427 = vsel %vm4375, %v4350, 0
      %4429 = vmatpush.bf16.msra.mxu0 0
      %4430 = vmatpush.bf16.msra.mxu0 0
      %4431 = vmatpush.bf16.msra.mxu0 0
      %4432 = vmatpush.bf16.msra.mxu0 0
      %4433 = vmatpush.bf16.msra.mxu0 %v4322
      %4434 = vmatpush.bf16.msra.mxu0 %v4321
      %4435 = vmatpush.bf16.msra.mxu0 %v4320
      %4436 = vmatpush.bf16.msra.mxu0 %v4319
      %4437 = vmatmul.bf16.gmra.mxu0 %v4418
      %v4438 = vpop.f32.mrf.mxu0
      %v4439 = vadd.f32 %v4398, %v4438
      %v4440 = vpop.f32.mrf.mxu0
      %v4441 = vadd.f32 %v4400, %v4440
      %4442 = vmatmul.bf16.gmra.mxu0 %v4421
      %v4443 = vpop.f32.mrf.mxu0
      %v4444 = vadd.f32 %v4403, %v4443
      %v4445 = vpop.f32.mrf.mxu0
      %v4446 = vadd.f32 %v4405, %v4445
      %4447 = vmatmul.bf16.gmra.mxu0 %v4424
      %v4448 = vpop.f32.mrf.mxu0
      %v4449 = vadd.f32 %v4408, %v4448
      %v4450 = vpop.f32.mrf.mxu0
      %v4451 = vadd.f32 %v4410, %v4450
      %4452 = vmatmul.bf16.gmra.mxu0 %v4427
      %v4453 = vpop.f32.mrf.mxu0
      %v4454 = vadd.f32 %v4413, %v4453
      %v4455 = vpop.f32.mrf.mxu0
      %v4456 = vadd.f32 %v4415, %v4455
      %4457 = vdwg.mxu0
      %v4458 = vld [vmem:[%s19 + $0x4] sm:$0xf]
      %v4459 = vld [vmem:[%s19 + $0x18] sm:$0xf]
      %v4460 = vld [vmem:[%s19 + $0x2c] sm:$0xf]
      %v4461 = vld [vmem:[%s19 + $0x40] sm:$0xf]
      %v4462 = vld [vmem:[%s19 + $0x54] sm:$0xf]
      %v4463 = vld [vmem:[%s19 + $0x68] sm:$0xf]
      %v4464 = vld [vmem:[%s19 + $0x7c] sm:$0xf]
      %v4465 = vld [vmem:[%s19 + $0x90] sm:$0xf]
      %v4474 = vunpack.c.l.b16 %v4458
      %v4475 = vunpack.c.l.b16 %v4459
      %v4476 = vunpack.c.l.b16 %v4460
      %v4477 = vunpack.c.l.b16 %v4461
      %v4478 = vunpack.c.l.b16 %v4462
      %v4479 = vunpack.c.l.b16 %v4463
      %v4480 = vunpack.c.l.b16 %v4464
      %v4481 = vunpack.c.l.b16 %v4465
      %v4482 = vpack.c.b16 %v4475, %v4474
      %v4483 = vpack.c.b16 %v4477, %v4476
      %v4484 = vpack.c.b16 %v4479, %v4478
      %v4485 = vpack.c.b16 %v4481, %v4480
      %4486 = vrot.lane.b32.xlu0 %v4319, 126
      %v4487 = vpop.permute.xlu0 %4486
      %4488 = vrot.lane.b32.xlu0 %v4320, 126
      %v4489 = vpop.permute.xlu0 %4488
      %4490 = vrot.lane.b32.xlu0 %v4321, 126
      %v4491 = vpop.permute.xlu0 %4490
      %4492 = vrot.lane.b32.xlu0 %v4322, 126
      %v4493 = vpop.permute.xlu0 %4492
      %v4499 = vsel %vm4375, %v4482, 0
      %v4502 = vsel %vm4375, %v4483, 0
      %v4505 = vsel %vm4375, %v4484, 0
      %v4508 = vsel %vm4375, %v4485, 0
      %4510 = vmatpush.bf16.msra.mxu0 0
      %4511 = vmatpush.bf16.msra.mxu0 0
      %4512 = vmatpush.bf16.msra.mxu0 0
      %4513 = vmatpush.bf16.msra.mxu0 0
      %4514 = vmatpush.bf16.msra.mxu0 %v4493
      %4515 = vmatpush.bf16.msra.mxu0 %v4491
      %4516 = vmatpush.bf16.msra.mxu0 %v4489
      %4517 = vmatpush.bf16.msra.mxu0 %v4487
      %4518 = vmatmul.bf16.gmra.mxu0 %v4499
      %v4519 = vpop.f32.mrf.mxu0
      %v4520 = vadd.f32 0.0, %v4519
      %v4521 = vpop.f32.mrf.mxu0
      %v4522 = vadd.f32 0.0, %v4521
      %4523 = vmatmul.bf16.gmra.mxu0 %v4502
      %v4524 = vpop.f32.mrf.mxu0
      %v4525 = vadd.f32 0.0, %v4524
      %v4526 = vpop.f32.mrf.mxu0
      %v4527 = vadd.f32 0.0, %v4526
      %4528 = vmatmul.bf16.gmra.mxu0 %v4505
      %v4529 = vpop.f32.mrf.mxu0
      %v4530 = vadd.f32 0.0, %v4529
      %v4531 = vpop.f32.mrf.mxu0
      %v4532 = vadd.f32 0.0, %v4531
      %4533 = vmatmul.bf16.gmra.mxu0 %v4508
      %v4534 = vpop.f32.mrf.mxu0
      %v4535 = vadd.f32 0.0, %v4534
      %v4536 = vpop.f32.mrf.mxu0
      %v4537 = vadd.f32 0.0, %v4536
      %4538 = vdwg.mxu0
      %v4539 = vadd.f32 %v4439, %v4520
      %v4540 = vadd.f32 %v4441, %v4522
      %v4541 = vadd.f32 %v4444, %v4525
      %v4542 = vadd.f32 %v4446, %v4527
      %v4543 = vadd.f32 %v4449, %v4530
      %v4544 = vadd.f32 %v4451, %v4532
      %v4545 = vadd.f32 %v4454, %v4535
      %v4546 = vadd.f32 %v4456, %v4537
      %4547 = vrot.lane.b32.xlu0 %v4482, 64
      %v4548 = vpop.permute.xlu0 %4547
      %4549 = vrot.lane.b32.xlu0 %v4483, 64
      %v4550 = vpop.permute.xlu0 %4549
      %4551 = vrot.lane.b32.xlu0 %v4484, 64
      %v4552 = vpop.permute.xlu0 %4551
      %4553 = vrot.lane.b32.xlu0 %v4485, 64
      %v4554 = vpop.permute.xlu0 %4553
      %4555 = vrot.lane.b32.xlu0 %v4319, 124
      %v4556 = vpop.permute.xlu0 %4555
      %4557 = vrot.lane.b32.xlu0 %v4320, 124
      %v4558 = vpop.permute.xlu0 %4557
      %4559 = vrot.lane.b32.xlu0 %v4321, 124
      %v4560 = vpop.permute.xlu0 %4559
      %4561 = vrot.lane.b32.xlu0 %v4322, 124
      %v4562 = vpop.permute.xlu0 %4561
      %v4568 = vsel %vm4375, %v4548, 0
      %v4571 = vsel %vm4375, %v4550, 0
      %v4574 = vsel %vm4375, %v4552, 0
      %v4577 = vsel %vm4375, %v4554, 0
      %4579 = vmatpush.bf16.msra.mxu0 0
      %4580 = vmatpush.bf16.msra.mxu0 0
      %4581 = vmatpush.bf16.msra.mxu0 0
      %4582 = vmatpush.bf16.msra.mxu0 0
      %4583 = vmatpush.bf16.msra.mxu0 %v4562
      %4584 = vmatpush.bf16.msra.mxu0 %v4560
      %4585 = vmatpush.bf16.msra.mxu0 %v4558
      %4586 = vmatpush.bf16.msra.mxu0 %v4556
      %4587 = vmatmul.bf16.gmra.mxu0 %v4568
      %v4588 = vpop.f32.mrf.mxu0
      %v4589 = vadd.f32 0.0, %v4588
      %v4590 = vpop.f32.mrf.mxu0
      %v4591 = vadd.f32 0.0, %v4590
      %4592 = vmatmul.bf16.gmra.mxu0 %v4571
      %v4593 = vpop.f32.mrf.mxu0
      %v4594 = vadd.f32 0.0, %v4593
      %v4595 = vpop.f32.mrf.mxu0
      %v4596 = vadd.f32 0.0, %v4595
      %4597 = vmatmul.bf16.gmra.mxu0 %v4574
      %v4598 = vpop.f32.mrf.mxu0
      %v4599 = vadd.f32 0.0, %v4598
      %v4600 = vpop.f32.mrf.mxu0
      %v4601 = vadd.f32 0.0, %v4600
      %4602 = vmatmul.bf16.gmra.mxu0 %v4577
      %v4603 = vpop.f32.mrf.mxu0
      %v4604 = vadd.f32 0.0, %v4603
      %v4605 = vpop.f32.mrf.mxu0
      %v4606 = vadd.f32 0.0, %v4605
      %4607 = vdwg.mxu0
      %v4608 = vadd.f32 %v4539, %v4589
      %v4609 = vadd.f32 %v4540, %v4591
      %v4610 = vadd.f32 %v4541, %v4594
      %v4611 = vadd.f32 %v4542, %v4596
      %v4612 = vadd.f32 %v4543, %v4599
      %v4613 = vadd.f32 %v4544, %v4601
      %v4614 = vadd.f32 %v4545, %v4604
      %v4615 = vadd.f32 %v4546, %v4606
      %v4616 = vld [vmem:[%s19 + $0x8] sm:$0xf]
      %v4617 = vld [vmem:[%s19 + $0x1c] sm:$0xf]
      %v4618 = vld [vmem:[%s19 + $0x30] sm:$0xf]
      %v4619 = vld [vmem:[%s19 + $0x44] sm:$0xf]
      %v4620 = vld [vmem:[%s19 + $0x58] sm:$0xf]
      %v4621 = vld [vmem:[%s19 + $0x6c] sm:$0xf]
      %v4622 = vld [vmem:[%s19 + $0x80] sm:$0xf]
      %v4623 = vld [vmem:[%s19 + $0x94] sm:$0xf]
      %v4632 = vunpack.c.l.b16 %v4616
      %v4633 = vunpack.c.l.b16 %v4617
      %v4634 = vunpack.c.l.b16 %v4618
      %v4635 = vunpack.c.l.b16 %v4619
      %v4636 = vunpack.c.l.b16 %v4620
      %v4637 = vunpack.c.l.b16 %v4621
      %v4638 = vunpack.c.l.b16 %v4622
      %v4639 = vunpack.c.l.b16 %v4623
      %v4640 = vpack.c.b16 %v4633, %v4632
      %v4641 = vpack.c.b16 %v4635, %v4634
      %v4642 = vpack.c.b16 %v4637, %v4636
      %v4643 = vpack.c.b16 %v4639, %v4638
      %4644 = vrot.lane.b32.xlu0 %v4319, 123
      %v4645 = vpop.permute.xlu0 %4644
      %4646 = vrot.lane.b32.xlu0 %v4320, 123
      %v4647 = vpop.permute.xlu0 %4646
      %4648 = vrot.lane.b32.xlu0 %v4321, 123
      %v4649 = vpop.permute.xlu0 %4648
      %4650 = vrot.lane.b32.xlu0 %v4322, 123
      %v4651 = vpop.permute.xlu0 %4650
      %v4657 = vsel %vm4375, %v4640, 0
      %v4660 = vsel %vm4375, %v4641, 0
      %v4663 = vsel %vm4375, %v4642, 0
      %v4666 = vsel %vm4375, %v4643, 0
      %4668 = vmatpush.bf16.msra.mxu0 0
      %4669 = vmatpush.bf16.msra.mxu0 0
      %4670 = vmatpush.bf16.msra.mxu0 0
      %4671 = vmatpush.bf16.msra.mxu0 0
      %4672 = vmatpush.bf16.msra.mxu0 %v4651
      %4673 = vmatpush.bf16.msra.mxu0 %v4649
      %4674 = vmatpush.bf16.msra.mxu0 %v4647
      %4675 = vmatpush.bf16.msra.mxu0 %v4645
      %4676 = vmatmul.bf16.gmra.mxu0 %v4657
      %v4677 = vpop.f32.mrf.mxu0
      %v4678 = vadd.f32 0.0, %v4677
      %v4679 = vpop.f32.mrf.mxu0
      %v4680 = vadd.f32 0.0, %v4679
      %4681 = vmatmul.bf16.gmra.mxu0 %v4660
      %v4682 = vpop.f32.mrf.mxu0
      %v4683 = vadd.f32 0.0, %v4682
      %v4684 = vpop.f32.mrf.mxu0
      %v4685 = vadd.f32 0.0, %v4684
      %4686 = vmatmul.bf16.gmra.mxu0 %v4663
      %v4687 = vpop.f32.mrf.mxu0
      %v4688 = vadd.f32 0.0, %v4687
      %v4689 = vpop.f32.mrf.mxu0
      %v4690 = vadd.f32 0.0, %v4689
      %4691 = vmatmul.bf16.gmra.mxu0 %v4666
      %v4692 = vpop.f32.mrf.mxu0
      %v4693 = vadd.f32 0.0, %v4692
      %v4694 = vpop.f32.mrf.mxu0
      %v4695 = vadd.f32 0.0, %v4694
      %4696 = vdwg.mxu0
      %v4697 = vadd.f32 %v4608, %v4678
      %v4698 = vadd.f32 %v4609, %v4680
      %v4699 = vadd.f32 %v4610, %v4683
      %v4700 = vadd.f32 %v4611, %v4685
      %v4701 = vadd.f32 %v4612, %v4688
      %v4702 = vadd.f32 %v4613, %v4690
      %v4703 = vadd.f32 %v4614, %v4693
      %v4704 = vadd.f32 %v4615, %v4695
      %4705 = vrot.lane.b32.xlu0 %v4640, 64
      %v4706 = vpop.permute.xlu0 %4705
      %4707 = vrot.lane.b32.xlu0 %v4641, 64
      %v4708 = vpop.permute.xlu0 %4707
      %4709 = vrot.lane.b32.xlu0 %v4642, 64
      %v4710 = vpop.permute.xlu0 %4709
      %4711 = vrot.lane.b32.xlu0 %v4643, 64
      %v4712 = vpop.permute.xlu0 %4711
      %4713 = vrot.lane.b32.xlu0 %v4319, 122
      %v4714 = vpop.permute.xlu0 %4713
      %4715 = vrot.lane.b32.xlu0 %v4320, 122
      %v4716 = vpop.permute.xlu0 %4715
      %4717 = vrot.lane.b32.xlu0 %v4321, 122
      %v4718 = vpop.permute.xlu0 %4717
      %4719 = vrot.lane.b32.xlu0 %v4322, 122
      %v4720 = vpop.permute.xlu0 %4719
      %v4726 = vsel %vm4375, %v4706, 0
      %v4729 = vsel %vm4375, %v4708, 0
      %v4732 = vsel %vm4375, %v4710, 0
      %v4735 = vsel %vm4375, %v4712, 0
      %4737 = vmatpush.bf16.msra.mxu0 0
      %4738 = vmatpush.bf16.msra.mxu0 0
      %4739 = vmatpush.bf16.msra.mxu0 0
      %4740 = vmatpush.bf16.msra.mxu0 0
      %4741 = vmatpush.bf16.msra.mxu0 %v4720
      %4742 = vmatpush.bf16.msra.mxu0 %v4718
      %4743 = vmatpush.bf16.msra.mxu0 %v4716
      %4744 = vmatpush.bf16.msra.mxu0 %v4714
      %4745 = vmatmul.bf16.gmra.mxu0 %v4726
      %v4746 = vpop.f32.mrf.mxu0
      %v4747 = vadd.f32 0.0, %v4746
      %v4748 = vpop.f32.mrf.mxu0
      %v4749 = vadd.f32 0.0, %v4748
      %4750 = vmatmul.bf16.gmra.mxu0 %v4729
      %v4751 = vpop.f32.mrf.mxu0
      %v4752 = vadd.f32 0.0, %v4751
      %v4753 = vpop.f32.mrf.mxu0
      %v4754 = vadd.f32 0.0, %v4753
      %4755 = vmatmul.bf16.gmra.mxu0 %v4732
      %v4756 = vpop.f32.mrf.mxu0
      %v4757 = vadd.f32 0.0, %v4756
      %v4758 = vpop.f32.mrf.mxu0
      %v4759 = vadd.f32 0.0, %v4758
      %4760 = vmatmul.bf16.gmra.mxu0 %v4735
      %v4761 = vpop.f32.mrf.mxu0
      %v4762 = vadd.f32 0.0, %v4761
      %v4763 = vpop.f32.mrf.mxu0
      %v4764 = vadd.f32 0.0, %v4763
      %4765 = vdwg.mxu0
      %v4766 = vadd.f32 %v4697, %v4747
      %v4767 = vadd.f32 %v4698, %v4749
      %v4768 = vadd.f32 %v4699, %v4752
      %v4769 = vadd.f32 %v4700, %v4754
      %v4770 = vadd.f32 %v4701, %v4757
      %v4771 = vadd.f32 %v4702, %v4759
      %v4772 = vadd.f32 %v4703, %v4762
      %v4773 = vadd.f32 %v4704, %v4764
      %v4774 = vld [vmem:[%s19 + $0xc] sm:$0xf]
      %v4775 = vld [vmem:[%s19 + $0x20] sm:$0xf]
      %v4776 = vld [vmem:[%s19 + $0x34] sm:$0xf]
      %v4777 = vld [vmem:[%s19 + $0x48] sm:$0xf]
      %v4778 = vld [vmem:[%s19 + $0x5c] sm:$0xf]
      %v4779 = vld [vmem:[%s19 + $0x70] sm:$0xf]
      %v4780 = vld [vmem:[%s19 + $0x84] sm:$0xf]
      %v4781 = vld [vmem:[%s19 + $0x98] sm:$0xf]
      %v4790 = vunpack.c.l.b16 %v4774
      %v4791 = vunpack.c.l.b16 %v4775
      %v4792 = vunpack.c.l.b16 %v4776
      %v4793 = vunpack.c.l.b16 %v4777
      %v4794 = vunpack.c.l.b16 %v4778
      %v4795 = vunpack.c.l.b16 %v4779
      %v4796 = vunpack.c.l.b16 %v4780
      %v4797 = vunpack.c.l.b16 %v4781
      %v4798 = vpack.c.b16 %v4791, %v4790
      %v4799 = vpack.c.b16 %v4793, %v4792
      %v4800 = vpack.c.b16 %v4795, %v4794
      %v4801 = vpack.c.b16 %v4797, %v4796
      %4802 = vrot.lane.b32.xlu0 %v4319, 120
      %v4803 = vpop.permute.xlu0 %4802
      %4804 = vrot.lane.b32.xlu0 %v4320, 120
      %v4805 = vpop.permute.xlu0 %4804
      %4806 = vrot.lane.b32.xlu0 %v4321, 120
      %v4807 = vpop.permute.xlu0 %4806
      %4808 = vrot.lane.b32.xlu0 %v4322, 120
      %v4809 = vpop.permute.xlu0 %4808
      %v4815 = vsel %vm4375, %v4798, 0
      %v4818 = vsel %vm4375, %v4799, 0
      %v4821 = vsel %vm4375, %v4800, 0
      %v4824 = vsel %vm4375, %v4801, 0
      %4826 = vmatpush.bf16.msra.mxu0 0
      %4827 = vmatpush.bf16.msra.mxu0 0
      %4828 = vmatpush.bf16.msra.mxu0 0
      %4829 = vmatpush.bf16.msra.mxu0 0
      %4830 = vmatpush.bf16.msra.mxu0 %v4809
      %4831 = vmatpush.bf16.msra.mxu0 %v4807
      %4832 = vmatpush.bf16.msra.mxu0 %v4805
      %4833 = vmatpush.bf16.msra.mxu0 %v4803
      %4834 = vmatmul.bf16.gmra.mxu0 %v4815
      %v4835 = vpop.f32.mrf.mxu0
      %v4836 = vadd.f32 0.0, %v4835
      %v4837 = vpop.f32.mrf.mxu0
      %v4838 = vadd.f32 0.0, %v4837
      %4839 = vmatmul.bf16.gmra.mxu0 %v4818
      %v4840 = vpop.f32.mrf.mxu0
      %v4841 = vadd.f32 0.0, %v4840
      %v4842 = vpop.f32.mrf.mxu0
      %v4843 = vadd.f32 0.0, %v4842
      %4844 = vmatmul.bf16.gmra.mxu0 %v4821
      %v4845 = vpop.f32.mrf.mxu0
      %v4846 = vadd.f32 0.0, %v4845
      %v4847 = vpop.f32.mrf.mxu0
      %v4848 = vadd.f32 0.0, %v4847
      %4849 = vmatmul.bf16.gmra.mxu0 %v4824
      %v4850 = vpop.f32.mrf.mxu0
      %v4851 = vadd.f32 0.0, %v4850
      %v4852 = vpop.f32.mrf.mxu0
      %v4853 = vadd.f32 0.0, %v4852
      %4854 = vdwg.mxu0
      %v4855 = vadd.f32 %v4766, %v4836
      %v4856 = vadd.f32 %v4767, %v4838
      %v4857 = vadd.f32 %v4768, %v4841
      %v4858 = vadd.f32 %v4769, %v4843
      %v4859 = vadd.f32 %v4770, %v4846
      %v4860 = vadd.f32 %v4771, %v4848
      %v4861 = vadd.f32 %v4772, %v4851
      %v4862 = vadd.f32 %v4773, %v4853
      %4863 = vrot.lane.b32.xlu0 %v4798, 64
      %v4864 = vpop.permute.xlu0 %4863
      %4865 = vrot.lane.b32.xlu0 %v4799, 64
      %v4866 = vpop.permute.xlu0 %4865
      %4867 = vrot.lane.b32.xlu0 %v4800, 64
      %v4868 = vpop.permute.xlu0 %4867
      %4869 = vrot.lane.b32.xlu0 %v4801, 64
      %v4870 = vpop.permute.xlu0 %4869
      %4871 = vrot.lane.b32.xlu0 %v4319, 119
      %v4872 = vpop.permute.xlu0 %4871
      %4873 = vrot.lane.b32.xlu0 %v4320, 119
      %v4874 = vpop.permute.xlu0 %4873
      %4875 = vrot.lane.b32.xlu0 %v4321, 119
      %v4876 = vpop.permute.xlu0 %4875
      %4877 = vrot.lane.b32.xlu0 %v4322, 119
      %v4878 = vpop.permute.xlu0 %4877
      %v4884 = vsel %vm4375, %v4864, 0
      %v4887 = vsel %vm4375, %v4866, 0
      %v4890 = vsel %vm4375, %v4868, 0
      %v4893 = vsel %vm4375, %v4870, 0
      %4895 = vmatpush.bf16.msra.mxu0 0
      %4896 = vmatpush.bf16.msra.mxu0 0
      %4897 = vmatpush.bf16.msra.mxu0 0
      %4898 = vmatpush.bf16.msra.mxu0 0
      %4899 = vmatpush.bf16.msra.mxu0 %v4878
      %4900 = vmatpush.bf16.msra.mxu0 %v4876
      %4901 = vmatpush.bf16.msra.mxu0 %v4874
      %4902 = vmatpush.bf16.msra.mxu0 %v4872
      %4903 = vmatmul.bf16.gmra.mxu0 %v4884
      %v4904 = vpop.f32.mrf.mxu0
      %v4905 = vadd.f32 0.0, %v4904
      %v4906 = vpop.f32.mrf.mxu0
      %v4907 = vadd.f32 0.0, %v4906
      %4908 = vmatmul.bf16.gmra.mxu0 %v4887
      %v4909 = vpop.f32.mrf.mxu0
      %v4910 = vadd.f32 0.0, %v4909
      %v4911 = vpop.f32.mrf.mxu0
      %v4912 = vadd.f32 0.0, %v4911
      %4913 = vmatmul.bf16.gmra.mxu0 %v4890
      %v4914 = vpop.f32.mrf.mxu0
      %v4915 = vadd.f32 0.0, %v4914
      %v4916 = vpop.f32.mrf.mxu0
      %v4917 = vadd.f32 0.0, %v4916
      %4918 = vmatmul.bf16.gmra.mxu0 %v4893
      %v4919 = vpop.f32.mrf.mxu0
      %v4920 = vadd.f32 0.0, %v4919
      %v4921 = vpop.f32.mrf.mxu0
      %v4922 = vadd.f32 0.0, %v4921
      %4923 = vdwg.mxu0
      %v4924 = vadd.f32 %v4855, %v4905
      %v4925 = vadd.f32 %v4856, %v4907
      %v4926 = vadd.f32 %v4857, %v4910
      %v4927 = vadd.f32 %v4858, %v4912
      %v4928 = vadd.f32 %v4859, %v4915
      %v4929 = vadd.f32 %v4860, %v4917
      %v4930 = vadd.f32 %v4861, %v4920
      %v4931 = vadd.f32 %v4862, %v4922
      %v4932 = vld [vmem:[%s19 + $0x10] sm:$0xf]
      %v4933 = vld [vmem:[%s19 + $0x24] sm:$0xf]
      %v4934 = vld [vmem:[%s19 + $0x38] sm:$0xf]
      %v4935 = vld [vmem:[%s19 + $0x4c] sm:$0xf]
      %v4936 = vld [vmem:[%s19 + $0x60] sm:$0xf]
      %v4937 = vld [vmem:[%s19 + $0x74] sm:$0xf]
      %v4938 = vld [vmem:[%s19 + $0x88] sm:$0xf]
      %v4939 = vld [vmem:[%s19 + $0x9c] sm:$0xf]
      %v4948 = vunpack.c.l.b16 %v4932
      %v4949 = vunpack.c.l.b16 %v4933
      %v4950 = vunpack.c.l.b16 %v4934
      %v4951 = vunpack.c.l.b16 %v4935
      %v4952 = vunpack.c.l.b16 %v4936
      %v4953 = vunpack.c.l.b16 %v4937
      %v4954 = vunpack.c.l.b16 %v4938
      %v4955 = vunpack.c.l.b16 %v4939
      %v4956 = vpack.c.b16 %v4949, %v4948
      %v4957 = vpack.c.b16 %v4951, %v4950
      %v4958 = vpack.c.b16 %v4953, %v4952
      %v4959 = vpack.c.b16 %v4955, %v4954
      %4960 = vrot.lane.b32.xlu0 %v4319, 118
      %v4961 = vpop.permute.xlu0 %4960
      %4962 = vrot.lane.b32.xlu0 %v4320, 118
      %v4963 = vpop.permute.xlu0 %4962
      %4964 = vrot.lane.b32.xlu0 %v4321, 118
      %v4965 = vpop.permute.xlu0 %4964
      %4966 = vrot.lane.b32.xlu0 %v4322, 118
      %v4967 = vpop.permute.xlu0 %4966
      %v4973 = vsel %vm4375, %v4956, 0
      %v4976 = vsel %vm4375, %v4957, 0
      %v4979 = vsel %vm4375, %v4958, 0
      %v4982 = vsel %vm4375, %v4959, 0
      %4984 = vmatpush.bf16.msra.mxu0 0
      %4985 = vmatpush.bf16.msra.mxu0 0
      %4986 = vmatpush.bf16.msra.mxu0 0
      %4987 = vmatpush.bf16.msra.mxu0 0
      %4988 = vmatpush.bf16.msra.mxu0 %v4967
      %4989 = vmatpush.bf16.msra.mxu0 %v4965
      %4990 = vmatpush.bf16.msra.mxu0 %v4963
      %4991 = vmatpush.bf16.msra.mxu0 %v4961
      %4992 = vmatmul.bf16.gmra.mxu0 %v4973
      %v4993 = vpop.f32.mrf.mxu0
      %v4994 = vadd.f32 0.0, %v4993
      %v4995 = vpop.f32.mrf.mxu0
      %v4996 = vadd.f32 0.0, %v4995
      %4997 = vmatmul.bf16.gmra.mxu0 %v4976
      %v4998 = vpop.f32.mrf.mxu0
      %v4999 = vadd.f32 0.0, %v4998
      %v5000 = vpop.f32.mrf.mxu0
      %v5001 = vadd.f32 0.0, %v5000
      %5002 = vmatmul.bf16.gmra.mxu0 %v4979
      %v5003 = vpop.f32.mrf.mxu0
      %v5004 = vadd.f32 0.0, %v5003
      %v5005 = vpop.f32.mrf.mxu0
      %v5006 = vadd.f32 0.0, %v5005
      %5007 = vmatmul.bf16.gmra.mxu0 %v4982
      %v5008 = vpop.f32.mrf.mxu0
      %v5009 = vadd.f32 0.0, %v5008
      %v5010 = vpop.f32.mrf.mxu0
      %v5011 = vadd.f32 0.0, %v5010
      %5012 = vdwg.mxu0
      %v5013 = vadd.f32 %v4924, %v4994
      %v5014 = vadd.f32 %v4925, %v4996
      %v5015 = vadd.f32 %v4926, %v4999
      %v5016 = vadd.f32 %v4927, %v5001
      %v5017 = vadd.f32 %v4928, %v5004
      %v5018 = vadd.f32 %v4929, %v5006
      %v5019 = vadd.f32 %v4930, %v5009
      %v5020 = vadd.f32 %v4931, %v5011
      %v5021 = vld [vmem:[%s20] sm:$0xff]
      %v5022 = vld [vmem:[%s20 + $0x8] sm:$0xff]
      %v5023 = vld [vmem:[%s20 + $0x10] sm:$0xff]
      %v5024 = vld [vmem:[%s20 + $0x18] sm:$0xff]
      %v5025 = vld [vmem:[%s20 + $0x20] sm:$0xff]
      %v5026 = vld [vmem:[%s20 + $0x28] sm:$0xff]
      %v5027 = vld [vmem:[%s20 + $0x30] sm:$0xff]
      %v5028 = vld [vmem:[%s20 + $0x38] sm:$0xff]
      %5030 = vset.pattern.permute.xlu0 0
      %5031 = vperm.xlu0 %5030, %v5021
      %v5032 = vpop.permute.xlu0 %5031
      %5035 = vset.pattern.permute.xlu0 0
      %5036 = vperm.xlu0 %5035, %v5022
      %v5037 = vpop.permute.xlu0 %5036
      %5040 = vset.pattern.permute.xlu0 0
      %5041 = vperm.xlu0 %5040, %v5023
      %v5042 = vpop.permute.xlu0 %5041
      %5045 = vset.pattern.permute.xlu0 0
      %5046 = vperm.xlu0 %5045, %v5024
      %v5047 = vpop.permute.xlu0 %5046
      %5050 = vset.pattern.permute.xlu0 0
      %5051 = vperm.xlu0 %5050, %v5025
      %v5052 = vpop.permute.xlu0 %5051
      %5055 = vset.pattern.permute.xlu0 0
      %5056 = vperm.xlu0 %5055, %v5026
      %v5057 = vpop.permute.xlu0 %5056
      %5060 = vset.pattern.permute.xlu0 0
      %5061 = vperm.xlu0 %5060, %v5027
      %v5062 = vpop.permute.xlu0 %5061
      %5065 = vset.pattern.permute.xlu0 0
      %5066 = vperm.xlu0 %5065, %v5028
      %v5067 = vpop.permute.xlu0 %5066
      %v5069 = vadd.f32 %v5013, %v5032
      %v5070 = vadd.f32 %v5014, %v5037
      %v5071 = vadd.f32 %v5015, %v5042
      %v5072 = vadd.f32 %v5016, %v5047
      %v5073 = vadd.f32 %v5017, %v5052
      %v5074 = vadd.f32 %v5018, %v5057
      %v5075 = vadd.f32 %v5019, %v5062
      %v5076 = vadd.f32 %v5020, %v5067
      %vm5077 = vcmp.ge.f32.partialorder %v5069, 0.0
      %vm5078 = vcmp.ge.f32.partialorder %v5070, 0.0
      %vm5079 = vcmp.ge.f32.partialorder %v5071, 0.0
      %vm5080 = vcmp.ge.f32.partialorder %v5072, 0.0
      %vm5081 = vcmp.ge.f32.partialorder %v5073, 0.0
      %vm5082 = vcmp.ge.f32.partialorder %v5074, 0.0
      %vm5083 = vcmp.ge.f32.partialorder %v5075, 0.0
      %vm5084 = vcmp.ge.f32.partialorder %v5076, 0.0
      %v5085 = vmul.f32 %v5069, 0.2
      %v5086 = vmul.f32 %v5070, 0.2
      %v5087 = vmul.f32 %v5071, 0.2
      %v5088 = vmul.f32 %v5072, 0.2
      %v5089 = vmul.f32 %v5073, 0.2
      %v5090 = vmul.f32 %v5074, 0.2
      %v5091 = vmul.f32 %v5075, 0.2
      %v5092 = vmul.f32 %v5076, 0.2
      %v5093 = vsel %vm5077, %v5069, %v5085
      %v5094 = vsel %vm5078, %v5070, %v5086
      %v5095 = vsel %vm5079, %v5071, %v5087
      %v5096 = vsel %vm5080, %v5072, %v5088
      %v5097 = vsel %vm5081, %v5073, %v5089
      %v5098 = vsel %vm5082, %v5074, %v5090
      %v5099 = vsel %vm5083, %v5075, %v5091
      %v5100 = vsel %vm5084, %v5076, %v5092
      %v5101 = vld [vmem:[%s21] sm:$0x1]
      %v5103 = vperm.slane %v5101, 0
      %v5105 = vmul.f32 %v5093, %v5103
      %v5106 = vmul.f32 %v5094, %v5103
      %v5107 = vmul.f32 %v5095, %v5103
      %v5108 = vmul.f32 %v5096, %v5103
      %v5109 = vmul.f32 %v5097, %v5103
      %v5110 = vmul.f32 %v5098, %v5103
      %v5111 = vmul.f32 %v5099, %v5103
      %v5112 = vmul.f32 %v5100, %v5103
      %v5113 = vsel %vm761, %v5105, 0.0
      %5114 = vadd.xlane.f32.xlu0 %v5113
      %v5115 = vpop.xlane.xlu0 %5114
      %v5116 = vsel %vm761, %v5106, 0.0
      %5117 = vadd.xlane.f32.xlu0 %v5116
      %v5118 = vpop.xlane.xlu0 %5117
      %v5119 = vsel %vm761, %v5107, 0.0
      %5120 = vadd.xlane.f32.xlu0 %v5119
      %v5121 = vpop.xlane.xlu0 %5120
      %v5122 = vsel %vm761, %v5108, 0.0
      %5123 = vadd.xlane.f32.xlu0 %v5122
      %v5124 = vpop.xlane.xlu0 %5123
      %v5125 = vsel %vm761, %v5109, 0.0
      %5126 = vadd.xlane.f32.xlu0 %v5125
      %v5127 = vpop.xlane.xlu0 %5126
      %v5128 = vsel %vm761, %v5110, 0.0
      %5129 = vadd.xlane.f32.xlu0 %v5128
      %v5130 = vpop.xlane.xlu0 %5129
      %v5131 = vsel %vm761, %v5111, 0.0
      %5132 = vadd.xlane.f32.xlu0 %v5131
      %v5133 = vpop.xlane.xlu0 %5132
      %v5134 = vsel %vm761, %v5112, 0.0
      %5135 = vadd.xlane.f32.xlu0 %v5134
      %v5136 = vpop.xlane.xlu0 %5135
      %v5137 = vld [vmem:[%s22] sm:$0xff]
      %v5138 = vld [vmem:[%s22 + $0x8] sm:$0xff]
      %v5139 = vld [vmem:[%s22 + $0x10] sm:$0xff]
      %v5140 = vld [vmem:[%s22 + $0x18] sm:$0xff]
      %v5141 = vld [vmem:[%s22 + $0x20] sm:$0xff]
      %v5142 = vld [vmem:[%s22 + $0x28] sm:$0xff]
      %v5143 = vld [vmem:[%s22 + $0x30] sm:$0xff]
      %v5144 = vld [vmem:[%s22 + $0x38] sm:$0xff]
      %v5145 = vmul.f32 %v5115, %v5137
      %v5146 = vmul.f32 %v5118, %v5138
      %v5147 = vmul.f32 %v5121, %v5139
      %v5148 = vmul.f32 %v5124, %v5140
      %v5149 = vmul.f32 %v5127, %v5141
      %v5150 = vmul.f32 %v5130, %v5142
      %v5151 = vmul.f32 %v5133, %v5143
      %v5152 = vmul.f32 %v5136, %v5144
      %vm5153 = vcmask 7168
      %v5154 = vsel %vm5153, %v5145, 0.0
      %v5155 = vsel %vm5153, %v5146, 0.0
      %v5156 = vadd.f32 %v5154, %v5155
      %v5157 = vsel %vm5153, %v5147, 0.0
      %v5158 = vadd.f32 %v5156, %v5157
      %v5159 = vsel %vm5153, %v5148, 0.0
      %v5160 = vadd.f32 %v5158, %v5159
      %v5161 = vsel %vm5153, %v5149, 0.0
      %v5162 = vadd.f32 %v5160, %v5161
      %v5163 = vsel %vm5153, %v5150, 0.0
      %v5164 = vadd.f32 %v5162, %v5163
      %v5165 = vsel %vm5153, %v5151, 0.0
      %v5166 = vadd.f32 %v5164, %v5165
      %v5167 = vsel %vm5153, %v5152, 0.0
      %v5168 = vadd.f32 %v5166, %v5167
      %v5169 = vrot.slane %v5168, 4
      %v5170 = vadd.f32 %v5168, %v5169
      %v5171 = vrot.slane %v5170, 2
      %v5172 = vadd.f32 %v5170, %v5171
      %v5173 = vrot.slane %v5172, 1
      %v5174 = vadd.f32 %v5172, %v5173
      %v5175 = vld [vmem:[#allocation2] sm:$0x1]
      %v5176 = vadd.f32 %v5174, %v5175
      %vm5177 = vcmask 0
      %5178 = vst.msk [vmem:[%s735] sm:$0x1] %vm5177, %v5176
      %p5179 = scmp.lt.s32.totalorder %s37, 1
      %s5180 = scalar_select %p5179, %s37, 1
      %s5181 = scalar_lea.vmem %s24, %s5180
      // Predicated region
      $region117: #{critic_forward.1} parent=115 // pred_check
        %p5182 = pneg %p564
      $region118: #{critic_forward.1} parent=115 // pred_check_branch
        %5184 = sbr.rel (%p5182) target = $region120
      $region119: #{critic_forward.1} parent=115 // pred_region
        _
      $region120: #{critic_forward.1} parent=115 // pred_fallthru
        _
    $region116: #{critic_forward.1} parent=5 // pred_fallthru
      _
    %p5185 = scmp.le.s32.totalorder 2, %s32
    // Predicated region
    $region121: #{critic_forward.1} parent=5 // pred_check
      %p5186 = pneg %p5185
    $region122: #{critic_forward.1} parent=5 // pred_check_branch
      %5188 = sbr.rel (%p5186) target = $region124
    $region123: #{critic_forward.1} parent=5 // pred_region
      %s5189 = ssub.s32 %s32, 2
      // Predicated region
      $region125: #{critic_forward.1} parent=123 // pred_check
        %p5190 = pneg %p570
      $region126: #{critic_forward.1} parent=123 // pred_check_branch
        %5192 = sbr.rel (%p5190) target = $region128
      $region127: #{critic_forward.1} parent=123 // pred_region
        %p5193 = scmp.lt.s32.totalorder %s38, 1
        %s5194 = scalar_select %p5193, %s38, 1
        %s5195 = scalar_lea.vmem %s24, %s5194
      $region128: #{critic_forward.1} parent=123 // pred_fallthru
        _
    $region124: #{critic_forward.1} parent=5 // pred_fallthru
      _
  $region6: #{critic_forward.1} parent=0 // loop_footer
    %s36 = sadd.s32 1, %s32
  $region7: #{critic_forward.1} parent=0 // loop_footer_branch
    %31 = sbr.rel target = $region3
  $region8: #{critic_forward.1} parent=0 // loop_exit
    _

</llo_original>
